<compile_context>
chip_gen: v6e
topology: v6e:2x2x1
jax: 0.10.0
libtpu: 0.0.40
codegen_flags: <defaults>
</compile_context>

<pallas_src>
import numpy as np

import jax
import jax.numpy as jnp
from jax.experimental import pallas as pl
from jax.experimental.pallas import tpu as pltpu


# ------------------------------------------------------------------------------ kernel
def _fused_forward_kernel(s1_ref, bw1_ref, sh1_ref, bw2_ref, sh2_ref,
                          w1fc_hbm, b1fc_ref, w2fc_ref, b2fc_ref,
                          o_ref, x2s, w1fc_vmem, w1fc_sem):
    """Whole Conv2_small_BN forward for the full (small) batch in one invocation.

    s1_ref:   (2, B*16, 3*W*Cin) bf16  stage-1 "big slabs", one per conv-output row parity;
                                        rows ordered (b, pooled-row-parity, j), lanes (kh, w, ci)
    bw1_ref:  (3*W*Cin, 512)     bf16  stage-1 banded weight (BN1 scale folded, col-parity in N)
    sh1_ref:  (1, 512)           f32   BN1 shift tiled over (col-parity, pooled col)
    bw2_ref:  (768, 512)         bf16  stage-2 banded weight
    sh2_ref:  (1, 512)           f32   BN2 shift tiled
    w1fc_hbm: (2048, 256)        bf16  fc1 weight (rows in NHWC order), left in HBM
    b1fc_ref: (1, 256)           f32
    w2fc_ref: (256, 128)         bf16  fc2 weight zero-padded to 128 output lanes
    b2fc_ref: (1, 128)           f32
    o_ref:    (B, 128)           f32   lane-padded logits
    x2s:      (B, 2, 9, 256)     bf16  scratch: stage-2 input, zero-padded rows, parity-major
    w1fc_vmem:(2048, 256)        bf16  scratch landing buffer for the fc1 weight DMA
    """
    B = o_ref.shape[0]
    n1 = x2s.shape[3]              # 256 = stage-2 input row width  (Wh1 * Cout1)
    Hh2 = x2s.shape[2] - 1         # 8   = pooled rows after stage 2
    Hh1 = 2 * Hh2                  # 16  = pooled rows after stage 1
    n2 = sh2_ref.shape[1] // 2     # 256 = Wh2 * Cout2

    # Kick off the fc1-weight copy now; it completes while the conv stages run.
    w1_copy = pltpu.make_async_copy(w1fc_hbm, w1fc_vmem, w1fc_sem)
    w1_copy.start()

    # ---------------- stage 1: conv1 + bn1 + relu + pool1 ----------------
    sh1 = sh1_ref[...]
    vm = None
    for a in range(2):                                   # conv-output row parity
        acc = jnp.dot(s1_ref[a], bw1_ref[...], preferred_element_type=jnp.float32)
        v = jnp.maximum(acc + sh1, 0.0)                  # BN shift + ReLU
        vm = v if vm is None else jnp.maximum(vm, v)     # vertical pool partner
    # horizontal pool partner = max of the two 256-lane halves (static, vreg-aligned)
    pooled1 = jnp.maximum(vm[:, :n1], vm[:, n1:]).astype(jnp.bfloat16)   # (B*16, 256)

    # Scatter pooled1 into the zero-padded, row-parity-major stage-2 input scratch.
    # Stage-1 M rows are ordered (b, parity-of-pooled-row, j) so every write below is a
    # contiguous sublane slice (no strided access).
    zrow = jnp.zeros((1, n1), jnp.bfloat16)
    for b in range(B):
        x2s[b, 1, 0:Hh2, :] = pooled1[b * Hh1:b * Hh1 + Hh2, :]            # even pooled rows
        x2s[b, 0, 1:Hh2 + 1, :] = pooled1[b * Hh1 + Hh2:(b + 1) * Hh1, :]  # odd pooled rows
        x2s[b, 0, 0:1, :] = zrow                                            # top pad row
        x2s[b, 1, Hh2:Hh2 + 1, :] = zrow                                    # bottom pad row

    # ---------------- stage 2: conv2 + bn2 + relu + pool2 ----------------
    sh2 = sh2_ref[...]
    vm2 = None
    for a in range(2):
        blocks = []
        for b in range(B):
            # kh-folded big slab: contiguous row slices of the parity-major scratch,
            # lane-concatenated at 256-lane (vreg) boundaries.
            parts = [x2s[b, (a + kh) % 2, (a + kh) // 2:(a + kh) // 2 + Hh2, :]
                     for kh in range(3)]
            blocks.append(jnp.concatenate(parts, axis=-1))                  # (8, 768)
        s2 = jnp.concatenate(blocks, axis=0)                                # (B*8, 768)
        acc = jnp.dot(s2, bw2_ref[...], preferred_element_type=jnp.float32)  # (B*8, 512)
        v = jnp.maximum(acc + sh2, 0.0)
        vm2 = v if vm2 is None else jnp.maximum(vm2, v)
    pooled2 = jnp.maximum(vm2[:, :n2], vm2[:, n2:]).astype(jnp.bfloat16)    # (B*8, 256)

    # ---------------- flatten (NHWC order) + fc1 + ReLU + fc2 ----------------
    rows = []
    for b in range(B):
        pieces = [pooled2[b * Hh2 + t:b * Hh2 + t + 1, :] for t in range(Hh2)]
        rows.append(jnp.concatenate(pieces, axis=-1))                       # (1, 2048)
    flat = jnp.concatenate(rows, axis=0)                                    # (B, 2048) bf16

    w1_copy.wait()                                                          # fc1 weight is resident
    h = jnp.dot(flat, w1fc_vmem[...], preferred_element_type=jnp.float32)   # (B, 256)
    h = jnp.maximum(h + b1fc_ref[...], 0.0).astype(jnp.bfloat16)
    y = jnp.dot(h, w2fc_ref[...], preferred_element_type=jnp.float32)       # (B, 128)
    o_ref[...] = y + b2fc_ref[...]


# ------------------------------------------------------------------- one-time weight prep
def prepare_inference_params(params, *, input_hw=32, eps=1e-5):
    """Build the banded conv weights, tiled BN shifts, permuted fc1 and padded fc2.

    Runs once in numpy (outside the jitted forward path); inference weights are static.
    """
    def banded(w_oihw, gamma, beta, mean, var, width):
        w = np.asarray(w_oihw, np.float32)                       # (Cout, Cin, 3, 3)
        scale = np.asarray(gamma, np.float32) / np.sqrt(np.asarray(var, np.float32) + eps)
        shift = np.asarray(beta, np.float32) - np.asarray(mean, np.float32) * scale
        ws = w * scale[:, None, None, None]                      # BN scale folded into weights
        cout, cin = ws.shape[0], ws.shape[1]
        wh = width // 2
        K, N = 3 * width * cin, 2 * wh * cout
        bw = np.zeros((K, N), np.float32)
        for kh in range(3):
            for kw in range(3):
                wt = ws[:, :, kh, kw].T                          # (Cin, Cout)
                for r in range(2):
                    for q in range(wh):
                        p = 2 * q + r + kw - 1                   # input column (pad folded in)
                        if 0 <= p < width:
                            r0 = kh * width * cin + p * cin
                            c0 = r * wh * cout + q * cout
                            bw[r0:r0 + cin, c0:c0 + cout] = wt
        shift_row = np.tile(shift, 2 * wh)[None, :]              # (1, N), channel fastest
        return bw, shift_row

    w1 = 32 // 32 * input_hw                                     # 32
    bw1, sh1 = banded(params["w1"], params["bn1_gamma"], params["bn1_beta"],
                      params["bn1_mean"], params["bn1_var"], width=w1)
    bw2, sh2 = banded(params["w2"], params["bn2_gamma"], params["bn2_beta"],
                      params["bn2_mean"], params["bn2_var"], width=w1 // 2)

    # fc1 rows: PyTorch NCHW-flatten order -> NHWC-flatten order (one-time gather).
    c2 = np.asarray(params["w2"]).shape[0]                       # 32
    h8 = w8 = input_hw // 4                                      # 8
    hh, ww, cc = np.meshgrid(np.arange(h8), np.arange(w8), np.arange(c2), indexing="ij")
    perm = (cc * (h8 * w8) + hh * w8 + ww).reshape(-1)
    w1fc = np.asarray(params["fc1_w"], np.float32)[perm, :]

    # fc2 padded to 128 output lanes so the final store is lane-dense.
    fc2_w = np.asarray(params["fc2_w"], np.float32)
    fc2_b = np.asarray(params["fc2_b"], np.float32)
    nc = fc2_w.shape[1]
    assert nc <= 128
    w2fc = np.zeros((fc2_w.shape[0], 128), np.float32)
    w2fc[:, :nc] = fc2_w
    b2fc = np.zeros((1, 128), np.float32)
    b2fc[0, :nc] = fc2_b

    return {
        "bw1": jnp.asarray(bw1, jnp.bfloat16), "sh1": jnp.asarray(sh1, jnp.float32),
        "bw2": jnp.asarray(bw2, jnp.bfloat16), "sh2": jnp.asarray(sh2, jnp.float32),
        "w1fc": jnp.asarray(w1fc, jnp.bfloat16),
        "b1fc": jnp.asarray(np.asarray(params["fc1_b"], np.float32).reshape(1, -1)),
        "w2fc": jnp.asarray(w2fc, jnp.bfloat16),
        "b2fc": jnp.asarray(b2fc, jnp.float32),
    }


# ----------------------------------------------------------------------------- forward
def conv2_small_bn_forward(prep, x_nchw, num_classes=10):
    """Fused forward pass.  x_nchw: (B, Cin, 32, 32) f32.  Returns (B, num_classes) f32."""
    B, Cin, H, W = x_nchw.shape
    assert H == 32 and W == 32, "Conv2_small_BN assumes 32x32 inputs (fc1 = 32*8*8)."
    Hh1, Hh2 = H // 2, H // 4

    # NHWC with (w, cin) flattened into lanes; pad ROWS only (column padding is folded
    # into the banded weights).  This + the slab gather below is the only per-call XLA glue.
    x = jnp.transpose(x_nchw, (0, 2, 3, 1)).reshape(B, H, W * Cin).astype(jnp.bfloat16)
    xp = jnp.pad(x, ((0, 0), (1, 1), (0, 0)))                    # (B, H+2, W*Cin)

    # Stage-1 "big slabs": rows ordered (b, pooled-row-parity, j) so the kernel's write
    # into the parity-major stage-2 scratch is contiguous; lanes are (kh, w, cin).
    j = np.arange(Hh1 // 2)
    i_order = np.concatenate([2 * j, 2 * j + 1])                 # pooled rows, even block first
    slabs = []
    for a in range(2):
        parts = [xp[:, 2 * i_order + a + kh, :] for kh in range(3)]
        slabs.append(jnp.concatenate(parts, axis=-1))            # (B, Hh1, 3*W*Cin)
    s1 = jnp.stack(slabs, axis=0).reshape(2, B * Hh1, 3 * W * Cin)

    n1 = prep["sh1"].shape[1] // 2                               # 256

    out_pad = pl.pallas_call(
        _fused_forward_kernel,
        out_shape=jax.ShapeDtypeStruct((B, 128), jnp.float32),
        grid=(1,),
        in_specs=[
            pl.BlockSpec(s1.shape, lambda i: (0, 0, 0)),
            pl.BlockSpec(prep["bw1"].shape, lambda i: (0, 0)),
            pl.BlockSpec(prep["sh1"].shape, lambda i: (0, 0)),
            pl.BlockSpec(prep["bw2"].shape, lambda i: (0, 0)),
            pl.BlockSpec(prep["sh2"].shape, lambda i: (0, 0)),
            pl.BlockSpec(memory_space=pl.ANY),                   # fc1 weight stays in HBM
            pl.BlockSpec(prep["b1fc"].shape, lambda i: (0, 0)),
            pl.BlockSpec(prep["w2fc"].shape, lambda i: (0, 0)),
            pl.BlockSpec(prep["b2fc"].shape, lambda i: (0, 0)),
        ],
        out_specs=pl.BlockSpec((B, 128), lambda i: (0, 0)),
        scratch_shapes=[
            pltpu.VMEM((B, 2, Hh2 + 1, n1), jnp.bfloat16),        # parity-major padded stage-2 input
            pltpu.VMEM(prep["w1fc"].shape, jnp.bfloat16),         # fc1 weight landing buffer
            pltpu.SemaphoreType.DMA(()),                          # fc1 weight DMA semaphore
        ],
        compiler_params=pltpu.CompilerParams(dimension_semantics=("arbitrary",)),
    )(s1, prep["bw1"], prep["sh1"], prep["bw2"], prep["sh2"],
      prep["w1fc"], prep["b1fc"], prep["w2fc"], prep["b2fc"])

    return out_pad[:, :num_classes]


# ----------------------------------------------------------------------------- reference
def reference_forward(params, x_nchw, eps=1e-5):
    """Pure-XLA f32 reference (matches the PyTorch module semantics, inference BN)."""
    def block(x, w, g, bta, mu, var):
        y = jax.lax.conv_general_dilated(
            x, w, window_strides=(1, 1), padding=((1, 1), (1, 1)),
            dimension_numbers=("NCHW", "OIHW", "NCHW"))
        s = g / jnp.sqrt(var + eps)
        y = y * s[None, :, None, None] + (bta - mu * s)[None, :, None, None]
        y = jnp.maximum(y, 0.0)
        b, c, h, w_ = y.shape
        return y.reshape(b, c, h // 2, 2, w_ // 2, 2).max(axis=(3, 5))

    y = block(x_nchw, params["w1"], params["bn1_gamma"], params["bn1_beta"],
              params["bn1_mean"], params["bn1_var"])
    y = block(y, params["w2"], params["bn2_gamma"], params["bn2_beta"],
              params["bn2_mean"], params["bn2_var"])
    flat = y.reshape(y.shape[0], -1)                              # NCHW flatten, like x.view(B, -1)
    h = jnp.maximum(flat @ params["fc1_w"] + params["fc1_b"], 0.0)
    return h @ params["fc2_w"] + params["fc2_b"]


# ----------------------------------------------------------------------------- params
def init_params(key, num_classes=10, channels=1):
    ks = jax.random.split(key, 12)
    p = {}
    p["w1"] = 0.2 * jax.random.normal(ks[0], (16, channels, 3, 3), jnp.float32)      # OIHW
    p["bn1_gamma"] = 1.0 + 0.1 * jax.random.normal(ks[1], (16,), jnp.float32)
    p["bn1_beta"] = 0.1 * jax.random.normal(ks[2], (16,), jnp.float32)
    p["bn1_mean"] = 0.05 * jax.random.normal(ks[3], (16,), jnp.float32)
    p["bn1_var"] = 1.0 + 0.1 * jnp.abs(jax.random.normal(ks[4], (16,), jnp.float32))
    p["w2"] = 0.1 * jax.random.normal(ks[5], (32, 16, 3, 3), jnp.float32)             # OIHW
    p["bn2_gamma"] = 1.0 + 0.1 * jax.random.normal(ks[6], (32,), jnp.float32)
    p["bn2_beta"] = 0.1 * jax.random.normal(ks[7], (32,), jnp.float32)
    p["bn2_mean"] = 0.05 * jax.random.normal(ks[8], (32,), jnp.float32)
    p["bn2_var"] = 1.0 + 0.1 * jnp.abs(jax.random.normal(ks[9], (32,), jnp.float32))
    p["fc1_w"] = 0.05 * jax.random.normal(ks[10], (32 * 8 * 8, 256), jnp.float32)     # (in, out), NCHW rows
    p["fc1_b"] = 0.01 * jnp.ones((256,), jnp.float32)
    p["fc2_w"] = 0.2 * jax.random.normal(ks[11], (256, num_classes), jnp.float32)
    p["fc2_b"] = 0.01 * jnp.ones((num_classes,), jnp.float32)
    return p


if __name__ == "__main__":
    key = jax.random.PRNGKey(0)
    k_param, k_input = jax.random.split(key)
    params = init_params(k_param, num_classes=10, channels=1)
    # Module assumes 32x32 inputs with channels=1 (fc1 expects 32*8*8 features).
    x = jax.random.normal(k_input, (2, 1, 32, 32), jnp.float32)   # NCHW, like PyTorch

    prep = prepare_inference_params(params)                       # one-time weight prep
    fwd = jax.jit(conv2_small_bn_forward)
    logits = jax.block_until_ready(fwd(prep, x))

    assert logits.shape == (2, 10), logits.shape
    assert bool(jnp.all(jnp.isfinite(logits)))

    # Correctness vs. pure-XLA f32 reference; MXU operands are bf16, so use a loose,
    # scale-relative tolerance (structural bugs would produce O(max|logit|) errors).
    ref = reference_forward(params, x)
    err = float(jnp.max(jnp.abs(logits - ref)))
    scale = float(jnp.max(jnp.abs(ref)))
    assert err <= 0.1 * scale + 0.2, (err, scale)

    print("KERNEL_OK")
</pallas_src>

<mosaic_0001>
module attributes {stable_mosaic.version = 11 : i64} {
  func.func @_fused_forward_kernel(%arg0: i32, %arg1: memref<2x32x96xbf16, #tpu.memory_space<vmem>>, %arg2: memref<96x512xbf16, #tpu.memory_space<vmem>>, %arg3: memref<1x512xf32, #tpu.memory_space<vmem>>, %arg4: memref<768x512xbf16, #tpu.memory_space<vmem>>, %arg5: memref<1x512xf32, #tpu.memory_space<vmem>>, %arg6: memref<2048x256xbf16, #tpu.memory_space<any>>, %arg7: memref<1x256xf32, #tpu.memory_space<vmem>>, %arg8: memref<256x128xbf16, #tpu.memory_space<vmem>>, %arg9: memref<1x128xf32, #tpu.memory_space<vmem>>, %arg10: memref<2x128xf32, #tpu.memory_space<vmem>>, %arg11: memref<2x2x9x256xbf16, #tpu.memory_space<vmem>>, %arg12: memref<2048x256xbf16, #tpu.memory_space<vmem>>, %arg13: memref<!tpu.dma_semaphore, #tpu.memory_space<semaphore_mem>>) attributes {dimension_semantics = [#tpu.dimension_semantics<arbitrary>], iteration_bounds = array<i64: 1>, scalar_prefetch = 0 : i64, scratch_operands = 3 : i64, tpu.core_type = #tpu.core_type<tc>, window_params = [{pipeline_mode = #tpu.pipeline_mode<synchronous>, transform_indices = @transform_0, window_bounds = array<i64: 2, 32, 96>}, {pipeline_mode = #tpu.pipeline_mode<synchronous>, transform_indices = @transform_1, window_bounds = array<i64: 96, 512>}, {pipeline_mode = #tpu.pipeline_mode<synchronous>, transform_indices = @transform_2, window_bounds = array<i64: 1, 512>}, {pipeline_mode = #tpu.pipeline_mode<synchronous>, transform_indices = @transform_3, window_bounds = array<i64: 768, 512>}, {pipeline_mode = #tpu.pipeline_mode<synchronous>, transform_indices = @transform_4, window_bounds = array<i64: 1, 512>}, {}, {pipeline_mode = #tpu.pipeline_mode<synchronous>, transform_indices = @transform_6, window_bounds = array<i64: 1, 256>}, {pipeline_mode = #tpu.pipeline_mode<synchronous>, transform_indices = @transform_7, window_bounds = array<i64: 256, 128>}, {pipeline_mode = #tpu.pipeline_mode<synchronous>, transform_indices = @transform_8, window_bounds = array<i64: 1, 128>}, {pipeline_mode = #tpu.pipeline_mode<synchronous>, transform_indices = @transform_9, window_bounds = array<i64: 2, 128>}]} {
    tpu.enqueue_dma source(%arg6 : memref<2048x256xbf16, #tpu.memory_space<any>>) target(%arg12 : memref<2048x256xbf16, #tpu.memory_space<vmem>>) target_semaphore(%arg13 : memref<!tpu.dma_semaphore, #tpu.memory_space<semaphore_mem>>)
    %c0 = arith.constant 0 : index
    %c0_0 = arith.constant 0 : index
    %0 = vector.load %arg3[%c0, %c0_0] : memref<1x512xf32, #tpu.memory_space<vmem>>, vector<1x512xf32>
    %c0_1 = arith.constant 0 : index
    %c0_2 = arith.constant 0 : index
    %c0_3 = arith.constant 0 : index
    %1 = vector.load %arg1[%c0_1, %c0_2, %c0_3] : memref<2x32x96xbf16, #tpu.memory_space<vmem>>, vector<1x32x96xbf16>
    %2 = vector.shape_cast %1 : vector<1x32x96xbf16> to vector<32x96xbf16>
    %c0_4 = arith.constant 0 : index
    %c0_5 = arith.constant 0 : index
    %3 = vector.load %arg2[%c0_4, %c0_5] : memref<96x512xbf16, #tpu.memory_space<vmem>>, vector<96x512xbf16>
    %cst = arith.constant dense<0.000000e+00> : vector<32x512xf32>
    %4 = tpu.matmul %2, %3, %cst {dimension_numbers = #tpu.dot_dimension_numbers<[1], [0], [0], [1], [0, 0, 1, 1], [], []>} : vector<32x96xbf16>, vector<96x512xbf16>, vector<32x512xf32> -> vector<32x512xf32>
    %5 = vector.broadcast %0 : vector<1x512xf32> to vector<32x512xf32>
    %6 = arith.addf %4, %5 : vector<32x512xf32>
    %cst_6 = arith.constant 0.000000e+00 : f32
    %7 = vector.broadcast %cst_6 : f32 to vector<32x512xf32>
    %8 = arith.maximumf %6, %7 : vector<32x512xf32>
    %c1 = arith.constant 1 : index
    %c0_7 = arith.constant 0 : index
    %c0_8 = arith.constant 0 : index
    %9 = vector.load %arg1[%c1, %c0_7, %c0_8] : memref<2x32x96xbf16, #tpu.memory_space<vmem>>, vector<1x32x96xbf16>
    %10 = vector.shape_cast %9 : vector<1x32x96xbf16> to vector<32x96xbf16>
    %c0_9 = arith.constant 0 : index
    %c0_10 = arith.constant 0 : index
    %11 = vector.load %arg2[%c0_9, %c0_10] : memref<96x512xbf16, #tpu.memory_space<vmem>>, vector<96x512xbf16>
    %cst_11 = arith.constant dense<0.000000e+00> : vector<32x512xf32>
    %12 = tpu.matmul %10, %11, %cst_11 {dimension_numbers = #tpu.dot_dimension_numbers<[1], [0], [0], [1], [0, 0, 1, 1], [], []>} : vector<32x96xbf16>, vector<96x512xbf16>, vector<32x512xf32> -> vector<32x512xf32>
    %13 = vector.broadcast %0 : vector<1x512xf32> to vector<32x512xf32>
    %14 = arith.addf %12, %13 : vector<32x512xf32>
    %cst_12 = arith.constant 0.000000e+00 : f32
    %15 = vector.broadcast %cst_12 : f32 to vector<32x512xf32>
    %16 = arith.maximumf %14, %15 : vector<32x512xf32>
    %17 = arith.maximumf %8, %16 : vector<32x512xf32>
    %18 = vector.extract_strided_slice %17 {offsets = [0, 0], sizes = [32, 256], strides = [1, 1]} : vector<32x512xf32> to vector<32x256xf32>
    %19 = vector.extract_strided_slice %17 {offsets = [0, 256], sizes = [32, 256], strides = [1, 1]} : vector<32x512xf32> to vector<32x256xf32>
    %20 = arith.maximumf %18, %19 : vector<32x256xf32>
    %21 = arith.truncf %20 : vector<32x256xf32> to vector<32x256xbf16>
    %cst_13 = arith.constant 0.000000e+00 : bf16
    %22 = vector.broadcast %cst_13 : bf16 to vector<1x256xbf16>
    %23 = vector.extract_strided_slice %21 {offsets = [0, 0], sizes = [8, 256], strides = [1, 1]} : vector<32x256xbf16> to vector<8x256xbf16>
    %c0_14 = arith.constant 0 : index
    %c1_15 = arith.constant 1 : index
    %c0_16 = arith.constant 0 : index
    %c0_17 = arith.constant 0 : index
    %24 = vector.load %arg11[%c0_14, %c1_15, %c0_16, %c0_17] : memref<2x2x9x256xbf16, #tpu.memory_space<vmem>>, vector<1x1x8x256xbf16>
    %25 = vector.shape_cast %24 : vector<1x1x8x256xbf16> to vector<8x256xbf16>
    %26 = vector.shape_cast %23 : vector<8x256xbf16> to vector<1x1x8x256xbf16>
    tpu.vector_store %arg11[%c0_14, %c1_15, %c0_16, %c0_17], %26 {strides = array<i32>} : memref<2x2x9x256xbf16, #tpu.memory_space<vmem>>, vector<1x1x8x256xbf16>,
    %27 = vector.extract_strided_slice %21 {offsets = [8, 0], sizes = [8, 256], strides = [1, 1]} : vector<32x256xbf16> to vector<8x256xbf16>
    %c0_18 = arith.constant 0 : index
    %c0_19 = arith.constant 0 : index
    %c1_20 = arith.constant 1 : index
    %c0_21 = arith.constant 0 : index
    %28 = vector.load %arg11[%c0_18, %c0_19, %c1_20, %c0_21] : memref<2x2x9x256xbf16, #tpu.memory_space<vmem>>, vector<1x1x8x256xbf16>
    %29 = vector.shape_cast %28 : vector<1x1x8x256xbf16> to vector<8x256xbf16>
    %30 = vector.shape_cast %27 : vector<8x256xbf16> to vector<1x1x8x256xbf16>
    tpu.vector_store %arg11[%c0_18, %c0_19, %c1_20, %c0_21], %30 {strides = array<i32>} : memref<2x2x9x256xbf16, #tpu.memory_space<vmem>>, vector<1x1x8x256xbf16>,
    %c0_22 = arith.constant 0 : index
    %c0_23 = arith.constant 0 : index
    %c0_24 = arith.constant 0 : index
    %c0_25 = arith.constant 0 : index
    %31 = vector.load %arg11[%c0_22, %c0_23, %c0_24, %c0_25] : memref<2x2x9x256xbf16, #tpu.memory_space<vmem>>, vector<1x1x1x256xbf16>
    %32 = vector.shape_cast %31 : vector<1x1x1x256xbf16> to vector<1x256xbf16>
    %33 = vector.shape_cast %22 : vector<1x256xbf16> to vector<1x1x1x256xbf16>
    tpu.vector_store %arg11[%c0_22, %c0_23, %c0_24, %c0_25], %33 {strides = array<i32>} : memref<2x2x9x256xbf16, #tpu.memory_space<vmem>>, vector<1x1x1x256xbf16>,
    %c0_26 = arith.constant 0 : index
    %c1_27 = arith.constant 1 : index
    %c8 = arith.constant 8 : index
    %c0_28 = arith.constant 0 : index
    %34 = vector.load %arg11[%c0_26, %c1_27, %c8, %c0_28] : memref<2x2x9x256xbf16, #tpu.memory_space<vmem>>, vector<1x1x1x256xbf16>
    %35 = vector.shape_cast %34 : vector<1x1x1x256xbf16> to vector<1x256xbf16>
    %36 = vector.shape_cast %22 : vector<1x256xbf16> to vector<1x1x1x256xbf16>
    tpu.vector_store %arg11[%c0_26, %c1_27, %c8, %c0_28], %36 {strides = array<i32>} : memref<2x2x9x256xbf16, #tpu.memory_space<vmem>>, vector<1x1x1x256xbf16>,
    %37 = vector.extract_strided_slice %21 {offsets = [16, 0], sizes = [8, 256], strides = [1, 1]} : vector<32x256xbf16> to vector<8x256xbf16>
    %c1_29 = arith.constant 1 : index
    %c1_30 = arith.constant 1 : index
    %c0_31 = arith.constant 0 : index
    %c0_32 = arith.constant 0 : index
    %38 = vector.load %arg11[%c1_29, %c1_30, %c0_31, %c0_32] : memref<2x2x9x256xbf16, #tpu.memory_space<vmem>>, vector<1x1x8x256xbf16>
    %39 = vector.shape_cast %38 : vector<1x1x8x256xbf16> to vector<8x256xbf16>
    %40 = vector.shape_cast %37 : vector<8x256xbf16> to vector<1x1x8x256xbf16>
    tpu.vector_store %arg11[%c1_29, %c1_30, %c0_31, %c0_32], %40 {strides = array<i32>} : memref<2x2x9x256xbf16, #tpu.memory_space<vmem>>, vector<1x1x8x256xbf16>,
    %41 = vector.extract_strided_slice %21 {offsets = [24, 0], sizes = [8, 256], strides = [1, 1]} : vector<32x256xbf16> to vector<8x256xbf16>
    %c1_33 = arith.constant 1 : index
    %c0_34 = arith.constant 0 : index
    %c1_35 = arith.constant 1 : index
    %c0_36 = arith.constant 0 : index
    %42 = vector.load %arg11[%c1_33, %c0_34, %c1_35, %c0_36] : memref<2x2x9x256xbf16, #tpu.memory_space<vmem>>, vector<1x1x8x256xbf16>
    %43 = vector.shape_cast %42 : vector<1x1x8x256xbf16> to vector<8x256xbf16>
    %44 = vector.shape_cast %41 : vector<8x256xbf16> to vector<1x1x8x256xbf16>
    tpu.vector_store %arg11[%c1_33, %c0_34, %c1_35, %c0_36], %44 {strides = array<i32>} : memref<2x2x9x256xbf16, #tpu.memory_space<vmem>>, vector<1x1x8x256xbf16>,
    %c1_37 = arith.constant 1 : index
    %c0_38 = arith.constant 0 : index
    %c0_39 = arith.constant 0 : index
    %c0_40 = arith.constant 0 : index
    %45 = vector.load %arg11[%c1_37, %c0_38, %c0_39, %c0_40] : memref<2x2x9x256xbf16, #tpu.memory_space<vmem>>, vector<1x1x1x256xbf16>
    %46 = vector.shape_cast %45 : vector<1x1x1x256xbf16> to vector<1x256xbf16>
    %47 = vector.shape_cast %22 : vector<1x256xbf16> to vector<1x1x1x256xbf16>
    tpu.vector_store %arg11[%c1_37, %c0_38, %c0_39, %c0_40], %47 {strides = array<i32>} : memref<2x2x9x256xbf16, #tpu.memory_space<vmem>>, vector<1x1x1x256xbf16>,
    %c1_41 = arith.constant 1 : index
    %c1_42 = arith.constant 1 : index
    %c8_43 = arith.constant 8 : index
    %c0_44 = arith.constant 0 : index
    %48 = vector.load %arg11[%c1_41, %c1_42, %c8_43, %c0_44] : memref<2x2x9x256xbf16, #tpu.memory_space<vmem>>, vector<1x1x1x256xbf16>
    %49 = vector.shape_cast %48 : vector<1x1x1x256xbf16> to vector<1x256xbf16>
    %50 = vector.shape_cast %22 : vector<1x256xbf16> to vector<1x1x1x256xbf16>
    tpu.vector_store %arg11[%c1_41, %c1_42, %c8_43, %c0_44], %50 {strides = array<i32>} : memref<2x2x9x256xbf16, #tpu.memory_space<vmem>>, vector<1x1x1x256xbf16>,
    %c0_45 = arith.constant 0 : index
    %c0_46 = arith.constant 0 : index
    %51 = vector.load %arg5[%c0_45, %c0_46] : memref<1x512xf32, #tpu.memory_space<vmem>>, vector<1x512xf32>
    %c0_47 = arith.constant 0 : index
    %c0_48 = arith.constant 0 : index
    %c0_49 = arith.constant 0 : index
    %c0_50 = arith.constant 0 : index
    %52 = vector.load %arg11[%c0_47, %c0_48, %c0_49, %c0_50] : memref<2x2x9x256xbf16, #tpu.memory_space<vmem>>, vector<1x1x8x256xbf16>
    %53 = vector.shape_cast %52 : vector<1x1x8x256xbf16> to vector<8x256xbf16>
    %c0_51 = arith.constant 0 : index
    %c1_52 = arith.constant 1 : index
    %c0_53 = arith.constant 0 : index
    %c0_54 = arith.constant 0 : index
    %54 = vector.load %arg11[%c0_51, %c1_52, %c0_53, %c0_54] : memref<2x2x9x256xbf16, #tpu.memory_space<vmem>>, vector<1x1x8x256xbf16>
    %55 = vector.shape_cast %54 : vector<1x1x8x256xbf16> to vector<8x256xbf16>
    %c0_55 = arith.constant 0 : index
    %c0_56 = arith.constant 0 : index
    %c1_57 = arith.constant 1 : index
    %c0_58 = arith.constant 0 : index
    %56 = vector.load %arg11[%c0_55, %c0_56, %c1_57, %c0_58] : memref<2x2x9x256xbf16, #tpu.memory_space<vmem>>, vector<1x1x8x256xbf16>
    %57 = vector.shape_cast %56 : vector<1x1x8x256xbf16> to vector<8x256xbf16>
    %58 = tpu.concatenate %53, %55, %57 in 1 : vector<8x256xbf16>, vector<8x256xbf16>, vector<8x256xbf16> -> vector<8x768xbf16>
    %c1_59 = arith.constant 1 : index
    %c0_60 = arith.constant 0 : index
    %c0_61 = arith.constant 0 : index
    %c0_62 = arith.constant 0 : index
    %59 = vector.load %arg11[%c1_59, %c0_60, %c0_61, %c0_62] : memref<2x2x9x256xbf16, #tpu.memory_space<vmem>>, vector<1x1x8x256xbf16>
    %60 = vector.shape_cast %59 : vector<1x1x8x256xbf16> to vector<8x256xbf16>
    %c1_63 = arith.constant 1 : index
    %c1_64 = arith.constant 1 : index
    %c0_65 = arith.constant 0 : index
    %c0_66 = arith.constant 0 : index
    %61 = vector.load %arg11[%c1_63, %c1_64, %c0_65, %c0_66] : memref<2x2x9x256xbf16, #tpu.memory_space<vmem>>, vector<1x1x8x256xbf16>
    %62 = vector.shape_cast %61 : vector<1x1x8x256xbf16> to vector<8x256xbf16>
    %c1_67 = arith.constant 1 : index
    %c0_68 = arith.constant 0 : index
    %c1_69 = arith.constant 1 : index
    %c0_70 = arith.constant 0 : index
    %63 = vector.load %arg11[%c1_67, %c0_68, %c1_69, %c0_70] : memref<2x2x9x256xbf16, #tpu.memory_space<vmem>>, vector<1x1x8x256xbf16>
    %64 = vector.shape_cast %63 : vector<1x1x8x256xbf16> to vector<8x256xbf16>
    %65 = tpu.concatenate %60, %62, %64 in 1 : vector<8x256xbf16>, vector<8x256xbf16>, vector<8x256xbf16> -> vector<8x768xbf16>
    %66 = tpu.concatenate %58, %65 in 0 : vector<8x768xbf16>, vector<8x768xbf16> -> vector<16x768xbf16>
    %c0_71 = arith.constant 0 : index
    %c0_72 = arith.constant 0 : index
    %67 = vector.load %arg4[%c0_71, %c0_72] : memref<768x512xbf16, #tpu.memory_space<vmem>>, vector<768x512xbf16>
    %cst_73 = arith.constant dense<0.000000e+00> : vector<16x512xf32>
    %68 = tpu.matmul %66, %67, %cst_73 {dimension_numbers = #tpu.dot_dimension_numbers<[1], [0], [0], [1], [0, 0, 1, 1], [], []>} : vector<16x768xbf16>, vector<768x512xbf16>, vector<16x512xf32> -> vector<16x512xf32>
    %69 = vector.broadcast %51 : vector<1x512xf32> to vector<16x512xf32>
    %70 = arith.addf %68, %69 : vector<16x512xf32>
    %cst_74 = arith.constant 0.000000e+00 : f32
    %71 = vector.broadcast %cst_74 : f32 to vector<16x512xf32>
    %72 = arith.maximumf %70, %71 : vector<16x512xf32>
    %c0_75 = arith.constant 0 : index
    %c1_76 = arith.constant 1 : index
    %c0_77 = arith.constant 0 : index
    %c0_78 = arith.constant 0 : index
    %73 = vector.load %arg11[%c0_75, %c1_76, %c0_77, %c0_78] : memref<2x2x9x256xbf16, #tpu.memory_space<vmem>>, vector<1x1x8x256xbf16>
    %74 = vector.shape_cast %73 : vector<1x1x8x256xbf16> to vector<8x256xbf16>
    %c0_79 = arith.constant 0 : index
    %c0_80 = arith.constant 0 : index
    %c1_81 = arith.constant 1 : index
    %c0_82 = arith.constant 0 : index
    %75 = vector.load %arg11[%c0_79, %c0_80, %c1_81, %c0_82] : memref<2x2x9x256xbf16, #tpu.memory_space<vmem>>, vector<1x1x8x256xbf16>
    %76 = vector.shape_cast %75 : vector<1x1x8x256xbf16> to vector<8x256xbf16>
    %c0_83 = arith.constant 0 : index
    %c1_84 = arith.constant 1 : index
    %c1_85 = arith.constant 1 : index
    %c0_86 = arith.constant 0 : index
    %77 = vector.load %arg11[%c0_83, %c1_84, %c1_85, %c0_86] : memref<2x2x9x256xbf16, #tpu.memory_space<vmem>>, vector<1x1x8x256xbf16>
    %78 = vector.shape_cast %77 : vector<1x1x8x256xbf16> to vector<8x256xbf16>
    %79 = tpu.concatenate %74, %76, %78 in 1 : vector<8x256xbf16>, vector<8x256xbf16>, vector<8x256xbf16> -> vector<8x768xbf16>
    %c1_87 = arith.constant 1 : index
    %c1_88 = arith.constant 1 : index
    %c0_89 = arith.constant 0 : index
    %c0_90 = arith.constant 0 : index
    %80 = vector.load %arg11[%c1_87, %c1_88, %c0_89, %c0_90] : memref<2x2x9x256xbf16, #tpu.memory_space<vmem>>, vector<1x1x8x256xbf16>
    %81 = vector.shape_cast %80 : vector<1x1x8x256xbf16> to vector<8x256xbf16>
    %c1_91 = arith.constant 1 : index
    %c0_92 = arith.constant 0 : index
    %c1_93 = arith.constant 1 : index
    %c0_94 = arith.constant 0 : index
    %82 = vector.load %arg11[%c1_91, %c0_92, %c1_93, %c0_94] : memref<2x2x9x256xbf16, #tpu.memory_space<vmem>>, vector<1x1x8x256xbf16>
    %83 = vector.shape_cast %82 : vector<1x1x8x256xbf16> to vector<8x256xbf16>
    %c1_95 = arith.constant 1 : index
    %c1_96 = arith.constant 1 : index
    %c1_97 = arith.constant 1 : index
    %c0_98 = arith.constant 0 : index
    %84 = vector.load %arg11[%c1_95, %c1_96, %c1_97, %c0_98] : memref<2x2x9x256xbf16, #tpu.memory_space<vmem>>, vector<1x1x8x256xbf16>
    %85 = vector.shape_cast %84 : vector<1x1x8x256xbf16> to vector<8x256xbf16>
    %86 = tpu.concatenate %81, %83, %85 in 1 : vector<8x256xbf16>, vector<8x256xbf16>, vector<8x256xbf16> -> vector<8x768xbf16>
    %87 = tpu.concatenate %79, %86 in 0 : vector<8x768xbf16>, vector<8x768xbf16> -> vector<16x768xbf16>
    %c0_99 = arith.constant 0 : index
    %c0_100 = arith.constant 0 : index
    %88 = vector.load %arg4[%c0_99, %c0_100] : memref<768x512xbf16, #tpu.memory_space<vmem>>, vector<768x512xbf16>
    %cst_101 = arith.constant dense<0.000000e+00> : vector<16x512xf32>
    %89 = tpu.matmul %87, %88, %cst_101 {dimension_numbers = #tpu.dot_dimension_numbers<[1], [0], [0], [1], [0, 0, 1, 1], [], []>} : vector<16x768xbf16>, vector<768x512xbf16>, vector<16x512xf32> -> vector<16x512xf32>
    %90 = vector.broadcast %51 : vector<1x512xf32> to vector<16x512xf32>
    %91 = arith.addf %89, %90 : vector<16x512xf32>
    %cst_102 = arith.constant 0.000000e+00 : f32
    %92 = vector.broadcast %cst_102 : f32 to vector<16x512xf32>
    %93 = arith.maximumf %91, %92 : vector<16x512xf32>
    %94 = arith.maximumf %72, %93 : vector<16x512xf32>
    %95 = vector.extract_strided_slice %94 {offsets = [0, 0], sizes = [16, 256], strides = [1, 1]} : vector<16x512xf32> to vector<16x256xf32>
    %96 = vector.extract_strided_slice %94 {offsets = [0, 256], sizes = [16, 256], strides = [1, 1]} : vector<16x512xf32> to vector<16x256xf32>
    %97 = arith.maximumf %95, %96 : vector<16x256xf32>
    %98 = arith.truncf %97 : vector<16x256xf32> to vector<16x256xbf16>
    %99 = vector.extract_strided_slice %98 {offsets = [0, 0], sizes = [1, 256], strides = [1, 1]} : vector<16x256xbf16> to vector<1x256xbf16>
    %100 = vector.extract_strided_slice %98 {offsets = [1, 0], sizes = [1, 256], strides = [1, 1]} : vector<16x256xbf16> to vector<1x256xbf16>
    %101 = vector.extract_strided_slice %98 {offsets = [2, 0], sizes = [1, 256], strides = [1, 1]} : vector<16x256xbf16> to vector<1x256xbf16>
    %102 = vector.extract_strided_slice %98 {offsets = [3, 0], sizes = [1, 256], strides = [1, 1]} : vector<16x256xbf16> to vector<1x256xbf16>
    %103 = vector.extract_strided_slice %98 {offsets = [4, 0], sizes = [1, 256], strides = [1, 1]} : vector<16x256xbf16> to vector<1x256xbf16>
    %104 = vector.extract_strided_slice %98 {offsets = [5, 0], sizes = [1, 256], strides = [1, 1]} : vector<16x256xbf16> to vector<1x256xbf16>
    %105 = vector.extract_strided_slice %98 {offsets = [6, 0], sizes = [1, 256], strides = [1, 1]} : vector<16x256xbf16> to vector<1x256xbf16>
    %106 = vector.extract_strided_slice %98 {offsets = [7, 0], sizes = [1, 256], strides = [1, 1]} : vector<16x256xbf16> to vector<1x256xbf16>
    %107 = tpu.concatenate %99, %100, %101, %102, %103, %104, %105, %106 in 1 : vector<1x256xbf16>, vector<1x256xbf16>, vector<1x256xbf16>, vector<1x256xbf16>, vector<1x256xbf16>, vector<1x256xbf16>, vector<1x256xbf16>, vector<1x256xbf16> -> vector<1x2048xbf16>
    %108 = vector.extract_strided_slice %98 {offsets = [8, 0], sizes = [1, 256], strides = [1, 1]} : vector<16x256xbf16> to vector<1x256xbf16>
    %109 = vector.extract_strided_slice %98 {offsets = [9, 0], sizes = [1, 256], strides = [1, 1]} : vector<16x256xbf16> to vector<1x256xbf16>
    %110 = vector.extract_strided_slice %98 {offsets = [10, 0], sizes = [1, 256], strides = [1, 1]} : vector<16x256xbf16> to vector<1x256xbf16>
    %111 = vector.extract_strided_slice %98 {offsets = [11, 0], sizes = [1, 256], strides = [1, 1]} : vector<16x256xbf16> to vector<1x256xbf16>
    %112 = vector.extract_strided_slice %98 {offsets = [12, 0], sizes = [1, 256], strides = [1, 1]} : vector<16x256xbf16> to vector<1x256xbf16>
    %113 = vector.extract_strided_slice %98 {offsets = [13, 0], sizes = [1, 256], strides = [1, 1]} : vector<16x256xbf16> to vector<1x256xbf16>
    %114 = vector.extract_strided_slice %98 {offsets = [14, 0], sizes = [1, 256], strides = [1, 1]} : vector<16x256xbf16> to vector<1x256xbf16>
    %115 = vector.extract_strided_slice %98 {offsets = [15, 0], sizes = [1, 256], strides = [1, 1]} : vector<16x256xbf16> to vector<1x256xbf16>
    %116 = tpu.concatenate %108, %109, %110, %111, %112, %113, %114, %115 in 1 : vector<1x256xbf16>, vector<1x256xbf16>, vector<1x256xbf16>, vector<1x256xbf16>, vector<1x256xbf16>, vector<1x256xbf16>, vector<1x256xbf16>, vector<1x256xbf16> -> vector<1x2048xbf16>
    %117 = tpu.concatenate %107, %116 in 0 : vector<1x2048xbf16>, vector<1x2048xbf16> -> vector<2x2048xbf16>
    tpu.wait_dma2 semaphore(%arg13 : memref<!tpu.dma_semaphore, #tpu.memory_space<semaphore_mem>>) src(%arg6 : memref<2048x256xbf16, #tpu.memory_space<any>>) dst(%arg12 : memref<2048x256xbf16, #tpu.memory_space<vmem>>)
    %c0_103 = arith.constant 0 : index
    %c0_104 = arith.constant 0 : index
    %118 = vector.load %arg12[%c0_103, %c0_104] : memref<2048x256xbf16, #tpu.memory_space<vmem>>, vector<2048x256xbf16>
    %cst_105 = arith.constant dense<0.000000e+00> : vector<2x256xf32>
    %119 = tpu.matmul %117, %118, %cst_105 {dimension_numbers = #tpu.dot_dimension_numbers<[1], [0], [0], [1], [0, 0, 1, 1], [], []>} : vector<2x2048xbf16>, vector<2048x256xbf16>, vector<2x256xf32> -> vector<2x256xf32>
    %c0_106 = arith.constant 0 : index
    %c0_107 = arith.constant 0 : index
    %120 = vector.load %arg7[%c0_106, %c0_107] : memref<1x256xf32, #tpu.memory_space<vmem>>, vector<1x256xf32>
    %121 = vector.broadcast %120 : vector<1x256xf32> to vector<2x256xf32>
    %122 = arith.addf %119, %121 : vector<2x256xf32>
    %cst_108 = arith.constant 0.000000e+00 : f32
    %123 = vector.broadcast %cst_108 : f32 to vector<2x256xf32>
    %124 = arith.maximumf %122, %123 : vector<2x256xf32>
    %125 = arith.truncf %124 : vector<2x256xf32> to vector<2x256xbf16>
    %c0_109 = arith.constant 0 : index
    %c0_110 = arith.constant 0 : index
    %126 = vector.load %arg8[%c0_109, %c0_110] : memref<256x128xbf16, #tpu.memory_space<vmem>>, vector<256x128xbf16>
    %cst_111 = arith.constant dense<0.000000e+00> : vector<2x128xf32>
    %127 = tpu.matmul %125, %126, %cst_111 {dimension_numbers = #tpu.dot_dimension_numbers<[1], [0], [0], [1], [0, 0, 1, 1], [], []>} : vector<2x256xbf16>, vector<256x128xbf16>, vector<2x128xf32> -> vector<2x128xf32>
    %c0_112 = arith.constant 0 : index
    %c0_113 = arith.constant 0 : index
    %128 = vector.load %arg9[%c0_112, %c0_113] : memref<1x128xf32, #tpu.memory_space<vmem>>, vector<1x128xf32>
    %129 = vector.broadcast %128 : vector<1x128xf32> to vector<2x128xf32>
    %130 = arith.addf %127, %129 : vector<2x128xf32>
    %c0_114 = arith.constant 0 : index
    %c0_115 = arith.constant 0 : index
    %131 = vector.load %arg10[%c0_114, %c0_115] : memref<2x128xf32, #tpu.memory_space<vmem>>, vector<2x128xf32>
    tpu.vector_store %arg10[%c0_114, %c0_115], %130 {strides = array<i32>} : memref<2x128xf32, #tpu.memory_space<vmem>>, vector<2x128xf32>,
    return
  }
  func.func @transform_0(%arg0: i32) -> (i32, i32, i32) {
    %c0_i32 = arith.constant 0 : i32
    %c0_i32_0 = arith.constant 0 : i32
    %c0_i32_1 = arith.constant 0 : i32
    %c0_i32_2 = arith.constant 0 : i32
    return %c0_i32, %c0_i32_0, %c0_i32_1 : i32, i32, i32
  }
  func.func @transform_1(%arg0: i32) -> (i32, i32) {
    %c0_i32 = arith.constant 0 : i32
    %c0_i32_0 = arith.constant 0 : i32
    %c0_i32_1 = arith.constant 0 : i32
    return %c0_i32, %c0_i32_0 : i32, i32
  }
  func.func @transform_2(%arg0: i32) -> (i32, i32) {
    %c0_i32 = arith.constant 0 : i32
    %c0_i32_0 = arith.constant 0 : i32
    %c0_i32_1 = arith.constant 0 : i32
    return %c0_i32, %c0_i32_0 : i32, i32
  }
  func.func @transform_3(%arg0: i32) -> (i32, i32) {
    %c0_i32 = arith.constant 0 : i32
    %c0_i32_0 = arith.constant 0 : i32
    %c0_i32_1 = arith.constant 0 : i32
    return %c0_i32, %c0_i32_0 : i32, i32
  }
  func.func @transform_4(%arg0: i32) -> (i32, i32) {
    %c0_i32 = arith.constant 0 : i32
    %c0_i32_0 = arith.constant 0 : i32
    %c0_i32_1 = arith.constant 0 : i32
    return %c0_i32, %c0_i32_0 : i32, i32
  }
  func.func @transform_6(%arg0: i32) -> (i32, i32) {
    %c0_i32 = arith.constant 0 : i32
    %c0_i32_0 = arith.constant 0 : i32
    %c0_i32_1 = arith.constant 0 : i32
    return %c0_i32, %c0_i32_0 : i32, i32
  }
  func.func @transform_7(%arg0: i32) -> (i32, i32) {
    %c0_i32 = arith.constant 0 : i32
    %c0_i32_0 = arith.constant 0 : i32
    %c0_i32_1 = arith.constant 0 : i32
    return %c0_i32, %c0_i32_0 : i32, i32
  }
  func.func @transform_8(%arg0: i32) -> (i32, i32) {
    %c0_i32 = arith.constant 0 : i32
    %c0_i32_0 = arith.constant 0 : i32
    %c0_i32_1 = arith.constant 0 : i32
    return %c0_i32, %c0_i32_0 : i32, i32
  }
  func.func @transform_9(%arg0: i32) -> (i32, i32) {
    %c0_i32 = arith.constant 0 : i32
    %c0_i32_0 = arith.constant 0 : i32
    %c0_i32_1 = arith.constant 0 : i32
    return %c0_i32, %c0_i32_0 : i32, i32
  }
}

</mosaic_0001>

<llo_original>
// kernel: conv2_small_bn_forward.1
$region0: #{conv2_small_bn_forward.1}
  #allocation0 [shape = 'u32[]', space=smem, size = 0x4, offset = 0x4, fixed_abs, tag = 'smem constant byte address 0x4 - core index']
  #allocation1 [shape = 'u32[144,128]{1,0:T(1,128)}', space=vmem, size = 0x12000, scoped, tag = 'internal scratch']
  #allocation2 [shape = 'bf16[2,2,9,256]{3,2,1,0:T(8,128)(2,1)}', space=vmem, size = 0x8000, scoped, tag = 'scratch operand']
  #allocation3 [shape = 'bf16[2048,256]{1,0:T(8,128)(2,1)}', space=vmem, size = 0x100000, scoped, tag = 'scratch operand']
  #allocation4 [shape = 's32[1]{0}', space=sflag, size = 0x4, scoped, tag = 'scratch operand']
  #allocation9 [shape = 's32[]', space=sflag, size = 0x4, offset = 0, fixed_abs, tag = 'sflag constant byte address 0x0 - dummy sync flag']
  #allocation10 [shape = 's32[]', space=sflag, size = 0x4, offset = 0, fixed_abs, tag = 'sflag constant byte address 0x0 - dummy sync flag']
  #allocation11 [shape = 'u32[]', space=smem, size = 0x4, offset = 0x44, fixed_abs, tag = 'smem constant byte address 0x44 - assertion arg 0']
  #allocation12 [shape = 'u32[]', space=smem, size = 0x4, offset = 0x48, fixed_abs, tag = 'smem constant byte address 0x48 - assertion arg 1']
  %s0 = inlined_call_operand.vmem [shape: bf16[2,32,96], index: 0, kind: input, shape index: {}]
  %s1 = inlined_call_operand.vmem [shape: bf16[96,512], index: 1, kind: input, shape index: {}]
  %s2 = inlined_call_operand.vmem [shape: f32[1,512], index: 2, kind: input, shape index: {}]
  %s3 = inlined_call_operand.hbm [shape: bf16[768,512], index: 3, kind: input, shape index: {}]
  %s4 = inlined_call_operand.vmem [shape: f32[1,512], index: 4, kind: input, shape index: {}]
  %s5 = inlined_call_operand.hbm [shape: bf16[2048,256], index: 5, kind: input, shape index: {}]
  %s6 = inlined_call_operand.vmem [shape: f32[1,256], index: 6, kind: input, shape index: {}]
  %s7 = inlined_call_operand.vmem [shape: bf16[256,128], index: 7, kind: input, shape index: {}]
  %s8 = inlined_call_operand.vmem [shape: f32[1,128], index: 8, kind: input, shape index: {}]
  %s9 = inlined_call_operand.hbm [shape: f32[2,128], index: 9, kind: output, shape index: {}]
  %s10 = sld [smem:[#allocation0]]
  $region50: #{conv2_small_bn_forward.1} parent=0
    _
  %s12 = ssub.s32 1, %s10
  %s13 = scalar_select 0, %s12, %s10
  $region1: #{conv2_small_bn_forward.1} parent=0
    #allocation5 [shape = 'u8[786432]{0}', space=vmem, size = 0xc0000, scoped, tag = 'input window, operand 3, single buffered']
    #allocation6 [shape = 's32[1]{0}', space=sflag, size = 0x4, scoped, tag = 'scoped memory for conv2_small_bn_forward.1']
    #allocation7 [shape = 's32[1]{0}', space=sflag, size = 0x4, scoped, tag = 'scoped memory for conv2_small_bn_forward.1']
    #allocation8 [shape = 'u8[1024]{0}', space=vmem, size = 0x400, scoped, tag = 'output window, operand 0, single buffered']
    %14 = vsyncpa [#allocation6], 0
    %15 = vsyncpa [#allocation7], 0
    // Predicated region
    $region2: #{conv2_small_bn_forward.1} parent=1 // pred_check
      _
    $region3: #{conv2_small_bn_forward.1} parent=1 // pred_check_branch
      %17 = sbr.rel (0) target = $region5
    $region4: #{conv2_small_bn_forward.1} parent=1 // pred_region
      _
    $region5: #{conv2_small_bn_forward.1} parent=1 // pred_fallthru
      _
    // Predicated region
    $region6: #{conv2_small_bn_forward.1} parent=1 // pred_check
      _
    $region7: #{conv2_small_bn_forward.1} parent=1 // pred_check_branch
      %19 = sbr.rel (0) target = $region9
    $region8: #{conv2_small_bn_forward.1} parent=1 // pred_region
      _
    $region9: #{conv2_small_bn_forward.1} parent=1 // pred_fallthru
      _
    // Predicated region
    $region10: #{conv2_small_bn_forward.1} parent=1 // pred_check
      _
    $region11: #{conv2_small_bn_forward.1} parent=1 // pred_check_branch
      %21 = sbr.rel (0) target = $region13
    $region12: #{conv2_small_bn_forward.1} parent=1 // pred_region
      _
    $region13: #{conv2_small_bn_forward.1} parent=1 // pred_fallthru
      _
    // Predicated region
    $region14: #{conv2_small_bn_forward.1} parent=1 // pred_check
      _
    $region15: #{conv2_small_bn_forward.1} parent=1 // pred_check_branch
      %23 = sbr.rel (0) target = $region17
    $region16: #{conv2_small_bn_forward.1} parent=1 // pred_region
      %s25 = ssub.s32 24576, 24576
      %26 = vsyncadd [#allocation6], %s25
      %s27 = sshll.u32 [#allocation5], 4
      %s28 = int_to_ptr.vmem [resolvable:$true] %s27
      %33 = dma.hbm_to_vmem [thread:$0]  %s3, 24576, %s28, [#allocation6], 256, 256, 16
    $region17: #{conv2_small_bn_forward.1} parent=1 // pred_fallthru
      _
    // Predicated region
    $region18: #{conv2_small_bn_forward.1} parent=1 // pred_check
      _
    $region19: #{conv2_small_bn_forward.1} parent=1 // pred_check_branch
      %35 = sbr.rel (0) target = $region21
    $region20: #{conv2_small_bn_forward.1} parent=1 // pred_region
      _
    $region21: #{conv2_small_bn_forward.1} parent=1 // pred_fallthru
      _
    // Predicated region
    $region22: #{conv2_small_bn_forward.1} parent=1 // pred_check
      _
    $region23: #{conv2_small_bn_forward.1} parent=1 // pred_check_branch
      %37 = sbr.rel (0) target = $region25
    $region24: #{conv2_small_bn_forward.1} parent=1 // pred_region
      _
    $region25: #{conv2_small_bn_forward.1} parent=1 // pred_fallthru
      _
    // Predicated region
    $region26: #{conv2_small_bn_forward.1} parent=1 // pred_check
      _
    $region27: #{conv2_small_bn_forward.1} parent=1 // pred_check_branch
      %39 = sbr.rel (0) target = $region29
    $region28: #{conv2_small_bn_forward.1} parent=1 // pred_region
      _
    $region29: #{conv2_small_bn_forward.1} parent=1 // pred_fallthru
      _
    // Predicated region
    $region30: #{conv2_small_bn_forward.1} parent=1 // pred_check
      _
    $region31: #{conv2_small_bn_forward.1} parent=1 // pred_check_branch
      %41 = sbr.rel (0) target = $region33
    $region32: #{conv2_small_bn_forward.1} parent=1 // pred_region
      _
    $region33: #{conv2_small_bn_forward.1} parent=1 // pred_fallthru
      _
    // Predicated region
    $region34: #{conv2_small_bn_forward.1} parent=1 // pred_check
      _
    $region35: #{conv2_small_bn_forward.1} parent=1 // pred_check_branch
      %43 = sbr.rel (0) target = $region37
    $region36: #{conv2_small_bn_forward.1} parent=1 // pred_region
      %44 = dma.done [#allocation6], 24576
    $region37: #{conv2_small_bn_forward.1} parent=1 // pred_fallthru
      _
    // Predicated region
    $region38: #{conv2_small_bn_forward.1} parent=1 // pred_check
      _
    $region39: #{conv2_small_bn_forward.1} parent=1 // pred_check_branch
      %47 = sbr.rel target = $region41
    $region40: #{conv2_small_bn_forward.1} parent=1 // pred_region
      %48 = sst [smem:[#allocation11]] [#allocation10]
      %49 = sst [smem:[#allocation12]] [#allocation9]
    $region41: #{conv2_small_bn_forward.1} parent=1 // pred_fallthru
      _
    %51 = shalt.err (0)
    %s53 = sshll.u32 [#allocation3], 4
    %s54 = int_to_ptr.vmem [resolvable:$true] %s53
    %56 = dma.hbm_to_vmem [thread:$0]  %s5, 32768, %s54, [#allocation4]
    %v57 = vld [vmem:[%s2] sm:$0xf]
    %v58 = vld [vmem:[%s0] sm:$0xf]
    %v59 = vld [vmem:[%s0 + $0x4] sm:$0xf]
    %v60 = vld [vmem:[%s0 + $0x8] sm:$0xf]
    %v61 = vld [vmem:[%s0 + $0xc] sm:$0xf]
    %v62 = vld [vmem:[%s1] sm:$0xff]
    %v63 = vld [vmem:[%s1 + $0x8] sm:$0xff]
    %v64 = vld [vmem:[%s1 + $0x10] sm:$0xff]
    %v65 = vld [vmem:[%s1 + $0x18] sm:$0xff]
    %v66 = vld [vmem:[%s1 + $0x20] sm:$0xff]
    %v67 = vld [vmem:[%s1 + $0x28] sm:$0xff]
    %v68 = vld [vmem:[%s1 + $0x30] sm:$0xff]
    %v69 = vld [vmem:[%s1 + $0x38] sm:$0xff]
    %v70 = vld [vmem:[%s1 + $0x40] sm:$0xff]
    %v71 = vld [vmem:[%s1 + $0x48] sm:$0xff]
    %v72 = vld [vmem:[%s1 + $0x50] sm:$0xff]
    %v73 = vld [vmem:[%s1 + $0x58] sm:$0xff]
    %v74 = vld [vmem:[%s1 + $0x60] sm:$0xff]
    %v75 = vld [vmem:[%s1 + $0x68] sm:$0xff]
    %v76 = vld [vmem:[%s1 + $0x70] sm:$0xff]
    %v77 = vld [vmem:[%s1 + $0x78] sm:$0xff]
    %v78 = vld [vmem:[%s1 + $0x80] sm:$0xff]
    %v79 = vld [vmem:[%s1 + $0x88] sm:$0xff]
    %v80 = vld [vmem:[%s1 + $0x90] sm:$0xff]
    %v81 = vld [vmem:[%s1 + $0x98] sm:$0xff]
    %v82 = vld [vmem:[%s1 + $0xa0] sm:$0xff]
    %v83 = vld [vmem:[%s1 + $0xa8] sm:$0xff]
    %v84 = vld [vmem:[%s1 + $0xb0] sm:$0xff]
    %v85 = vld [vmem:[%s1 + $0xb8] sm:$0xff]
    %v87 = vlaneseq
    %v88 = vshrl.u32 %v87, 7
    %v89 = vsub.s32 0, %v88
    %v90 = vrot.slane %v57, %v89
    %v91 = vlaneseq
    %v92 = vshrl.u32 %v91, 7
    %v93 = vsub.s32 1, %v92
    %v94 = vrot.slane %v57, %v93
    %v95 = vlaneseq
    %v96 = vshrl.u32 %v95, 7
    %v97 = vsub.s32 2, %v96
    %v98 = vrot.slane %v57, %v97
    %v99 = vlaneseq
    %v100 = vshrl.u32 %v99, 7
    %v101 = vsub.s32 3, %v100
    %v102 = vrot.slane %v57, %v101
    %v111 = vunpack.c.l.b16 %v58
    %v112 = vunpack.c.l.b16 %v59
    %v113 = vunpack.c.l.b16 %v60
    %v114 = vunpack.c.l.b16 %v61
    %v115 = vpack.c.b16 %v112, %v111
    %v116 = vpack.c.b16 %v114, %v113
    %v141 = vunpack.c.l.b16 %v62
    %v142 = vunpack.c.h.b16 %v62
    %v143 = vunpack.c.l.b16 %v63
    %v144 = vunpack.c.h.b16 %v63
    %v145 = vunpack.c.l.b16 %v64
    %v146 = vunpack.c.h.b16 %v64
    %v147 = vunpack.c.l.b16 %v65
    %v148 = vunpack.c.h.b16 %v65
    %v149 = vunpack.c.l.b16 %v66
    %v150 = vunpack.c.h.b16 %v66
    %v151 = vunpack.c.l.b16 %v67
    %v152 = vunpack.c.h.b16 %v67
    %v153 = vunpack.c.l.b16 %v68
    %v154 = vunpack.c.h.b16 %v68
    %v155 = vunpack.c.l.b16 %v69
    %v156 = vunpack.c.h.b16 %v69
    %v157 = vunpack.c.l.b16 %v70
    %v158 = vunpack.c.h.b16 %v70
    %v159 = vunpack.c.l.b16 %v71
    %v160 = vunpack.c.h.b16 %v71
    %v161 = vunpack.c.l.b16 %v72
    %v162 = vunpack.c.h.b16 %v72
    %v163 = vunpack.c.l.b16 %v73
    %v164 = vunpack.c.h.b16 %v73
    %v165 = vunpack.c.l.b16 %v74
    %v166 = vunpack.c.h.b16 %v74
    %v167 = vunpack.c.l.b16 %v75
    %v168 = vunpack.c.h.b16 %v75
    %v169 = vunpack.c.l.b16 %v76
    %v170 = vunpack.c.h.b16 %v76
    %v171 = vunpack.c.l.b16 %v77
    %v172 = vunpack.c.h.b16 %v77
    %v173 = vunpack.c.l.b16 %v78
    %v174 = vunpack.c.h.b16 %v78
    %v175 = vunpack.c.l.b16 %v79
    %v176 = vunpack.c.h.b16 %v79
    %v177 = vunpack.c.l.b16 %v80
    %v178 = vunpack.c.h.b16 %v80
    %v179 = vunpack.c.l.b16 %v81
    %v180 = vunpack.c.h.b16 %v81
    %v181 = vunpack.c.l.b16 %v82
    %v182 = vunpack.c.h.b16 %v82
    %v183 = vunpack.c.l.b16 %v83
    %v184 = vunpack.c.h.b16 %v83
    %v185 = vunpack.c.l.b16 %v84
    %v186 = vunpack.c.h.b16 %v84
    %v187 = vunpack.c.l.b16 %v85
    %v188 = vunpack.c.h.b16 %v85
    %v189 = vpack.c.b16 %v145, %v141
    %v190 = vpack.c.b16 %v146, %v142
    %v191 = vpack.c.b16 %v147, %v143
    %v192 = vpack.c.b16 %v148, %v144
    %v193 = vpack.c.b16 %v153, %v149
    %v194 = vpack.c.b16 %v154, %v150
    %v195 = vpack.c.b16 %v155, %v151
    %v196 = vpack.c.b16 %v156, %v152
    %v197 = vpack.c.b16 %v161, %v157
    %v198 = vpack.c.b16 %v162, %v158
    %v199 = vpack.c.b16 %v163, %v159
    %v200 = vpack.c.b16 %v164, %v160
    %v201 = vpack.c.b16 %v169, %v165
    %v202 = vpack.c.b16 %v170, %v166
    %v203 = vpack.c.b16 %v171, %v167
    %v204 = vpack.c.b16 %v172, %v168
    %v205 = vpack.c.b16 %v177, %v173
    %v206 = vpack.c.b16 %v178, %v174
    %v207 = vpack.c.b16 %v179, %v175
    %v208 = vpack.c.b16 %v180, %v176
    %v209 = vpack.c.b16 %v185, %v181
    %v210 = vpack.c.b16 %v186, %v182
    %v211 = vpack.c.b16 %v187, %v183
    %v212 = vpack.c.b16 %v188, %v184
    %vm237 = vcmask 785408
    %v239 = vsel %vm237, %v115, 0
    %v242 = vsel %vm237, %v116, 0
    %244 = vmatprep.subr.bf16.mxu0 0
    %245 = vmatpush1.bf16.msra.mxu0 0
    %246 = vmatprep.subr.bf16.mxu0 0
    %247 = vmatpush1.bf16.msra.mxu0 0
    %248 = vmatprep.subr.bf16.mxu0 %v210
    %249 = vmatpush1.bf16.msra.mxu0 %v209
    %250 = vmatprep.subr.bf16.mxu0 %v206
    %251 = vmatpush1.bf16.msra.mxu0 %v205
    %252 = vmatprep.subr.bf16.mxu0 %v202
    %253 = vmatpush1.bf16.msra.mxu0 %v201
    %254 = vmatprep.subr.bf16.mxu0 %v198
    %255 = vmatpush1.bf16.msra.mxu0 %v197
    %256 = vmatprep.subr.bf16.mxu0 %v194
    %257 = vmatpush1.bf16.msra.mxu0 %v193
    %258 = vmatprep.subr.bf16.mxu0 %v190
    %259 = vmatpush1.bf16.msra.mxu0 %v189
    %260 = vmatprep.subr.bf16.mxu0 0
    %261 = vmatpush2.bf16.msra.mxu0 0
    %262 = vmatprep.subr.bf16.mxu0 0
    %263 = vmatpush2.bf16.msra.mxu0 0
    %264 = vmatprep.subr.bf16.mxu0 0
    %265 = vmatpush2.bf16.msra.mxu0 0
    %266 = vmatprep.subr.bf16.mxu0 0
    %267 = vmatpush2.bf16.msra.mxu0 0
    %268 = vmatprep.subr.bf16.mxu0 0
    %269 = vmatpush2.bf16.msra.mxu0 0
    %270 = vmatprep.subr.bf16.mxu0 0
    %271 = vmatpush2.bf16.msra.mxu0 0
    %272 = vmatprep.subr.bf16.mxu0 0
    %273 = vmatpush2.bf16.msra.mxu0 0
    %274 = vmatprep.subr.bf16.mxu0 0
    %275 = vmatpush2.bf16.msra.mxu0 0
    %276 = vmatprep.mubr.bf16.mxu0 0
    %277 = vmatmul.mubr.bf16.gmra.mxu0 %v239
    %v278 = vpop.f32.mrf.mxu0
    %v279 = vadd.f32 %v90, %v278
    %v280 = vpop.f32.mrf.mxu0
    %v281 = vadd.f32 %v94, %v280
    %v282 = vpop.f32.mrf.mxu0
    %v283 = vadd.f32 %v90, %v282
    %v284 = vpop.f32.mrf.mxu0
    %v285 = vadd.f32 %v94, %v284
    %286 = vmatprep.mubr.bf16.mxu0 0
    %287 = vmatmul.mubr.bf16.gmra.mxu0 %v242
    %v288 = vpop.f32.mrf.mxu0
    %v289 = vadd.f32 %v90, %v288
    %v290 = vpop.f32.mrf.mxu0
    %v291 = vadd.f32 %v94, %v290
    %v292 = vpop.f32.mrf.mxu0
    %v293 = vadd.f32 %v90, %v292
    %v294 = vpop.f32.mrf.mxu0
    %v295 = vadd.f32 %v94, %v294
    %296 = vdwg.mxu0
    %297 = vmatprep.subr.bf16.mxu0 0
    %298 = vmatpush1.bf16.msra.mxu0 0
    %299 = vmatprep.subr.bf16.mxu0 0
    %300 = vmatpush1.bf16.msra.mxu0 0
    %301 = vmatprep.subr.bf16.mxu0 %v212
    %302 = vmatpush1.bf16.msra.mxu0 %v211
    %303 = vmatprep.subr.bf16.mxu0 %v208
    %304 = vmatpush1.bf16.msra.mxu0 %v207
    %305 = vmatprep.subr.bf16.mxu0 %v204
    %306 = vmatpush1.bf16.msra.mxu0 %v203
    %307 = vmatprep.subr.bf16.mxu0 %v200
    %308 = vmatpush1.bf16.msra.mxu0 %v199
    %309 = vmatprep.subr.bf16.mxu0 %v196
    %310 = vmatpush1.bf16.msra.mxu0 %v195
    %311 = vmatprep.subr.bf16.mxu0 %v192
    %312 = vmatpush1.bf16.msra.mxu0 %v191
    %313 = vmatprep.subr.bf16.mxu0 0
    %314 = vmatpush2.bf16.msra.mxu0 0
    %315 = vmatprep.subr.bf16.mxu0 0
    %316 = vmatpush2.bf16.msra.mxu0 0
    %317 = vmatprep.subr.bf16.mxu0 0
    %318 = vmatpush2.bf16.msra.mxu0 0
    %319 = vmatprep.subr.bf16.mxu0 0
    %320 = vmatpush2.bf16.msra.mxu0 0
    %321 = vmatprep.subr.bf16.mxu0 0
    %322 = vmatpush2.bf16.msra.mxu0 0
    %323 = vmatprep.subr.bf16.mxu0 0
    %324 = vmatpush2.bf16.msra.mxu0 0
    %325 = vmatprep.subr.bf16.mxu0 0
    %326 = vmatpush2.bf16.msra.mxu0 0
    %327 = vmatprep.subr.bf16.mxu0 0
    %328 = vmatpush2.bf16.msra.mxu0 0
    %329 = vmatprep.mubr.bf16.mxu0 0
    %330 = vmatmul.mubr.bf16.gmra.mxu0 %v239
    %v331 = vpop.f32.mrf.mxu0
    %v332 = vadd.f32 %v98, %v331
    %v333 = vpop.f32.mrf.mxu0
    %v334 = vadd.f32 %v102, %v333
    %v335 = vpop.f32.mrf.mxu0
    %v336 = vadd.f32 %v98, %v335
    %v337 = vpop.f32.mrf.mxu0
    %v338 = vadd.f32 %v102, %v337
    %339 = vmatprep.mubr.bf16.mxu0 0
    %340 = vmatmul.mubr.bf16.gmra.mxu0 %v242
    %v341 = vpop.f32.mrf.mxu0
    %v342 = vadd.f32 %v98, %v341
    %v343 = vpop.f32.mrf.mxu0
    %v344 = vadd.f32 %v102, %v343
    %v345 = vpop.f32.mrf.mxu0
    %v346 = vadd.f32 %v98, %v345
    %v347 = vpop.f32.mrf.mxu0
    %v348 = vadd.f32 %v102, %v347
    %349 = vdwg.mxu0
    %v350 = vmax.f32 %v279, 0.0
    %v351 = vmax.f32 %v281, 0.0
    %v352 = vmax.f32 %v332, 0.0
    %v353 = vmax.f32 %v334, 0.0
    %v354 = vmax.f32 %v283, 0.0
    %v355 = vmax.f32 %v285, 0.0
    %v356 = vmax.f32 %v336, 0.0
    %v357 = vmax.f32 %v338, 0.0
    %v358 = vmax.f32 %v289, 0.0
    %v359 = vmax.f32 %v291, 0.0
    %v360 = vmax.f32 %v342, 0.0
    %v361 = vmax.f32 %v344, 0.0
    %v362 = vmax.f32 %v293, 0.0
    %v363 = vmax.f32 %v295, 0.0
    %v364 = vmax.f32 %v346, 0.0
    %v365 = vmax.f32 %v348, 0.0
    %s366 = scalar_lea.vmem %s0, 16
    %v367 = vld [vmem:[%s366] sm:$0xf]
    %v368 = vld [vmem:[%s366 + $0x4] sm:$0xf]
    %v369 = vld [vmem:[%s366 + $0x8] sm:$0xf]
    %v370 = vld [vmem:[%s366 + $0xc] sm:$0xf]
    %v375 = vunpack.c.l.b16 %v367
    %v376 = vunpack.c.l.b16 %v368
    %v377 = vunpack.c.l.b16 %v369
    %v378 = vunpack.c.l.b16 %v370
    %v379 = vpack.c.b16 %v376, %v375
    %v380 = vpack.c.b16 %v378, %v377
    %v382 = vsel %vm237, %v379, 0
    %v385 = vsel %vm237, %v380, 0
    %387 = vmatprep.subr.bf16.mxu0 0
    %388 = vmatpush1.bf16.msra.mxu0 0
    %389 = vmatprep.subr.bf16.mxu0 0
    %390 = vmatpush1.bf16.msra.mxu0 0
    %391 = vmatprep.subr.bf16.mxu0 %v210
    %392 = vmatpush1.bf16.msra.mxu0 %v209
    %393 = vmatprep.subr.bf16.mxu0 %v206
    %394 = vmatpush1.bf16.msra.mxu0 %v205
    %395 = vmatprep.subr.bf16.mxu0 %v202
    %396 = vmatpush1.bf16.msra.mxu0 %v201
    %397 = vmatprep.subr.bf16.mxu0 %v198
    %398 = vmatpush1.bf16.msra.mxu0 %v197
    %399 = vmatprep.subr.bf16.mxu0 %v194
    %400 = vmatpush1.bf16.msra.mxu0 %v193
    %401 = vmatprep.subr.bf16.mxu0 %v190
    %402 = vmatpush1.bf16.msra.mxu0 %v189
    %403 = vmatprep.subr.bf16.mxu0 0
    %404 = vmatpush2.bf16.msra.mxu0 0
    %405 = vmatprep.subr.bf16.mxu0 0
    %406 = vmatpush2.bf16.msra.mxu0 0
    %407 = vmatprep.subr.bf16.mxu0 0
    %408 = vmatpush2.bf16.msra.mxu0 0
    %409 = vmatprep.subr.bf16.mxu0 0
    %410 = vmatpush2.bf16.msra.mxu0 0
    %411 = vmatprep.subr.bf16.mxu0 0
    %412 = vmatpush2.bf16.msra.mxu0 0
    %413 = vmatprep.subr.bf16.mxu0 0
    %414 = vmatpush2.bf16.msra.mxu0 0
    %415 = vmatprep.subr.bf16.mxu0 0
    %416 = vmatpush2.bf16.msra.mxu0 0
    %417 = vmatprep.subr.bf16.mxu0 0
    %418 = vmatpush2.bf16.msra.mxu0 0
    %419 = vmatprep.mubr.bf16.mxu0 0
    %420 = vmatmul.mubr.bf16.gmra.mxu0 %v382
    %v421 = vpop.f32.mrf.mxu0
    %v422 = vadd.f32 %v90, %v421
    %v423 = vpop.f32.mrf.mxu0
    %v424 = vadd.f32 %v94, %v423
    %v425 = vpop.f32.mrf.mxu0
    %v426 = vadd.f32 %v90, %v425
    %v427 = vpop.f32.mrf.mxu0
    %v428 = vadd.f32 %v94, %v427
    %429 = vmatprep.mubr.bf16.mxu0 0
    %430 = vmatmul.mubr.bf16.gmra.mxu0 %v385
    %v431 = vpop.f32.mrf.mxu0
    %v432 = vadd.f32 %v90, %v431
    %v433 = vpop.f32.mrf.mxu0
    %v434 = vadd.f32 %v94, %v433
    %v435 = vpop.f32.mrf.mxu0
    %v436 = vadd.f32 %v90, %v435
    %v437 = vpop.f32.mrf.mxu0
    %v438 = vadd.f32 %v94, %v437
    %439 = vdwg.mxu0
    %440 = vmatprep.subr.bf16.mxu0 0
    %441 = vmatpush1.bf16.msra.mxu0 0
    %442 = vmatprep.subr.bf16.mxu0 0
    %443 = vmatpush1.bf16.msra.mxu0 0
    %444 = vmatprep.subr.bf16.mxu0 %v212
    %445 = vmatpush1.bf16.msra.mxu0 %v211
    %446 = vmatprep.subr.bf16.mxu0 %v208
    %447 = vmatpush1.bf16.msra.mxu0 %v207
    %448 = vmatprep.subr.bf16.mxu0 %v204
    %449 = vmatpush1.bf16.msra.mxu0 %v203
    %450 = vmatprep.subr.bf16.mxu0 %v200
    %451 = vmatpush1.bf16.msra.mxu0 %v199
    %452 = vmatprep.subr.bf16.mxu0 %v196
    %453 = vmatpush1.bf16.msra.mxu0 %v195
    %454 = vmatprep.subr.bf16.mxu0 %v192
    %455 = vmatpush1.bf16.msra.mxu0 %v191
    %456 = vmatprep.subr.bf16.mxu0 0
    %457 = vmatpush2.bf16.msra.mxu0 0
    %458 = vmatprep.subr.bf16.mxu0 0
    %459 = vmatpush2.bf16.msra.mxu0 0
    %460 = vmatprep.subr.bf16.mxu0 0
    %461 = vmatpush2.bf16.msra.mxu0 0
    %462 = vmatprep.subr.bf16.mxu0 0
    %463 = vmatpush2.bf16.msra.mxu0 0
    %464 = vmatprep.subr.bf16.mxu0 0
    %465 = vmatpush2.bf16.msra.mxu0 0
    %466 = vmatprep.subr.bf16.mxu0 0
    %467 = vmatpush2.bf16.msra.mxu0 0
    %468 = vmatprep.subr.bf16.mxu0 0
    %469 = vmatpush2.bf16.msra.mxu0 0
    %470 = vmatprep.subr.bf16.mxu0 0
    %471 = vmatpush2.bf16.msra.mxu0 0
    %472 = vmatprep.mubr.bf16.mxu0 0
    %473 = vmatmul.mubr.bf16.gmra.mxu0 %v382
    %v474 = vpop.f32.mrf.mxu0
    %v475 = vadd.f32 %v98, %v474
    %v476 = vpop.f32.mrf.mxu0
    %v477 = vadd.f32 %v102, %v476
    %v478 = vpop.f32.mrf.mxu0
    %v479 = vadd.f32 %v98, %v478
    %v480 = vpop.f32.mrf.mxu0
    %v481 = vadd.f32 %v102, %v480
    %482 = vmatprep.mubr.bf16.mxu0 0
    %483 = vmatmul.mubr.bf16.gmra.mxu0 %v385
    %v484 = vpop.f32.mrf.mxu0
    %v485 = vadd.f32 %v98, %v484
    %v486 = vpop.f32.mrf.mxu0
    %v487 = vadd.f32 %v102, %v486
    %v488 = vpop.f32.mrf.mxu0
    %v489 = vadd.f32 %v98, %v488
    %v490 = vpop.f32.mrf.mxu0
    %v491 = vadd.f32 %v102, %v490
    %492 = vdwg.mxu0
    %v493 = vmax.f32 %v422, 0.0
    %v494 = vmax.f32 %v424, 0.0
    %v495 = vmax.f32 %v475, 0.0
    %v496 = vmax.f32 %v477, 0.0
    %v497 = vmax.f32 %v426, 0.0
    %v498 = vmax.f32 %v428, 0.0
    %v499 = vmax.f32 %v479, 0.0
    %v500 = vmax.f32 %v481, 0.0
    %v501 = vmax.f32 %v432, 0.0
    %v502 = vmax.f32 %v434, 0.0
    %v503 = vmax.f32 %v485, 0.0
    %v504 = vmax.f32 %v487, 0.0
    %v505 = vmax.f32 %v436, 0.0
    %v506 = vmax.f32 %v438, 0.0
    %v507 = vmax.f32 %v489, 0.0
    %v508 = vmax.f32 %v491, 0.0
    %v509 = vmax.f32 %v350, %v493
    %v510 = vmax.f32 %v351, %v494
    %v511 = vmax.f32 %v352, %v495
    %v512 = vmax.f32 %v353, %v496
    %v513 = vmax.f32 %v354, %v497
    %v514 = vmax.f32 %v355, %v498
    %v515 = vmax.f32 %v356, %v499
    %v516 = vmax.f32 %v357, %v500
    %v517 = vmax.f32 %v358, %v501
    %v518 = vmax.f32 %v359, %v502
    %v519 = vmax.f32 %v360, %v503
    %v520 = vmax.f32 %v361, %v504
    %v521 = vmax.f32 %v362, %v505
    %v522 = vmax.f32 %v363, %v506
    %v523 = vmax.f32 %v364, %v507
    %v524 = vmax.f32 %v365, %v508
    %v525 = vmax.f32 %v509, %v511
    %v526 = vmax.f32 %v510, %v512
    %v527 = vmax.f32 %v513, %v515
    %v528 = vmax.f32 %v514, %v516
    %v529 = vmax.f32 %v517, %v519
    %v530 = vmax.f32 %v518, %v520
    %v531 = vmax.f32 %v521, %v523
    %v532 = vmax.f32 %v522, %v524
    %v533 = vpack.c.bf16 %v527, %v525
    %v534 = vpack.c.bf16 %v528, %v526
    %v535 = vpack.c.bf16 %v531, %v529
    %v536 = vpack.c.bf16 %v532, %v530
    %v539 = vunpack.c.l.b16 %v533
    %v540 = vunpack.c.l.b16 %v534
    %v541 = vpack.c.b16 %v540, %v539
    %s543 = scalar_lea.vmem [#allocation2], 16
    %544 = vst [vmem:[%s543] sm:$0xff] %v541
    %v545 = vunpack.c.h.b16 %v533
    %v546 = vunpack.c.h.b16 %v534
    %v547 = vpack.c.b16 %v546, %v545
    %v549 = vshrl.u32 %v547, 16
    %v551 = vrot.slane %v549, 7
    %v552 = vshll.u32 %v547, 16
    %v554 = vor.u32 %v551, %v552
    %v555 = vrot.slane %v551, 4
    %vm558 = vcmask 1043456
    %vm559 = vsmask.f32 7938
    %vm560 = vmand %vm558, %vm559
    %vm561 = vcmask 1047556
    %vm562 = vsmask.f32 7954
    %vm563 = vmand %vm561, %vm562
    %vm564 = vmor %vm563, %vm560
    %v565 = vld [vmem:[#allocation2] sm:$0xff]
    %v566 = vsel %vm564, %v554, %v565
    %567 = vst [vmem:[#allocation2] sm:$0xff] %v566
    %vm568 = vcmask 1040384
    %vm569 = vsmask.f32 256
    %vm570 = vmand %vm568, %vm569
    %vm571 = vcmask 1044484
    %vm572 = vsmask.f32 4352
    %vm573 = vmand %vm571, %vm572
    %vm574 = vmor %vm573, %vm570
    %v575 = vld [vmem:[#allocation2 + $0x8] sm:$0x11]
    %v576 = vsel %vm574, %v555, %v575
    %577 = vst [vmem:[#allocation2 + $0x8] sm:$0x11] %v576
    %v578 = vld [vmem:[#allocation2] sm:$0x11]
    %v579 = vsel %vm574, 0, %v578
    %580 = vst [vmem:[#allocation2] sm:$0x11] %v579
    %v581 = vld [vmem:[%s543 + $0x8] sm:$0x11]
    %v582 = vsel %vm574, 0, %v581
    %583 = vst [vmem:[%s543 + $0x8] sm:$0x11] %v582
    %v586 = vunpack.c.l.b16 %v535
    %v587 = vunpack.c.l.b16 %v536
    %v588 = vpack.c.b16 %v587, %v586
    %s590 = scalar_lea.vmem [#allocation2], 48
    %591 = vst [vmem:[%s590] sm:$0xff] %v588
    %v592 = vunpack.c.h.b16 %v535
    %v593 = vunpack.c.h.b16 %v536
    %v594 = vpack.c.b16 %v593, %v592
    %v596 = vshrl.u32 %v594, 16
    %v598 = vrot.slane %v596, 7
    %v599 = vshll.u32 %v594, 16
    %v601 = vor.u32 %v598, %v599
    %v602 = vrot.slane %v598, 4
    %s605 = scalar_lea.vmem [#allocation2], 32
    %v606 = vld [vmem:[%s605] sm:$0xff]
    %v607 = vsel %vm564, %v601, %v606
    %608 = vst [vmem:[%s605] sm:$0xff] %v607
    %v609 = vld [vmem:[%s605 + $0x8] sm:$0x11]
    %v610 = vsel %vm574, %v602, %v609
    %611 = vst [vmem:[%s605 + $0x8] sm:$0x11] %v610
    %v612 = vld [vmem:[%s605] sm:$0x11]
    %v613 = vsel %vm574, 0, %v612
    %614 = vst [vmem:[%s605] sm:$0x11] %v613
    %v615 = vld [vmem:[%s590 + $0x8] sm:$0x11]
    %v616 = vsel %vm574, 0, %v615
    %617 = vst [vmem:[%s590 + $0x8] sm:$0x11] %v616
    %v618 = vld [vmem:[%s4] sm:$0xf]
    %v619 = vld [vmem:[#allocation2] sm:$0xff]
    %v620 = vld [vmem:[%s543] sm:$0xff]
    %v621 = vld [vmem:[#allocation2 + $0x8] sm:$0x11]
    %v623 = vunpack.c.l.b16 %v619
    %v624 = vunpack.c.h.b16 %v619
    %v625 = vpack.c.b16 %v623, %v623
    %v626 = vpack.c.b16 %v624, %v624
    %v628 = vunpack.c.l.b16 %v620
    %v629 = vunpack.c.h.b16 %v620
    %v630 = vpack.c.b16 %v628, %v628
    %v631 = vpack.c.b16 %v629, %v629
    %v633 = vunpack.c.l.b16 %v621
    %v634 = vunpack.c.h.b16 %v621
    %v635 = vpack.c.b16 %v633, %v623
    %v636 = vpack.c.b16 %v634, %v624
    %v638 = vshrl.u32 %v635, 16
    %v640 = vshll.u32 %v635, 16
    %v642 = vrot.slane %v640, 1
    %v643 = vor.u32 %v638, %v642
    %v645 = vshrl.u32 %v636, 16
    %v647 = vshll.u32 %v636, 16
    %v649 = vrot.slane %v647, 1
    %v650 = vor.u32 %v645, %v649
    %v651 = vld [vmem:[%s605] sm:$0xff]
    %v652 = vld [vmem:[%s590] sm:$0xff]
    %v653 = vld [vmem:[%s605 + $0x8] sm:$0x11]
    %v655 = vunpack.c.l.b16 %v651
    %v656 = vunpack.c.h.b16 %v651
    %v657 = vpack.c.b16 %v655, %v655
    %v658 = vpack.c.b16 %v656, %v656
    %v660 = vunpack.c.l.b16 %v652
    %v661 = vunpack.c.h.b16 %v652
    %v662 = vpack.c.b16 %v660, %v660
    %v663 = vpack.c.b16 %v661, %v661
    %v665 = vunpack.c.l.b16 %v653
    %v666 = vunpack.c.h.b16 %v653
    %v667 = vpack.c.b16 %v665, %v655
    %v668 = vpack.c.b16 %v666, %v656
    %v670 = vshrl.u32 %v667, 16
    %v672 = vshll.u32 %v667, 16
    %v674 = vrot.slane %v672, 1
    %v675 = vor.u32 %v670, %v674
    %v677 = vshrl.u32 %v668, 16
    %v679 = vshll.u32 %v668, 16
    %v681 = vrot.slane %v679, 1
    %v682 = vor.u32 %v677, %v681
    %v683 = vrot.slane %v657, 4
    %v684 = vrot.slane %v658, 4
    %v685 = vrot.slane %v662, 4
    %v686 = vrot.slane %v663, 4
    %v687 = vrot.slane %v675, 4
    %v688 = vrot.slane %v682, 4
    %vm689 = vcmask 1043456
    %v692 = vsel %vm689, %v625, %v683
    %v696 = vsel %vm689, %v626, %v684
    %v700 = vsel %vm689, %v630, %v685
    %v704 = vsel %vm689, %v631, %v686
    %v708 = vsel %vm689, %v643, %v687
    %v712 = vsel %vm689, %v650, %v688
    %v714 = vld [vmem:[#allocation5] sm:$0xff]
    %v715 = vld [vmem:[#allocation5 + $0x8] sm:$0xff]
    %v716 = vld [vmem:[#allocation5 + $0x10] sm:$0xff]
    %v717 = vld [vmem:[#allocation5 + $0x18] sm:$0xff]
    %v718 = vld [vmem:[#allocation5 + $0x20] sm:$0xff]
    %v719 = vld [vmem:[#allocation5 + $0x28] sm:$0xff]
    %v720 = vld [vmem:[#allocation5 + $0x30] sm:$0xff]
    %v721 = vld [vmem:[#allocation5 + $0x38] sm:$0xff]
    %v722 = vld [vmem:[#allocation5 + $0x40] sm:$0xff]
    %v723 = vld [vmem:[#allocation5 + $0x48] sm:$0xff]
    %v724 = vld [vmem:[#allocation5 + $0x50] sm:$0xff]
    %v725 = vld [vmem:[#allocation5 + $0x58] sm:$0xff]
    %v726 = vld [vmem:[#allocation5 + $0x60] sm:$0xff]
    %v727 = vld [vmem:[#allocation5 + $0x68] sm:$0xff]
    %v728 = vld [vmem:[#allocation5 + $0x70] sm:$0xff]
    %v729 = vld [vmem:[#allocation5 + $0x78] sm:$0xff]
    %v730 = vld [vmem:[#allocation5 + $0x80] sm:$0xff]
    %v731 = vld [vmem:[#allocation5 + $0x88] sm:$0xff]
    %v732 = vld [vmem:[#allocation5 + $0x90] sm:$0xff]
    %v733 = vld [vmem:[#allocation5 + $0x98] sm:$0xff]
    %v734 = vld [vmem:[#allocation5 + $0xa0] sm:$0xff]
    %v735 = vld [vmem:[#allocation5 + $0xa8] sm:$0xff]
    %v736 = vld [vmem:[#allocation5 + $0xb0] sm:$0xff]
    %v737 = vld [vmem:[#allocation5 + $0xb8] sm:$0xff]
    %v738 = vld [vmem:[#allocation5 + $0xc0] sm:$0xff]
    %v739 = vld [vmem:[#allocation5 + $0xc8] sm:$0xff]
    %v740 = vld [vmem:[#allocation5 + $0xd0] sm:$0xff]
    %v741 = vld [vmem:[#allocation5 + $0xd8] sm:$0xff]
    %v742 = vld [vmem:[#allocation5 + $0xe0] sm:$0xff]
    %v743 = vld [vmem:[#allocation5 + $0xe8] sm:$0xff]
    %v744 = vld [vmem:[#allocation5 + $0xf0] sm:$0xff]
    %v745 = vld [vmem:[#allocation5 + $0xf8] sm:$0xff]
    %v746 = vld [vmem:[#allocation5 + $0x100] sm:$0xff]
    %v747 = vld [vmem:[#allocation5 + $0x108] sm:$0xff]
    %v748 = vld [vmem:[#allocation5 + $0x110] sm:$0xff]
    %v749 = vld [vmem:[#allocation5 + $0x118] sm:$0xff]
    %v750 = vld [vmem:[#allocation5 + $0x120] sm:$0xff]
    %v751 = vld [vmem:[#allocation5 + $0x128] sm:$0xff]
    %v752 = vld [vmem:[#allocation5 + $0x130] sm:$0xff]
    %v753 = vld [vmem:[#allocation5 + $0x138] sm:$0xff]
    %v754 = vld [vmem:[#allocation5 + $0x140] sm:$0xff]
    %v755 = vld [vmem:[#allocation5 + $0x148] sm:$0xff]
    %v756 = vld [vmem:[#allocation5 + $0x150] sm:$0xff]
    %v757 = vld [vmem:[#allocation5 + $0x158] sm:$0xff]
    %v758 = vld [vmem:[#allocation5 + $0x160] sm:$0xff]
    %v759 = vld [vmem:[#allocation5 + $0x168] sm:$0xff]
    %v760 = vld [vmem:[#allocation5 + $0x170] sm:$0xff]
    %v761 = vld [vmem:[#allocation5 + $0x178] sm:$0xff]
    %v762 = vld [vmem:[#allocation5 + $0x180] sm:$0xff]
    %v763 = vld [vmem:[#allocation5 + $0x188] sm:$0xff]
    %v764 = vld [vmem:[#allocation5 + $0x190] sm:$0xff]
    %v765 = vld [vmem:[#allocation5 + $0x198] sm:$0xff]
    %v766 = vld [vmem:[#allocation5 + $0x1a0] sm:$0xff]
    %v767 = vld [vmem:[#allocation5 + $0x1a8] sm:$0xff]
    %v768 = vld [vmem:[#allocation5 + $0x1b0] sm:$0xff]
    %v769 = vld [vmem:[#allocation5 + $0x1b8] sm:$0xff]
    %v770 = vld [vmem:[#allocation5 + $0x1c0] sm:$0xff]
    %v771 = vld [vmem:[#allocation5 + $0x1c8] sm:$0xff]
    %v772 = vld [vmem:[#allocation5 + $0x1d0] sm:$0xff]
    %v773 = vld [vmem:[#allocation5 + $0x1d8] sm:$0xff]
    %v774 = vld [vmem:[#allocation5 + $0x1e0] sm:$0xff]
    %v775 = vld [vmem:[#allocation5 + $0x1e8] sm:$0xff]
    %v776 = vld [vmem:[#allocation5 + $0x1f0] sm:$0xff]
    %v777 = vld [vmem:[#allocation5 + $0x1f8] sm:$0xff]
    %v778 = vld [vmem:[#allocation5 + $0x200] sm:$0xff]
    %v779 = vld [vmem:[#allocation5 + $0x208] sm:$0xff]
    %v780 = vld [vmem:[#allocation5 + $0x210] sm:$0xff]
    %v781 = vld [vmem:[#allocation5 + $0x218] sm:$0xff]
    %v782 = vld [vmem:[#allocation5 + $0x220] sm:$0xff]
    %v783 = vld [vmem:[#allocation5 + $0x228] sm:$0xff]
    %v784 = vld [vmem:[#allocation5 + $0x230] sm:$0xff]
    %v785 = vld [vmem:[#allocation5 + $0x238] sm:$0xff]
    %v786 = vld [vmem:[#allocation5 + $0x240] sm:$0xff]
    %v787 = vld [vmem:[#allocation5 + $0x248] sm:$0xff]
    %v788 = vld [vmem:[#allocation5 + $0x250] sm:$0xff]
    %v789 = vld [vmem:[#allocation5 + $0x258] sm:$0xff]
    %v790 = vld [vmem:[#allocation5 + $0x260] sm:$0xff]
    %v791 = vld [vmem:[#allocation5 + $0x268] sm:$0xff]
    %v792 = vld [vmem:[#allocation5 + $0x270] sm:$0xff]
    %v793 = vld [vmem:[#allocation5 + $0x278] sm:$0xff]
    %v794 = vld [vmem:[#allocation5 + $0x280] sm:$0xff]
    %v795 = vld [vmem:[#allocation5 + $0x288] sm:$0xff]
    %v796 = vld [vmem:[#allocation5 + $0x290] sm:$0xff]
    %v797 = vld [vmem:[#allocation5 + $0x298] sm:$0xff]
    %v798 = vld [vmem:[#allocation5 + $0x2a0] sm:$0xff]
    %v799 = vld [vmem:[#allocation5 + $0x2a8] sm:$0xff]
    %v800 = vld [vmem:[#allocation5 + $0x2b0] sm:$0xff]
    %v801 = vld [vmem:[#allocation5 + $0x2b8] sm:$0xff]
    %v802 = vld [vmem:[#allocation5 + $0x2c0] sm:$0xff]
    %v803 = vld [vmem:[#allocation5 + $0x2c8] sm:$0xff]
    %v804 = vld [vmem:[#allocation5 + $0x2d0] sm:$0xff]
    %v805 = vld [vmem:[#allocation5 + $0x2d8] sm:$0xff]
    %v806 = vld [vmem:[#allocation5 + $0x2e0] sm:$0xff]
    %v807 = vld [vmem:[#allocation5 + $0x2e8] sm:$0xff]
    %v808 = vld [vmem:[#allocation5 + $0x2f0] sm:$0xff]
    %v809 = vld [vmem:[#allocation5 + $0x2f8] sm:$0xff]
    %v810 = vld [vmem:[#allocation5 + $0x300] sm:$0xff]
    %v811 = vld [vmem:[#allocation5 + $0x308] sm:$0xff]
    %v812 = vld [vmem:[#allocation5 + $0x310] sm:$0xff]
    %v813 = vld [vmem:[#allocation5 + $0x318] sm:$0xff]
    %v814 = vld [vmem:[#allocation5 + $0x320] sm:$0xff]
    %v815 = vld [vmem:[#allocation5 + $0x328] sm:$0xff]
    %v816 = vld [vmem:[#allocation5 + $0x330] sm:$0xff]
    %v817 = vld [vmem:[#allocation5 + $0x338] sm:$0xff]
    %v818 = vld [vmem:[#allocation5 + $0x340] sm:$0xff]
    %v819 = vld [vmem:[#allocation5 + $0x348] sm:$0xff]
    %v820 = vld [vmem:[#allocation5 + $0x350] sm:$0xff]
    %v821 = vld [vmem:[#allocation5 + $0x358] sm:$0xff]
    %v822 = vld [vmem:[#allocation5 + $0x360] sm:$0xff]
    %v823 = vld [vmem:[#allocation5 + $0x368] sm:$0xff]
    %v824 = vld [vmem:[#allocation5 + $0x370] sm:$0xff]
    %v825 = vld [vmem:[#allocation5 + $0x378] sm:$0xff]
    %v826 = vld [vmem:[#allocation5 + $0x380] sm:$0xff]
    %v827 = vld [vmem:[#allocation5 + $0x388] sm:$0xff]
    %v828 = vld [vmem:[#allocation5 + $0x390] sm:$0xff]
    %v829 = vld [vmem:[#allocation5 + $0x398] sm:$0xff]
    %v830 = vld [vmem:[#allocation5 + $0x3a0] sm:$0xff]
    %v831 = vld [vmem:[#allocation5 + $0x3a8] sm:$0xff]
    %v832 = vld [vmem:[#allocation5 + $0x3b0] sm:$0xff]
    %v833 = vld [vmem:[#allocation5 + $0x3b8] sm:$0xff]
    %v834 = vld [vmem:[#allocation5 + $0x3c0] sm:$0xff]
    %v835 = vld [vmem:[#allocation5 + $0x3c8] sm:$0xff]
    %v836 = vld [vmem:[#allocation5 + $0x3d0] sm:$0xff]
    %v837 = vld [vmem:[#allocation5 + $0x3d8] sm:$0xff]
    %v838 = vld [vmem:[#allocation5 + $0x3e0] sm:$0xff]
    %v839 = vld [vmem:[#allocation5 + $0x3e8] sm:$0xff]
    %v840 = vld [vmem:[#allocation5 + $0x3f0] sm:$0xff]
    %v841 = vld [vmem:[#allocation5 + $0x3f8] sm:$0xff]
    %v842 = vld [vmem:[#allocation5 + $0x400] sm:$0xff]
    %v843 = vld [vmem:[#allocation5 + $0x408] sm:$0xff]
    %v844 = vld [vmem:[#allocation5 + $0x410] sm:$0xff]
    %v845 = vld [vmem:[#allocation5 + $0x418] sm:$0xff]
    %v846 = vld [vmem:[#allocation5 + $0x420] sm:$0xff]
    %v847 = vld [vmem:[#allocation5 + $0x428] sm:$0xff]
    %v848 = vld [vmem:[#allocation5 + $0x430] sm:$0xff]
    %v849 = vld [vmem:[#allocation5 + $0x438] sm:$0xff]
    %v850 = vld [vmem:[#allocation5 + $0x440] sm:$0xff]
    %v851 = vld [vmem:[#allocation5 + $0x448] sm:$0xff]
    %v852 = vld [vmem:[#allocation5 + $0x450] sm:$0xff]
    %v853 = vld [vmem:[#allocation5 + $0x458] sm:$0xff]
    %v854 = vld [vmem:[#allocation5 + $0x460] sm:$0xff]
    %v855 = vld [vmem:[#allocation5 + $0x468] sm:$0xff]
    %v856 = vld [vmem:[#allocation5 + $0x470] sm:$0xff]
    %v857 = vld [vmem:[#allocation5 + $0x478] sm:$0xff]
    %v858 = vld [vmem:[#allocation5 + $0x480] sm:$0xff]
    %v859 = vld [vmem:[#allocation5 + $0x488] sm:$0xff]
    %v860 = vld [vmem:[#allocation5 + $0x490] sm:$0xff]
    %v861 = vld [vmem:[#allocation5 + $0x498] sm:$0xff]
    %v862 = vld [vmem:[#allocation5 + $0x4a0] sm:$0xff]
    %v863 = vld [vmem:[#allocation5 + $0x4a8] sm:$0xff]
    %v864 = vld [vmem:[#allocation5 + $0x4b0] sm:$0xff]
    %v865 = vld [vmem:[#allocation5 + $0x4b8] sm:$0xff]
    %v866 = vld [vmem:[#allocation5 + $0x4c0] sm:$0xff]
    %v867 = vld [vmem:[#allocation5 + $0x4c8] sm:$0xff]
    %v868 = vld [vmem:[#allocation5 + $0x4d0] sm:$0xff]
    %v869 = vld [vmem:[#allocation5 + $0x4d8] sm:$0xff]
    %v870 = vld [vmem:[#allocation5 + $0x4e0] sm:$0xff]
    %v871 = vld [vmem:[#allocation5 + $0x4e8] sm:$0xff]
    %v872 = vld [vmem:[#allocation5 + $0x4f0] sm:$0xff]
    %v873 = vld [vmem:[#allocation5 + $0x4f8] sm:$0xff]
    %v874 = vld [vmem:[#allocation5 + $0x500] sm:$0xff]
    %v875 = vld [vmem:[#allocation5 + $0x508] sm:$0xff]
    %v876 = vld [vmem:[#allocation5 + $0x510] sm:$0xff]
    %v877 = vld [vmem:[#allocation5 + $0x518] sm:$0xff]
    %v878 = vld [vmem:[#allocation5 + $0x520] sm:$0xff]
    %v879 = vld [vmem:[#allocation5 + $0x528] sm:$0xff]
    %v880 = vld [vmem:[#allocation5 + $0x530] sm:$0xff]
    %v881 = vld [vmem:[#allocation5 + $0x538] sm:$0xff]
    %v882 = vld [vmem:[#allocation5 + $0x540] sm:$0xff]
    %v883 = vld [vmem:[#allocation5 + $0x548] sm:$0xff]
    %v884 = vld [vmem:[#allocation5 + $0x550] sm:$0xff]
    %v885 = vld [vmem:[#allocation5 + $0x558] sm:$0xff]
    %v886 = vld [vmem:[#allocation5 + $0x560] sm:$0xff]
    %v887 = vld [vmem:[#allocation5 + $0x568] sm:$0xff]
    %v888 = vld [vmem:[#allocation5 + $0x570] sm:$0xff]
    %v889 = vld [vmem:[#allocation5 + $0x578] sm:$0xff]
    %v890 = vld [vmem:[#allocation5 + $0x580] sm:$0xff]
    %v891 = vld [vmem:[#allocation5 + $0x588] sm:$0xff]
    %v892 = vld [vmem:[#allocation5 + $0x590] sm:$0xff]
    %v893 = vld [vmem:[#allocation5 + $0x598] sm:$0xff]
    %v894 = vld [vmem:[#allocation5 + $0x5a0] sm:$0xff]
    %v895 = vld [vmem:[#allocation5 + $0x5a8] sm:$0xff]
    %v896 = vld [vmem:[#allocation5 + $0x5b0] sm:$0xff]
    %v897 = vld [vmem:[#allocation5 + $0x5b8] sm:$0xff]
    %v898 = vld [vmem:[#allocation5 + $0x5c0] sm:$0xff]
    %v899 = vld [vmem:[#allocation5 + $0x5c8] sm:$0xff]
    %v900 = vld [vmem:[#allocation5 + $0x5d0] sm:$0xff]
    %v901 = vld [vmem:[#allocation5 + $0x5d8] sm:$0xff]
    %v902 = vld [vmem:[#allocation5 + $0x5e0] sm:$0xff]
    %v903 = vld [vmem:[#allocation5 + $0x5e8] sm:$0xff]
    %v904 = vld [vmem:[#allocation5 + $0x5f0] sm:$0xff]
    %v905 = vld [vmem:[#allocation5 + $0x5f8] sm:$0xff]
    %v907 = vlaneseq
    %v908 = vshrl.u32 %v907, 7
    %v909 = vsub.s32 0, %v908
    %v910 = vrot.slane %v618, %v909
    %v911 = vlaneseq
    %v912 = vshrl.u32 %v911, 7
    %v913 = vsub.s32 1, %v912
    %v914 = vrot.slane %v618, %v913
    %v915 = vlaneseq
    %v916 = vshrl.u32 %v915, 7
    %v917 = vsub.s32 2, %v916
    %v918 = vrot.slane %v618, %v917
    %v919 = vlaneseq
    %v920 = vshrl.u32 %v919, 7
    %v921 = vsub.s32 3, %v920
    %v922 = vrot.slane %v618, %v921
    %v1119 = vunpack.c.l.b16 %v714
    %v1120 = vunpack.c.h.b16 %v714
    %v1121 = vunpack.c.l.b16 %v715
    %v1122 = vunpack.c.h.b16 %v715
    %v1123 = vunpack.c.l.b16 %v716
    %v1124 = vunpack.c.h.b16 %v716
    %v1125 = vunpack.c.l.b16 %v717
    %v1126 = vunpack.c.h.b16 %v717
    %v1127 = vunpack.c.l.b16 %v718
    %v1128 = vunpack.c.h.b16 %v718
    %v1129 = vunpack.c.l.b16 %v719
    %v1130 = vunpack.c.h.b16 %v719
    %v1131 = vunpack.c.l.b16 %v720
    %v1132 = vunpack.c.h.b16 %v720
    %v1133 = vunpack.c.l.b16 %v721
    %v1134 = vunpack.c.h.b16 %v721
    %v1135 = vunpack.c.l.b16 %v722
    %v1136 = vunpack.c.h.b16 %v722
    %v1137 = vunpack.c.l.b16 %v723
    %v1138 = vunpack.c.h.b16 %v723
    %v1139 = vunpack.c.l.b16 %v724
    %v1140 = vunpack.c.h.b16 %v724
    %v1141 = vunpack.c.l.b16 %v725
    %v1142 = vunpack.c.h.b16 %v725
    %v1143 = vunpack.c.l.b16 %v726
    %v1144 = vunpack.c.h.b16 %v726
    %v1145 = vunpack.c.l.b16 %v727
    %v1146 = vunpack.c.h.b16 %v727
    %v1147 = vunpack.c.l.b16 %v728
    %v1148 = vunpack.c.h.b16 %v728
    %v1149 = vunpack.c.l.b16 %v729
    %v1150 = vunpack.c.h.b16 %v729
    %v1151 = vunpack.c.l.b16 %v730
    %v1152 = vunpack.c.h.b16 %v730
    %v1153 = vunpack.c.l.b16 %v731
    %v1154 = vunpack.c.h.b16 %v731
    %v1155 = vunpack.c.l.b16 %v732
    %v1156 = vunpack.c.h.b16 %v732
    %v1157 = vunpack.c.l.b16 %v733
    %v1158 = vunpack.c.h.b16 %v733
    %v1159 = vunpack.c.l.b16 %v734
    %v1160 = vunpack.c.h.b16 %v734
    %v1161 = vunpack.c.l.b16 %v735
    %v1162 = vunpack.c.h.b16 %v735
    %v1163 = vunpack.c.l.b16 %v736
    %v1164 = vunpack.c.h.b16 %v736
    %v1165 = vunpack.c.l.b16 %v737
    %v1166 = vunpack.c.h.b16 %v737
    %v1167 = vunpack.c.l.b16 %v738
    %v1168 = vunpack.c.h.b16 %v738
    %v1169 = vunpack.c.l.b16 %v739
    %v1170 = vunpack.c.h.b16 %v739
    %v1171 = vunpack.c.l.b16 %v740
    %v1172 = vunpack.c.h.b16 %v740
    %v1173 = vunpack.c.l.b16 %v741
    %v1174 = vunpack.c.h.b16 %v741
    %v1175 = vunpack.c.l.b16 %v742
    %v1176 = vunpack.c.h.b16 %v742
    %v1177 = vunpack.c.l.b16 %v743
    %v1178 = vunpack.c.h.b16 %v743
    %v1179 = vunpack.c.l.b16 %v744
    %v1180 = vunpack.c.h.b16 %v744
    %v1181 = vunpack.c.l.b16 %v745
    %v1182 = vunpack.c.h.b16 %v745
    %v1183 = vunpack.c.l.b16 %v746
    %v1184 = vunpack.c.h.b16 %v746
    %v1185 = vunpack.c.l.b16 %v747
    %v1186 = vunpack.c.h.b16 %v747
    %v1187 = vunpack.c.l.b16 %v748
    %v1188 = vunpack.c.h.b16 %v748
    %v1189 = vunpack.c.l.b16 %v749
    %v1190 = vunpack.c.h.b16 %v749
    %v1191 = vunpack.c.l.b16 %v750
    %v1192 = vunpack.c.h.b16 %v750
    %v1193 = vunpack.c.l.b16 %v751
    %v1194 = vunpack.c.h.b16 %v751
    %v1195 = vunpack.c.l.b16 %v752
    %v1196 = vunpack.c.h.b16 %v752
    %v1197 = vunpack.c.l.b16 %v753
    %v1198 = vunpack.c.h.b16 %v753
    %v1199 = vunpack.c.l.b16 %v754
    %v1200 = vunpack.c.h.b16 %v754
    %v1201 = vunpack.c.l.b16 %v755
    %v1202 = vunpack.c.h.b16 %v755
    %v1203 = vunpack.c.l.b16 %v756
    %v1204 = vunpack.c.h.b16 %v756
    %v1205 = vunpack.c.l.b16 %v757
    %v1206 = vunpack.c.h.b16 %v757
    %v1207 = vunpack.c.l.b16 %v758
    %v1208 = vunpack.c.h.b16 %v758
    %v1209 = vunpack.c.l.b16 %v759
    %v1210 = vunpack.c.h.b16 %v759
    %v1211 = vunpack.c.l.b16 %v760
    %v1212 = vunpack.c.h.b16 %v760
    %v1213 = vunpack.c.l.b16 %v761
    %v1214 = vunpack.c.h.b16 %v761
    %v1215 = vunpack.c.l.b16 %v762
    %v1216 = vunpack.c.h.b16 %v762
    %v1217 = vunpack.c.l.b16 %v763
    %v1218 = vunpack.c.h.b16 %v763
    %v1219 = vunpack.c.l.b16 %v764
    %v1220 = vunpack.c.h.b16 %v764
    %v1221 = vunpack.c.l.b16 %v765
    %v1222 = vunpack.c.h.b16 %v765
    %v1223 = vunpack.c.l.b16 %v766
    %v1224 = vunpack.c.h.b16 %v766
    %v1225 = vunpack.c.l.b16 %v767
    %v1226 = vunpack.c.h.b16 %v767
    %v1227 = vunpack.c.l.b16 %v768
    %v1228 = vunpack.c.h.b16 %v768
    %v1229 = vunpack.c.l.b16 %v769
    %v1230 = vunpack.c.h.b16 %v769
    %v1231 = vunpack.c.l.b16 %v770
    %v1232 = vunpack.c.h.b16 %v770
    %v1233 = vunpack.c.l.b16 %v771
    %v1234 = vunpack.c.h.b16 %v771
    %v1235 = vunpack.c.l.b16 %v772
    %v1236 = vunpack.c.h.b16 %v772
    %v1237 = vunpack.c.l.b16 %v773
    %v1238 = vunpack.c.h.b16 %v773
    %v1239 = vunpack.c.l.b16 %v774
    %v1240 = vunpack.c.h.b16 %v774
    %v1241 = vunpack.c.l.b16 %v775
    %v1242 = vunpack.c.h.b16 %v775
    %v1243 = vunpack.c.l.b16 %v776
    %v1244 = vunpack.c.h.b16 %v776
    %v1245 = vunpack.c.l.b16 %v777
    %v1246 = vunpack.c.h.b16 %v777
    %v1247 = vunpack.c.l.b16 %v778
    %v1248 = vunpack.c.h.b16 %v778
    %v1249 = vunpack.c.l.b16 %v779
    %v1250 = vunpack.c.h.b16 %v779
    %v1251 = vunpack.c.l.b16 %v780
    %v1252 = vunpack.c.h.b16 %v780
    %v1253 = vunpack.c.l.b16 %v781
    %v1254 = vunpack.c.h.b16 %v781
    %v1255 = vunpack.c.l.b16 %v782
    %v1256 = vunpack.c.h.b16 %v782
    %v1257 = vunpack.c.l.b16 %v783
    %v1258 = vunpack.c.h.b16 %v783
    %v1259 = vunpack.c.l.b16 %v784
    %v1260 = vunpack.c.h.b16 %v784
    %v1261 = vunpack.c.l.b16 %v785
    %v1262 = vunpack.c.h.b16 %v785
    %v1263 = vunpack.c.l.b16 %v786
    %v1264 = vunpack.c.h.b16 %v786
    %v1265 = vunpack.c.l.b16 %v787
    %v1266 = vunpack.c.h.b16 %v787
    %v1267 = vunpack.c.l.b16 %v788
    %v1268 = vunpack.c.h.b16 %v788
    %v1269 = vunpack.c.l.b16 %v789
    %v1270 = vunpack.c.h.b16 %v789
    %v1271 = vunpack.c.l.b16 %v790
    %v1272 = vunpack.c.h.b16 %v790
    %v1273 = vunpack.c.l.b16 %v791
    %v1274 = vunpack.c.h.b16 %v791
    %v1275 = vunpack.c.l.b16 %v792
    %v1276 = vunpack.c.h.b16 %v792
    %v1277 = vunpack.c.l.b16 %v793
    %v1278 = vunpack.c.h.b16 %v793
    %v1279 = vunpack.c.l.b16 %v794
    %v1280 = vunpack.c.h.b16 %v794
    %v1281 = vunpack.c.l.b16 %v795
    %v1282 = vunpack.c.h.b16 %v795
    %v1283 = vunpack.c.l.b16 %v796
    %v1284 = vunpack.c.h.b16 %v796
    %v1285 = vunpack.c.l.b16 %v797
    %v1286 = vunpack.c.h.b16 %v797
    %v1287 = vunpack.c.l.b16 %v798
    %v1288 = vunpack.c.h.b16 %v798
    %v1289 = vunpack.c.l.b16 %v799
    %v1290 = vunpack.c.h.b16 %v799
    %v1291 = vunpack.c.l.b16 %v800
    %v1292 = vunpack.c.h.b16 %v800
    %v1293 = vunpack.c.l.b16 %v801
    %v1294 = vunpack.c.h.b16 %v801
    %v1295 = vunpack.c.l.b16 %v802
    %v1296 = vunpack.c.h.b16 %v802
    %v1297 = vunpack.c.l.b16 %v803
    %v1298 = vunpack.c.h.b16 %v803
    %v1299 = vunpack.c.l.b16 %v804
    %v1300 = vunpack.c.h.b16 %v804
    %v1301 = vunpack.c.l.b16 %v805
    %v1302 = vunpack.c.h.b16 %v805
    %v1303 = vunpack.c.l.b16 %v806
    %v1304 = vunpack.c.h.b16 %v806
    %v1305 = vunpack.c.l.b16 %v807
    %v1306 = vunpack.c.h.b16 %v807
    %v1307 = vunpack.c.l.b16 %v808
    %v1308 = vunpack.c.h.b16 %v808
    %v1309 = vunpack.c.l.b16 %v809
    %v1310 = vunpack.c.h.b16 %v809
    %v1311 = vunpack.c.l.b16 %v810
    %v1312 = vunpack.c.h.b16 %v810
    %v1313 = vunpack.c.l.b16 %v811
    %v1314 = vunpack.c.h.b16 %v811
    %v1315 = vunpack.c.l.b16 %v812
    %v1316 = vunpack.c.h.b16 %v812
    %v1317 = vunpack.c.l.b16 %v813
    %v1318 = vunpack.c.h.b16 %v813
    %v1319 = vunpack.c.l.b16 %v814
    %v1320 = vunpack.c.h.b16 %v814
    %v1321 = vunpack.c.l.b16 %v815
    %v1322 = vunpack.c.h.b16 %v815
    %v1323 = vunpack.c.l.b16 %v816
    %v1324 = vunpack.c.h.b16 %v816
    %v1325 = vunpack.c.l.b16 %v817
    %v1326 = vunpack.c.h.b16 %v817
    %v1327 = vunpack.c.l.b16 %v818
    %v1328 = vunpack.c.h.b16 %v818
    %v1329 = vunpack.c.l.b16 %v819
    %v1330 = vunpack.c.h.b16 %v819
    %v1331 = vunpack.c.l.b16 %v820
    %v1332 = vunpack.c.h.b16 %v820
    %v1333 = vunpack.c.l.b16 %v821
    %v1334 = vunpack.c.h.b16 %v821
    %v1335 = vunpack.c.l.b16 %v822
    %v1336 = vunpack.c.h.b16 %v822
    %v1337 = vunpack.c.l.b16 %v823
    %v1338 = vunpack.c.h.b16 %v823
    %v1339 = vunpack.c.l.b16 %v824
    %v1340 = vunpack.c.h.b16 %v824
    %v1341 = vunpack.c.l.b16 %v825
    %v1342 = vunpack.c.h.b16 %v825
    %v1343 = vunpack.c.l.b16 %v826
    %v1344 = vunpack.c.h.b16 %v826
    %v1345 = vunpack.c.l.b16 %v827
    %v1346 = vunpack.c.h.b16 %v827
    %v1347 = vunpack.c.l.b16 %v828
    %v1348 = vunpack.c.h.b16 %v828
    %v1349 = vunpack.c.l.b16 %v829
    %v1350 = vunpack.c.h.b16 %v829
    %v1351 = vunpack.c.l.b16 %v830
    %v1352 = vunpack.c.h.b16 %v830
    %v1353 = vunpack.c.l.b16 %v831
    %v1354 = vunpack.c.h.b16 %v831
    %v1355 = vunpack.c.l.b16 %v832
    %v1356 = vunpack.c.h.b16 %v832
    %v1357 = vunpack.c.l.b16 %v833
    %v1358 = vunpack.c.h.b16 %v833
    %v1359 = vunpack.c.l.b16 %v834
    %v1360 = vunpack.c.h.b16 %v834
    %v1361 = vunpack.c.l.b16 %v835
    %v1362 = vunpack.c.h.b16 %v835
    %v1363 = vunpack.c.l.b16 %v836
    %v1364 = vunpack.c.h.b16 %v836
    %v1365 = vunpack.c.l.b16 %v837
    %v1366 = vunpack.c.h.b16 %v837
    %v1367 = vunpack.c.l.b16 %v838
    %v1368 = vunpack.c.h.b16 %v838
    %v1369 = vunpack.c.l.b16 %v839
    %v1370 = vunpack.c.h.b16 %v839
    %v1371 = vunpack.c.l.b16 %v840
    %v1372 = vunpack.c.h.b16 %v840
    %v1373 = vunpack.c.l.b16 %v841
    %v1374 = vunpack.c.h.b16 %v841
    %v1375 = vunpack.c.l.b16 %v842
    %v1376 = vunpack.c.h.b16 %v842
    %v1377 = vunpack.c.l.b16 %v843
    %v1378 = vunpack.c.h.b16 %v843
    %v1379 = vunpack.c.l.b16 %v844
    %v1380 = vunpack.c.h.b16 %v844
    %v1381 = vunpack.c.l.b16 %v845
    %v1382 = vunpack.c.h.b16 %v845
    %v1383 = vunpack.c.l.b16 %v846
    %v1384 = vunpack.c.h.b16 %v846
    %v1385 = vunpack.c.l.b16 %v847
    %v1386 = vunpack.c.h.b16 %v847
    %v1387 = vunpack.c.l.b16 %v848
    %v1388 = vunpack.c.h.b16 %v848
    %v1389 = vunpack.c.l.b16 %v849
    %v1390 = vunpack.c.h.b16 %v849
    %v1391 = vunpack.c.l.b16 %v850
    %v1392 = vunpack.c.h.b16 %v850
    %v1393 = vunpack.c.l.b16 %v851
    %v1394 = vunpack.c.h.b16 %v851
    %v1395 = vunpack.c.l.b16 %v852
    %v1396 = vunpack.c.h.b16 %v852
    %v1397 = vunpack.c.l.b16 %v853
    %v1398 = vunpack.c.h.b16 %v853
    %v1399 = vunpack.c.l.b16 %v854
    %v1400 = vunpack.c.h.b16 %v854
    %v1401 = vunpack.c.l.b16 %v855
    %v1402 = vunpack.c.h.b16 %v855
    %v1403 = vunpack.c.l.b16 %v856
    %v1404 = vunpack.c.h.b16 %v856
    %v1405 = vunpack.c.l.b16 %v857
    %v1406 = vunpack.c.h.b16 %v857
    %v1407 = vunpack.c.l.b16 %v858
    %v1408 = vunpack.c.h.b16 %v858
    %v1409 = vunpack.c.l.b16 %v859
    %v1410 = vunpack.c.h.b16 %v859
    %v1411 = vunpack.c.l.b16 %v860
    %v1412 = vunpack.c.h.b16 %v860
    %v1413 = vunpack.c.l.b16 %v861
    %v1414 = vunpack.c.h.b16 %v861
    %v1415 = vunpack.c.l.b16 %v862
    %v1416 = vunpack.c.h.b16 %v862
    %v1417 = vunpack.c.l.b16 %v863
    %v1418 = vunpack.c.h.b16 %v863
    %v1419 = vunpack.c.l.b16 %v864
    %v1420 = vunpack.c.h.b16 %v864
    %v1421 = vunpack.c.l.b16 %v865
    %v1422 = vunpack.c.h.b16 %v865
    %v1423 = vunpack.c.l.b16 %v866
    %v1424 = vunpack.c.h.b16 %v866
    %v1425 = vunpack.c.l.b16 %v867
    %v1426 = vunpack.c.h.b16 %v867
    %v1427 = vunpack.c.l.b16 %v868
    %v1428 = vunpack.c.h.b16 %v868
    %v1429 = vunpack.c.l.b16 %v869
    %v1430 = vunpack.c.h.b16 %v869
    %v1431 = vunpack.c.l.b16 %v870
    %v1432 = vunpack.c.h.b16 %v870
    %v1433 = vunpack.c.l.b16 %v871
    %v1434 = vunpack.c.h.b16 %v871
    %v1435 = vunpack.c.l.b16 %v872
    %v1436 = vunpack.c.h.b16 %v872
    %v1437 = vunpack.c.l.b16 %v873
    %v1438 = vunpack.c.h.b16 %v873
    %v1439 = vunpack.c.l.b16 %v874
    %v1440 = vunpack.c.h.b16 %v874
    %v1441 = vunpack.c.l.b16 %v875
    %v1442 = vunpack.c.h.b16 %v875
    %v1443 = vunpack.c.l.b16 %v876
    %v1444 = vunpack.c.h.b16 %v876
    %v1445 = vunpack.c.l.b16 %v877
    %v1446 = vunpack.c.h.b16 %v877
    %v1447 = vunpack.c.l.b16 %v878
    %v1448 = vunpack.c.h.b16 %v878
    %v1449 = vunpack.c.l.b16 %v879
    %v1450 = vunpack.c.h.b16 %v879
    %v1451 = vunpack.c.l.b16 %v880
    %v1452 = vunpack.c.h.b16 %v880
    %v1453 = vunpack.c.l.b16 %v881
    %v1454 = vunpack.c.h.b16 %v881
    %v1455 = vunpack.c.l.b16 %v882
    %v1456 = vunpack.c.h.b16 %v882
    %v1457 = vunpack.c.l.b16 %v883
    %v1458 = vunpack.c.h.b16 %v883
    %v1459 = vunpack.c.l.b16 %v884
    %v1460 = vunpack.c.h.b16 %v884
    %v1461 = vunpack.c.l.b16 %v885
    %v1462 = vunpack.c.h.b16 %v885
    %v1463 = vunpack.c.l.b16 %v886
    %v1464 = vunpack.c.h.b16 %v886
    %v1465 = vunpack.c.l.b16 %v887
    %v1466 = vunpack.c.h.b16 %v887
    %v1467 = vunpack.c.l.b16 %v888
    %v1468 = vunpack.c.h.b16 %v888
    %v1469 = vunpack.c.l.b16 %v889
    %v1470 = vunpack.c.h.b16 %v889
    %v1471 = vunpack.c.l.b16 %v890
    %v1472 = vunpack.c.h.b16 %v890
    %v1473 = vunpack.c.l.b16 %v891
    %v1474 = vunpack.c.h.b16 %v891
    %v1475 = vunpack.c.l.b16 %v892
    %v1476 = vunpack.c.h.b16 %v892
    %v1477 = vunpack.c.l.b16 %v893
    %v1478 = vunpack.c.h.b16 %v893
    %v1479 = vunpack.c.l.b16 %v894
    %v1480 = vunpack.c.h.b16 %v894
    %v1481 = vunpack.c.l.b16 %v895
    %v1482 = vunpack.c.h.b16 %v895
    %v1483 = vunpack.c.l.b16 %v896
    %v1484 = vunpack.c.h.b16 %v896
    %v1485 = vunpack.c.l.b16 %v897
    %v1486 = vunpack.c.h.b16 %v897
    %v1487 = vunpack.c.l.b16 %v898
    %v1488 = vunpack.c.h.b16 %v898
    %v1489 = vunpack.c.l.b16 %v899
    %v1490 = vunpack.c.h.b16 %v899
    %v1491 = vunpack.c.l.b16 %v900
    %v1492 = vunpack.c.h.b16 %v900
    %v1493 = vunpack.c.l.b16 %v901
    %v1494 = vunpack.c.h.b16 %v901
    %v1495 = vunpack.c.l.b16 %v902
    %v1496 = vunpack.c.h.b16 %v902
    %v1497 = vunpack.c.l.b16 %v903
    %v1498 = vunpack.c.h.b16 %v903
    %v1499 = vunpack.c.l.b16 %v904
    %v1500 = vunpack.c.h.b16 %v904
    %v1501 = vunpack.c.l.b16 %v905
    %v1502 = vunpack.c.h.b16 %v905
    %v1503 = vpack.c.b16 %v1123, %v1119
    %v1504 = vpack.c.b16 %v1124, %v1120
    %v1505 = vpack.c.b16 %v1125, %v1121
    %v1506 = vpack.c.b16 %v1126, %v1122
    %v1507 = vpack.c.b16 %v1131, %v1127
    %v1508 = vpack.c.b16 %v1132, %v1128
    %v1509 = vpack.c.b16 %v1133, %v1129
    %v1510 = vpack.c.b16 %v1134, %v1130
    %v1511 = vpack.c.b16 %v1139, %v1135
    %v1512 = vpack.c.b16 %v1140, %v1136
    %v1513 = vpack.c.b16 %v1141, %v1137
    %v1514 = vpack.c.b16 %v1142, %v1138
    %v1515 = vpack.c.b16 %v1147, %v1143
    %v1516 = vpack.c.b16 %v1148, %v1144
    %v1517 = vpack.c.b16 %v1149, %v1145
    %v1518 = vpack.c.b16 %v1150, %v1146
    %v1519 = vpack.c.b16 %v1155, %v1151
    %v1520 = vpack.c.b16 %v1156, %v1152
    %v1521 = vpack.c.b16 %v1157, %v1153
    %v1522 = vpack.c.b16 %v1158, %v1154
    %v1523 = vpack.c.b16 %v1163, %v1159
    %v1524 = vpack.c.b16 %v1164, %v1160
    %v1525 = vpack.c.b16 %v1165, %v1161
    %v1526 = vpack.c.b16 %v1166, %v1162
    %v1527 = vpack.c.b16 %v1171, %v1167
    %v1528 = vpack.c.b16 %v1172, %v1168
    %v1529 = vpack.c.b16 %v1173, %v1169
    %v1530 = vpack.c.b16 %v1174, %v1170
    %v1531 = vpack.c.b16 %v1179, %v1175
    %v1532 = vpack.c.b16 %v1180, %v1176
    %v1533 = vpack.c.b16 %v1181, %v1177
    %v1534 = vpack.c.b16 %v1182, %v1178
    %v1535 = vpack.c.b16 %v1187, %v1183
    %v1536 = vpack.c.b16 %v1188, %v1184
    %v1537 = vpack.c.b16 %v1189, %v1185
    %v1538 = vpack.c.b16 %v1190, %v1186
    %v1539 = vpack.c.b16 %v1195, %v1191
    %v1540 = vpack.c.b16 %v1196, %v1192
    %v1541 = vpack.c.b16 %v1197, %v1193
    %v1542 = vpack.c.b16 %v1198, %v1194
    %v1543 = vpack.c.b16 %v1203, %v1199
    %v1544 = vpack.c.b16 %v1204, %v1200
    %v1545 = vpack.c.b16 %v1205, %v1201
    %v1546 = vpack.c.b16 %v1206, %v1202
    %v1547 = vpack.c.b16 %v1211, %v1207
    %v1548 = vpack.c.b16 %v1212, %v1208
    %v1549 = vpack.c.b16 %v1213, %v1209
    %v1550 = vpack.c.b16 %v1214, %v1210
    %v1551 = vpack.c.b16 %v1219, %v1215
    %v1552 = vpack.c.b16 %v1220, %v1216
    %v1553 = vpack.c.b16 %v1221, %v1217
    %v1554 = vpack.c.b16 %v1222, %v1218
    %v1555 = vpack.c.b16 %v1227, %v1223
    %v1556 = vpack.c.b16 %v1228, %v1224
    %v1557 = vpack.c.b16 %v1229, %v1225
    %v1558 = vpack.c.b16 %v1230, %v1226
    %v1559 = vpack.c.b16 %v1235, %v1231
    %v1560 = vpack.c.b16 %v1236, %v1232
    %v1561 = vpack.c.b16 %v1237, %v1233
    %v1562 = vpack.c.b16 %v1238, %v1234
    %v1563 = vpack.c.b16 %v1243, %v1239
    %v1564 = vpack.c.b16 %v1244, %v1240
    %v1565 = vpack.c.b16 %v1245, %v1241
    %v1566 = vpack.c.b16 %v1246, %v1242
    %v1567 = vpack.c.b16 %v1251, %v1247
    %v1568 = vpack.c.b16 %v1252, %v1248
    %v1569 = vpack.c.b16 %v1253, %v1249
    %v1570 = vpack.c.b16 %v1254, %v1250
    %v1571 = vpack.c.b16 %v1259, %v1255
    %v1572 = vpack.c.b16 %v1260, %v1256
    %v1573 = vpack.c.b16 %v1261, %v1257
    %v1574 = vpack.c.b16 %v1262, %v1258
    %v1575 = vpack.c.b16 %v1267, %v1263
    %v1576 = vpack.c.b16 %v1268, %v1264
    %v1577 = vpack.c.b16 %v1269, %v1265
    %v1578 = vpack.c.b16 %v1270, %v1266
    %v1579 = vpack.c.b16 %v1275, %v1271
    %v1580 = vpack.c.b16 %v1276, %v1272
    %v1581 = vpack.c.b16 %v1277, %v1273
    %v1582 = vpack.c.b16 %v1278, %v1274
    %v1583 = vpack.c.b16 %v1283, %v1279
    %v1584 = vpack.c.b16 %v1284, %v1280
    %v1585 = vpack.c.b16 %v1285, %v1281
    %v1586 = vpack.c.b16 %v1286, %v1282
    %v1587 = vpack.c.b16 %v1291, %v1287
    %v1588 = vpack.c.b16 %v1292, %v1288
    %v1589 = vpack.c.b16 %v1293, %v1289
    %v1590 = vpack.c.b16 %v1294, %v1290
    %v1591 = vpack.c.b16 %v1299, %v1295
    %v1592 = vpack.c.b16 %v1300, %v1296
    %v1593 = vpack.c.b16 %v1301, %v1297
    %v1594 = vpack.c.b16 %v1302, %v1298
    %v1595 = vpack.c.b16 %v1307, %v1303
    %v1596 = vpack.c.b16 %v1308, %v1304
    %v1597 = vpack.c.b16 %v1309, %v1305
    %v1598 = vpack.c.b16 %v1310, %v1306
    %v1599 = vpack.c.b16 %v1315, %v1311
    %v1600 = vpack.c.b16 %v1316, %v1312
    %v1601 = vpack.c.b16 %v1317, %v1313
    %v1602 = vpack.c.b16 %v1318, %v1314
    %v1603 = vpack.c.b16 %v1323, %v1319
    %v1604 = vpack.c.b16 %v1324, %v1320
    %v1605 = vpack.c.b16 %v1325, %v1321
    %v1606 = vpack.c.b16 %v1326, %v1322
    %v1607 = vpack.c.b16 %v1331, %v1327
    %v1608 = vpack.c.b16 %v1332, %v1328
    %v1609 = vpack.c.b16 %v1333, %v1329
    %v1610 = vpack.c.b16 %v1334, %v1330
    %v1611 = vpack.c.b16 %v1339, %v1335
    %v1612 = vpack.c.b16 %v1340, %v1336
    %v1613 = vpack.c.b16 %v1341, %v1337
    %v1614 = vpack.c.b16 %v1342, %v1338
    %v1615 = vpack.c.b16 %v1347, %v1343
    %v1616 = vpack.c.b16 %v1348, %v1344
    %v1617 = vpack.c.b16 %v1349, %v1345
    %v1618 = vpack.c.b16 %v1350, %v1346
    %v1619 = vpack.c.b16 %v1355, %v1351
    %v1620 = vpack.c.b16 %v1356, %v1352
    %v1621 = vpack.c.b16 %v1357, %v1353
    %v1622 = vpack.c.b16 %v1358, %v1354
    %v1623 = vpack.c.b16 %v1363, %v1359
    %v1624 = vpack.c.b16 %v1364, %v1360
    %v1625 = vpack.c.b16 %v1365, %v1361
    %v1626 = vpack.c.b16 %v1366, %v1362
    %v1627 = vpack.c.b16 %v1371, %v1367
    %v1628 = vpack.c.b16 %v1372, %v1368
    %v1629 = vpack.c.b16 %v1373, %v1369
    %v1630 = vpack.c.b16 %v1374, %v1370
    %v1631 = vpack.c.b16 %v1379, %v1375
    %v1632 = vpack.c.b16 %v1380, %v1376
    %v1633 = vpack.c.b16 %v1381, %v1377
    %v1634 = vpack.c.b16 %v1382, %v1378
    %v1635 = vpack.c.b16 %v1387, %v1383
    %v1636 = vpack.c.b16 %v1388, %v1384
    %v1637 = vpack.c.b16 %v1389, %v1385
    %v1638 = vpack.c.b16 %v1390, %v1386
    %v1639 = vpack.c.b16 %v1395, %v1391
    %v1640 = vpack.c.b16 %v1396, %v1392
    %v1641 = vpack.c.b16 %v1397, %v1393
    %v1642 = vpack.c.b16 %v1398, %v1394
    %v1643 = vpack.c.b16 %v1403, %v1399
    %v1644 = vpack.c.b16 %v1404, %v1400
    %v1645 = vpack.c.b16 %v1405, %v1401
    %v1646 = vpack.c.b16 %v1406, %v1402
    %v1647 = vpack.c.b16 %v1411, %v1407
    %v1648 = vpack.c.b16 %v1412, %v1408
    %v1649 = vpack.c.b16 %v1413, %v1409
    %v1650 = vpack.c.b16 %v1414, %v1410
    %v1651 = vpack.c.b16 %v1419, %v1415
    %v1652 = vpack.c.b16 %v1420, %v1416
    %v1653 = vpack.c.b16 %v1421, %v1417
    %v1654 = vpack.c.b16 %v1422, %v1418
    %v1655 = vpack.c.b16 %v1427, %v1423
    %v1656 = vpack.c.b16 %v1428, %v1424
    %v1657 = vpack.c.b16 %v1429, %v1425
    %v1658 = vpack.c.b16 %v1430, %v1426
    %v1659 = vpack.c.b16 %v1435, %v1431
    %v1660 = vpack.c.b16 %v1436, %v1432
    %v1661 = vpack.c.b16 %v1437, %v1433
    %v1662 = vpack.c.b16 %v1438, %v1434
    %v1663 = vpack.c.b16 %v1443, %v1439
    %v1664 = vpack.c.b16 %v1444, %v1440
    %v1665 = vpack.c.b16 %v1445, %v1441
    %v1666 = vpack.c.b16 %v1446, %v1442
    %v1667 = vpack.c.b16 %v1451, %v1447
    %v1668 = vpack.c.b16 %v1452, %v1448
    %v1669 = vpack.c.b16 %v1453, %v1449
    %v1670 = vpack.c.b16 %v1454, %v1450
    %v1671 = vpack.c.b16 %v1459, %v1455
    %v1672 = vpack.c.b16 %v1460, %v1456
    %v1673 = vpack.c.b16 %v1461, %v1457
    %v1674 = vpack.c.b16 %v1462, %v1458
    %v1675 = vpack.c.b16 %v1467, %v1463
    %v1676 = vpack.c.b16 %v1468, %v1464
    %v1677 = vpack.c.b16 %v1469, %v1465
    %v1678 = vpack.c.b16 %v1470, %v1466
    %v1679 = vpack.c.b16 %v1475, %v1471
    %v1680 = vpack.c.b16 %v1476, %v1472
    %v1681 = vpack.c.b16 %v1477, %v1473
    %v1682 = vpack.c.b16 %v1478, %v1474
    %v1683 = vpack.c.b16 %v1483, %v1479
    %v1684 = vpack.c.b16 %v1484, %v1480
    %v1685 = vpack.c.b16 %v1485, %v1481
    %v1686 = vpack.c.b16 %v1486, %v1482
    %v1687 = vpack.c.b16 %v1491, %v1487
    %v1688 = vpack.c.b16 %v1492, %v1488
    %v1689 = vpack.c.b16 %v1493, %v1489
    %v1690 = vpack.c.b16 %v1494, %v1490
    %v1691 = vpack.c.b16 %v1499, %v1495
    %v1692 = vpack.c.b16 %v1500, %v1496
    %v1693 = vpack.c.b16 %v1501, %v1497
    %v1694 = vpack.c.b16 %v1502, %v1498
    %1887 = vmatprep.subr.bf16.mxu0 %v1532
    %1888 = vmatpush1.bf16.msra.mxu0 %v1531
    %1889 = vmatprep.subr.bf16.mxu0 %v1528
    %1890 = vmatpush1.bf16.msra.mxu0 %v1527
    %1891 = vmatprep.subr.bf16.mxu0 %v1524
    %1892 = vmatpush1.bf16.msra.mxu0 %v1523
    %1893 = vmatprep.subr.bf16.mxu0 %v1520
    %1894 = vmatpush1.bf16.msra.mxu0 %v1519
    %1895 = vmatprep.subr.bf16.mxu0 %v1516
    %1896 = vmatpush1.bf16.msra.mxu0 %v1515
    %1897 = vmatprep.subr.bf16.mxu0 %v1512
    %1898 = vmatpush1.bf16.msra.mxu0 %v1511
    %1899 = vmatprep.subr.bf16.mxu0 %v1508
    %1900 = vmatpush1.bf16.msra.mxu0 %v1507
    %1901 = vmatprep.subr.bf16.mxu0 %v1504
    %1902 = vmatpush1.bf16.msra.mxu0 %v1503
    %1903 = vmatprep.subr.bf16.mxu0 %v1564
    %1904 = vmatpush2.bf16.msra.mxu0 %v1563
    %1905 = vmatprep.subr.bf16.mxu0 %v1560
    %1906 = vmatpush2.bf16.msra.mxu0 %v1559
    %1907 = vmatprep.subr.bf16.mxu0 %v1556
    %1908 = vmatpush2.bf16.msra.mxu0 %v1555
    %1909 = vmatprep.subr.bf16.mxu0 %v1552
    %1910 = vmatpush2.bf16.msra.mxu0 %v1551
    %1911 = vmatprep.subr.bf16.mxu0 %v1548
    %1912 = vmatpush2.bf16.msra.mxu0 %v1547
    %1913 = vmatprep.subr.bf16.mxu0 %v1544
    %1914 = vmatpush2.bf16.msra.mxu0 %v1543
    %1915 = vmatprep.subr.bf16.mxu0 %v1540
    %1916 = vmatpush2.bf16.msra.mxu0 %v1539
    %1917 = vmatprep.subr.bf16.mxu0 %v1536
    %1918 = vmatpush2.bf16.msra.mxu0 %v1535
    %1919 = vmatprep.mubr.bf16.mxu0 %v696
    %1920 = vmatmul.mubr.bf16.gmra.mxu0 %v692
    %v1921 = vpop.f32.mrf.mxu0
    %v1922 = vadd.f32 %v910, %v1921
    %v1923 = vpop.f32.mrf.mxu0
    %v1924 = vadd.f32 %v914, %v1923
    %v1925 = vpop.f32.mrf.mxu0
    %v1926 = vadd.f32 %v910, %v1925
    %v1927 = vpop.f32.mrf.mxu0
    %v1928 = vadd.f32 %v914, %v1927
    %1929 = vdwg.mxu0
    %1930 = vmatprep.subr.bf16.mxu0 %v1596
    %1931 = vmatpush1.bf16.msra.mxu0 %v1595
    %1932 = vmatprep.subr.bf16.mxu0 %v1592
    %1933 = vmatpush1.bf16.msra.mxu0 %v1591
    %1934 = vmatprep.subr.bf16.mxu0 %v1588
    %1935 = vmatpush1.bf16.msra.mxu0 %v1587
    %1936 = vmatprep.subr.bf16.mxu0 %v1584
    %1937 = vmatpush1.bf16.msra.mxu0 %v1583
    %1938 = vmatprep.subr.bf16.mxu0 %v1580
    %1939 = vmatpush1.bf16.msra.mxu0 %v1579
    %1940 = vmatprep.subr.bf16.mxu0 %v1576
    %1941 = vmatpush1.bf16.msra.mxu0 %v1575
    %1942 = vmatprep.subr.bf16.mxu0 %v1572
    %1943 = vmatpush1.bf16.msra.mxu0 %v1571
    %1944 = vmatprep.subr.bf16.mxu0 %v1568
    %1945 = vmatpush1.bf16.msra.mxu0 %v1567
    %1946 = vmatprep.subr.bf16.mxu0 %v1628
    %1947 = vmatpush2.bf16.msra.mxu0 %v1627
    %1948 = vmatprep.subr.bf16.mxu0 %v1624
    %1949 = vmatpush2.bf16.msra.mxu0 %v1623
    %1950 = vmatprep.subr.bf16.mxu0 %v1620
    %1951 = vmatpush2.bf16.msra.mxu0 %v1619
    %1952 = vmatprep.subr.bf16.mxu0 %v1616
    %1953 = vmatpush2.bf16.msra.mxu0 %v1615
    %1954 = vmatprep.subr.bf16.mxu0 %v1612
    %1955 = vmatpush2.bf16.msra.mxu0 %v1611
    %1956 = vmatprep.subr.bf16.mxu0 %v1608
    %1957 = vmatpush2.bf16.msra.mxu0 %v1607
    %1958 = vmatprep.subr.bf16.mxu0 %v1604
    %1959 = vmatpush2.bf16.msra.mxu0 %v1603
    %1960 = vmatprep.subr.bf16.mxu0 %v1600
    %1961 = vmatpush2.bf16.msra.mxu0 %v1599
    %1962 = vmatprep.mubr.bf16.mxu0 %v704
    %1963 = vmatmul.mubr.bf16.gmra.mxu0 %v700
    %v1964 = vpop.f32.mrf.mxu0
    %v1965 = vadd.f32 %v1922, %v1964
    %v1966 = vpop.f32.mrf.mxu0
    %v1967 = vadd.f32 %v1924, %v1966
    %v1968 = vpop.f32.mrf.mxu0
    %v1969 = vadd.f32 %v1926, %v1968
    %v1970 = vpop.f32.mrf.mxu0
    %v1971 = vadd.f32 %v1928, %v1970
    %1972 = vdwg.mxu0
    %1973 = vmatprep.subr.bf16.mxu0 %v1660
    %1974 = vmatpush1.bf16.msra.mxu0 %v1659
    %1975 = vmatprep.subr.bf16.mxu0 %v1656
    %1976 = vmatpush1.bf16.msra.mxu0 %v1655
    %1977 = vmatprep.subr.bf16.mxu0 %v1652
    %1978 = vmatpush1.bf16.msra.mxu0 %v1651
    %1979 = vmatprep.subr.bf16.mxu0 %v1648
    %1980 = vmatpush1.bf16.msra.mxu0 %v1647
    %1981 = vmatprep.subr.bf16.mxu0 %v1644
    %1982 = vmatpush1.bf16.msra.mxu0 %v1643
    %1983 = vmatprep.subr.bf16.mxu0 %v1640
    %1984 = vmatpush1.bf16.msra.mxu0 %v1639
    %1985 = vmatprep.subr.bf16.mxu0 %v1636
    %1986 = vmatpush1.bf16.msra.mxu0 %v1635
    %1987 = vmatprep.subr.bf16.mxu0 %v1632
    %1988 = vmatpush1.bf16.msra.mxu0 %v1631
    %1989 = vmatprep.subr.bf16.mxu0 %v1692
    %1990 = vmatpush2.bf16.msra.mxu0 %v1691
    %1991 = vmatprep.subr.bf16.mxu0 %v1688
    %1992 = vmatpush2.bf16.msra.mxu0 %v1687
    %1993 = vmatprep.subr.bf16.mxu0 %v1684
    %1994 = vmatpush2.bf16.msra.mxu0 %v1683
    %1995 = vmatprep.subr.bf16.mxu0 %v1680
    %1996 = vmatpush2.bf16.msra.mxu0 %v1679
    %1997 = vmatprep.subr.bf16.mxu0 %v1676
    %1998 = vmatpush2.bf16.msra.mxu0 %v1675
    %1999 = vmatprep.subr.bf16.mxu0 %v1672
    %2000 = vmatpush2.bf16.msra.mxu0 %v1671
    %2001 = vmatprep.subr.bf16.mxu0 %v1668
    %2002 = vmatpush2.bf16.msra.mxu0 %v1667
    %2003 = vmatprep.subr.bf16.mxu0 %v1664
    %2004 = vmatpush2.bf16.msra.mxu0 %v1663
    %2005 = vmatprep.mubr.bf16.mxu0 %v712
    %2006 = vmatmul.mubr.bf16.gmra.mxu0 %v708
    %v2007 = vpop.f32.mrf.mxu0
    %v2008 = vadd.f32 %v1965, %v2007
    %v2009 = vpop.f32.mrf.mxu0
    %v2010 = vadd.f32 %v1967, %v2009
    %v2011 = vpop.f32.mrf.mxu0
    %v2012 = vadd.f32 %v1969, %v2011
    %v2013 = vpop.f32.mrf.mxu0
    %v2014 = vadd.f32 %v1971, %v2013
    %2015 = vdwg.mxu0
    %2016 = vmatprep.subr.bf16.mxu0 %v1534
    %2017 = vmatpush1.bf16.msra.mxu0 %v1533
    %2018 = vmatprep.subr.bf16.mxu0 %v1530
    %2019 = vmatpush1.bf16.msra.mxu0 %v1529
    %2020 = vmatprep.subr.bf16.mxu0 %v1526
    %2021 = vmatpush1.bf16.msra.mxu0 %v1525
    %2022 = vmatprep.subr.bf16.mxu0 %v1522
    %2023 = vmatpush1.bf16.msra.mxu0 %v1521
    %2024 = vmatprep.subr.bf16.mxu0 %v1518
    %2025 = vmatpush1.bf16.msra.mxu0 %v1517
    %2026 = vmatprep.subr.bf16.mxu0 %v1514
    %2027 = vmatpush1.bf16.msra.mxu0 %v1513
    %2028 = vmatprep.subr.bf16.mxu0 %v1510
    %2029 = vmatpush1.bf16.msra.mxu0 %v1509
    %2030 = vmatprep.subr.bf16.mxu0 %v1506
    %2031 = vmatpush1.bf16.msra.mxu0 %v1505
    %2032 = vmatprep.subr.bf16.mxu0 %v1566
    %2033 = vmatpush2.bf16.msra.mxu0 %v1565
    %2034 = vmatprep.subr.bf16.mxu0 %v1562
    %2035 = vmatpush2.bf16.msra.mxu0 %v1561
    %2036 = vmatprep.subr.bf16.mxu0 %v1558
    %2037 = vmatpush2.bf16.msra.mxu0 %v1557
    %2038 = vmatprep.subr.bf16.mxu0 %v1554
    %2039 = vmatpush2.bf16.msra.mxu0 %v1553
    %2040 = vmatprep.subr.bf16.mxu0 %v1550
    %2041 = vmatpush2.bf16.msra.mxu0 %v1549
    %2042 = vmatprep.subr.bf16.mxu0 %v1546
    %2043 = vmatpush2.bf16.msra.mxu0 %v1545
    %2044 = vmatprep.subr.bf16.mxu0 %v1542
    %2045 = vmatpush2.bf16.msra.mxu0 %v1541
    %2046 = vmatprep.subr.bf16.mxu0 %v1538
    %2047 = vmatpush2.bf16.msra.mxu0 %v1537
    %2048 = vmatprep.mubr.bf16.mxu0 %v696
    %2049 = vmatmul.mubr.bf16.gmra.mxu0 %v692
    %v2050 = vpop.f32.mrf.mxu0
    %v2051 = vadd.f32 %v918, %v2050
    %v2052 = vpop.f32.mrf.mxu0
    %v2053 = vadd.f32 %v922, %v2052
    %v2054 = vpop.f32.mrf.mxu0
    %v2055 = vadd.f32 %v918, %v2054
    %v2056 = vpop.f32.mrf.mxu0
    %v2057 = vadd.f32 %v922, %v2056
    %2058 = vdwg.mxu0
    %2059 = vmatprep.subr.bf16.mxu0 %v1598
    %2060 = vmatpush1.bf16.msra.mxu0 %v1597
    %2061 = vmatprep.subr.bf16.mxu0 %v1594
    %2062 = vmatpush1.bf16.msra.mxu0 %v1593
    %2063 = vmatprep.subr.bf16.mxu0 %v1590
    %2064 = vmatpush1.bf16.msra.mxu0 %v1589
    %2065 = vmatprep.subr.bf16.mxu0 %v1586
    %2066 = vmatpush1.bf16.msra.mxu0 %v1585
    %2067 = vmatprep.subr.bf16.mxu0 %v1582
    %2068 = vmatpush1.bf16.msra.mxu0 %v1581
    %2069 = vmatprep.subr.bf16.mxu0 %v1578
    %2070 = vmatpush1.bf16.msra.mxu0 %v1577
    %2071 = vmatprep.subr.bf16.mxu0 %v1574
    %2072 = vmatpush1.bf16.msra.mxu0 %v1573
    %2073 = vmatprep.subr.bf16.mxu0 %v1570
    %2074 = vmatpush1.bf16.msra.mxu0 %v1569
    %2075 = vmatprep.subr.bf16.mxu0 %v1630
    %2076 = vmatpush2.bf16.msra.mxu0 %v1629
    %2077 = vmatprep.subr.bf16.mxu0 %v1626
    %2078 = vmatpush2.bf16.msra.mxu0 %v1625
    %2079 = vmatprep.subr.bf16.mxu0 %v1622
    %2080 = vmatpush2.bf16.msra.mxu0 %v1621
    %2081 = vmatprep.subr.bf16.mxu0 %v1618
    %2082 = vmatpush2.bf16.msra.mxu0 %v1617
    %2083 = vmatprep.subr.bf16.mxu0 %v1614
    %2084 = vmatpush2.bf16.msra.mxu0 %v1613
    %2085 = vmatprep.subr.bf16.mxu0 %v1610
    %2086 = vmatpush2.bf16.msra.mxu0 %v1609
    %2087 = vmatprep.subr.bf16.mxu0 %v1606
    %2088 = vmatpush2.bf16.msra.mxu0 %v1605
    %2089 = vmatprep.subr.bf16.mxu0 %v1602
    %2090 = vmatpush2.bf16.msra.mxu0 %v1601
    %2091 = vmatprep.mubr.bf16.mxu0 %v704
    %2092 = vmatmul.mubr.bf16.gmra.mxu0 %v700
    %v2093 = vpop.f32.mrf.mxu0
    %v2094 = vadd.f32 %v2051, %v2093
    %v2095 = vpop.f32.mrf.mxu0
    %v2096 = vadd.f32 %v2053, %v2095
    %v2097 = vpop.f32.mrf.mxu0
    %v2098 = vadd.f32 %v2055, %v2097
    %v2099 = vpop.f32.mrf.mxu0
    %v2100 = vadd.f32 %v2057, %v2099
    %2101 = vdwg.mxu0
    %2102 = vmatprep.subr.bf16.mxu0 %v1662
    %2103 = vmatpush1.bf16.msra.mxu0 %v1661
    %2104 = vmatprep.subr.bf16.mxu0 %v1658
    %2105 = vmatpush1.bf16.msra.mxu0 %v1657
    %2106 = vmatprep.subr.bf16.mxu0 %v1654
    %2107 = vmatpush1.bf16.msra.mxu0 %v1653
    %2108 = vmatprep.subr.bf16.mxu0 %v1650
    %2109 = vmatpush1.bf16.msra.mxu0 %v1649
    %2110 = vmatprep.subr.bf16.mxu0 %v1646
    %2111 = vmatpush1.bf16.msra.mxu0 %v1645
    %2112 = vmatprep.subr.bf16.mxu0 %v1642
    %2113 = vmatpush1.bf16.msra.mxu0 %v1641
    %2114 = vmatprep.subr.bf16.mxu0 %v1638
    %2115 = vmatpush1.bf16.msra.mxu0 %v1637
    %2116 = vmatprep.subr.bf16.mxu0 %v1634
    %2117 = vmatpush1.bf16.msra.mxu0 %v1633
    %2118 = vmatprep.subr.bf16.mxu0 %v1694
    %2119 = vmatpush2.bf16.msra.mxu0 %v1693
    %2120 = vmatprep.subr.bf16.mxu0 %v1690
    %2121 = vmatpush2.bf16.msra.mxu0 %v1689
    %2122 = vmatprep.subr.bf16.mxu0 %v1686
    %2123 = vmatpush2.bf16.msra.mxu0 %v1685
    %2124 = vmatprep.subr.bf16.mxu0 %v1682
    %2125 = vmatpush2.bf16.msra.mxu0 %v1681
    %2126 = vmatprep.subr.bf16.mxu0 %v1678
    %2127 = vmatpush2.bf16.msra.mxu0 %v1677
    %2128 = vmatprep.subr.bf16.mxu0 %v1674
    %2129 = vmatpush2.bf16.msra.mxu0 %v1673
    %2130 = vmatprep.subr.bf16.mxu0 %v1670
    %2131 = vmatpush2.bf16.msra.mxu0 %v1669
    %2132 = vmatprep.subr.bf16.mxu0 %v1666
    %2133 = vmatpush2.bf16.msra.mxu0 %v1665
    %2134 = vmatprep.mubr.bf16.mxu0 %v712
    %2135 = vmatmul.mubr.bf16.gmra.mxu0 %v708
    %v2136 = vpop.f32.mrf.mxu0
    %v2137 = vadd.f32 %v2094, %v2136
    %v2138 = vpop.f32.mrf.mxu0
    %v2139 = vadd.f32 %v2096, %v2138
    %v2140 = vpop.f32.mrf.mxu0
    %v2141 = vadd.f32 %v2098, %v2140
    %v2142 = vpop.f32.mrf.mxu0
    %v2143 = vadd.f32 %v2100, %v2142
    %2144 = vdwg.mxu0
    %v2145 = vmax.f32 %v2008, 0.0
    %v2146 = vmax.f32 %v2010, 0.0
    %v2147 = vmax.f32 %v2137, 0.0
    %v2148 = vmax.f32 %v2139, 0.0
    %v2149 = vmax.f32 %v2012, 0.0
    %v2150 = vmax.f32 %v2014, 0.0
    %v2151 = vmax.f32 %v2141, 0.0
    %v2152 = vmax.f32 %v2143, 0.0
    %v2153 = vld [vmem:[%s543] sm:$0xff]
    %v2154 = vld [vmem:[%s543 + $0x8] sm:$0x11]
    %v2157 = vunpack.c.l.b16 %v2153
    %v2158 = vunpack.c.h.b16 %v2153
    %v2159 = vunpack.c.l.b16 %v2154
    %v2160 = vunpack.c.h.b16 %v2154
    %v2161 = vpack.c.b16 %v2159, %v2157
    %v2162 = vpack.c.b16 %v2160, %v2158
    %v2164 = vshrl.u32 %v2161, 16
    %v2166 = vshll.u32 %v2161, 16
    %v2168 = vrot.slane %v2166, 1
    %v2169 = vor.u32 %v2164, %v2168
    %v2171 = vshrl.u32 %v2162, 16
    %v2173 = vshll.u32 %v2162, 16
    %v2175 = vrot.slane %v2173, 1
    %v2176 = vor.u32 %v2171, %v2175
    %v2177 = vld [vmem:[%s590] sm:$0xff]
    %v2178 = vld [vmem:[%s590 + $0x8] sm:$0x11]
    %v2181 = vunpack.c.l.b16 %v2177
    %v2182 = vunpack.c.h.b16 %v2177
    %v2183 = vunpack.c.l.b16 %v2178
    %v2184 = vunpack.c.h.b16 %v2178
    %v2185 = vpack.c.b16 %v2183, %v2181
    %v2186 = vpack.c.b16 %v2184, %v2182
    %v2188 = vshrl.u32 %v2185, 16
    %v2190 = vshll.u32 %v2185, 16
    %v2192 = vrot.slane %v2190, 1
    %v2193 = vor.u32 %v2188, %v2192
    %v2195 = vshrl.u32 %v2186, 16
    %v2197 = vshll.u32 %v2186, 16
    %v2199 = vrot.slane %v2197, 1
    %v2200 = vor.u32 %v2195, %v2199
    %v2201 = vrot.slane %v2193, 4
    %v2202 = vrot.slane %v2200, 4
    %v2205 = vsel %vm689, %v2169, %v2201
    %v2209 = vsel %vm689, %v2176, %v2202
    %2211 = vmatprep.subr.bf16.mxu0 %v1532
    %2212 = vmatpush1.bf16.msra.mxu0 %v1531
    %2213 = vmatprep.subr.bf16.mxu0 %v1528
    %2214 = vmatpush1.bf16.msra.mxu0 %v1527
    %2215 = vmatprep.subr.bf16.mxu0 %v1524
    %2216 = vmatpush1.bf16.msra.mxu0 %v1523
    %2217 = vmatprep.subr.bf16.mxu0 %v1520
    %2218 = vmatpush1.bf16.msra.mxu0 %v1519
    %2219 = vmatprep.subr.bf16.mxu0 %v1516
    %2220 = vmatpush1.bf16.msra.mxu0 %v1515
    %2221 = vmatprep.subr.bf16.mxu0 %v1512
    %2222 = vmatpush1.bf16.msra.mxu0 %v1511
    %2223 = vmatprep.subr.bf16.mxu0 %v1508
    %2224 = vmatpush1.bf16.msra.mxu0 %v1507
    %2225 = vmatprep.subr.bf16.mxu0 %v1504
    %2226 = vmatpush1.bf16.msra.mxu0 %v1503
    %2227 = vmatprep.subr.bf16.mxu0 %v1564
    %2228 = vmatpush2.bf16.msra.mxu0 %v1563
    %2229 = vmatprep.subr.bf16.mxu0 %v1560
    %2230 = vmatpush2.bf16.msra.mxu0 %v1559
    %2231 = vmatprep.subr.bf16.mxu0 %v1556
    %2232 = vmatpush2.bf16.msra.mxu0 %v1555
    %2233 = vmatprep.subr.bf16.mxu0 %v1552
    %2234 = vmatpush2.bf16.msra.mxu0 %v1551
    %2235 = vmatprep.subr.bf16.mxu0 %v1548
    %2236 = vmatpush2.bf16.msra.mxu0 %v1547
    %2237 = vmatprep.subr.bf16.mxu0 %v1544
    %2238 = vmatpush2.bf16.msra.mxu0 %v1543
    %2239 = vmatprep.subr.bf16.mxu0 %v1540
    %2240 = vmatpush2.bf16.msra.mxu0 %v1539
    %2241 = vmatprep.subr.bf16.mxu0 %v1536
    %2242 = vmatpush2.bf16.msra.mxu0 %v1535
    %2243 = vmatprep.mubr.bf16.mxu0 %v704
    %2244 = vmatmul.mubr.bf16.gmra.mxu0 %v700
    %v2245 = vpop.f32.mrf.mxu0
    %v2246 = vadd.f32 %v910, %v2245
    %v2247 = vpop.f32.mrf.mxu0
    %v2248 = vadd.f32 %v914, %v2247
    %v2249 = vpop.f32.mrf.mxu0
    %v2250 = vadd.f32 %v910, %v2249
    %v2251 = vpop.f32.mrf.mxu0
    %v2252 = vadd.f32 %v914, %v2251
    %2253 = vdwg.mxu0
    %2254 = vmatprep.subr.bf16.mxu0 %v1596
    %2255 = vmatpush1.bf16.msra.mxu0 %v1595
    %2256 = vmatprep.subr.bf16.mxu0 %v1592
    %2257 = vmatpush1.bf16.msra.mxu0 %v1591
    %2258 = vmatprep.subr.bf16.mxu0 %v1588
    %2259 = vmatpush1.bf16.msra.mxu0 %v1587
    %2260 = vmatprep.subr.bf16.mxu0 %v1584
    %2261 = vmatpush1.bf16.msra.mxu0 %v1583
    %2262 = vmatprep.subr.bf16.mxu0 %v1580
    %2263 = vmatpush1.bf16.msra.mxu0 %v1579
    %2264 = vmatprep.subr.bf16.mxu0 %v1576
    %2265 = vmatpush1.bf16.msra.mxu0 %v1575
    %2266 = vmatprep.subr.bf16.mxu0 %v1572
    %2267 = vmatpush1.bf16.msra.mxu0 %v1571
    %2268 = vmatprep.subr.bf16.mxu0 %v1568
    %2269 = vmatpush1.bf16.msra.mxu0 %v1567
    %2270 = vmatprep.subr.bf16.mxu0 %v1628
    %2271 = vmatpush2.bf16.msra.mxu0 %v1627
    %2272 = vmatprep.subr.bf16.mxu0 %v1624
    %2273 = vmatpush2.bf16.msra.mxu0 %v1623
    %2274 = vmatprep.subr.bf16.mxu0 %v1620
    %2275 = vmatpush2.bf16.msra.mxu0 %v1619
    %2276 = vmatprep.subr.bf16.mxu0 %v1616
    %2277 = vmatpush2.bf16.msra.mxu0 %v1615
    %2278 = vmatprep.subr.bf16.mxu0 %v1612
    %2279 = vmatpush2.bf16.msra.mxu0 %v1611
    %2280 = vmatprep.subr.bf16.mxu0 %v1608
    %2281 = vmatpush2.bf16.msra.mxu0 %v1607
    %2282 = vmatprep.subr.bf16.mxu0 %v1604
    %2283 = vmatpush2.bf16.msra.mxu0 %v1603
    %2284 = vmatprep.subr.bf16.mxu0 %v1600
    %2285 = vmatpush2.bf16.msra.mxu0 %v1599
    %2286 = vmatprep.mubr.bf16.mxu0 %v712
    %2287 = vmatmul.mubr.bf16.gmra.mxu0 %v708
    %v2288 = vpop.f32.mrf.mxu0
    %v2289 = vadd.f32 %v2246, %v2288
    %v2290 = vpop.f32.mrf.mxu0
    %v2291 = vadd.f32 %v2248, %v2290
    %v2292 = vpop.f32.mrf.mxu0
    %v2293 = vadd.f32 %v2250, %v2292
    %v2294 = vpop.f32.mrf.mxu0
    %v2295 = vadd.f32 %v2252, %v2294
    %2296 = vdwg.mxu0
    %2297 = vmatprep.subr.bf16.mxu0 %v1660
    %2298 = vmatpush1.bf16.msra.mxu0 %v1659
    %2299 = vmatprep.subr.bf16.mxu0 %v1656
    %2300 = vmatpush1.bf16.msra.mxu0 %v1655
    %2301 = vmatprep.subr.bf16.mxu0 %v1652
    %2302 = vmatpush1.bf16.msra.mxu0 %v1651
    %2303 = vmatprep.subr.bf16.mxu0 %v1648
    %2304 = vmatpush1.bf16.msra.mxu0 %v1647
    %2305 = vmatprep.subr.bf16.mxu0 %v1644
    %2306 = vmatpush1.bf16.msra.mxu0 %v1643
    %2307 = vmatprep.subr.bf16.mxu0 %v1640
    %2308 = vmatpush1.bf16.msra.mxu0 %v1639
    %2309 = vmatprep.subr.bf16.mxu0 %v1636
    %2310 = vmatpush1.bf16.msra.mxu0 %v1635
    %2311 = vmatprep.subr.bf16.mxu0 %v1632
    %2312 = vmatpush1.bf16.msra.mxu0 %v1631
    %2313 = vmatprep.subr.bf16.mxu0 %v1692
    %2314 = vmatpush2.bf16.msra.mxu0 %v1691
    %2315 = vmatprep.subr.bf16.mxu0 %v1688
    %2316 = vmatpush2.bf16.msra.mxu0 %v1687
    %2317 = vmatprep.subr.bf16.mxu0 %v1684
    %2318 = vmatpush2.bf16.msra.mxu0 %v1683
    %2319 = vmatprep.subr.bf16.mxu0 %v1680
    %2320 = vmatpush2.bf16.msra.mxu0 %v1679
    %2321 = vmatprep.subr.bf16.mxu0 %v1676
    %2322 = vmatpush2.bf16.msra.mxu0 %v1675
    %2323 = vmatprep.subr.bf16.mxu0 %v1672
    %2324 = vmatpush2.bf16.msra.mxu0 %v1671
    %2325 = vmatprep.subr.bf16.mxu0 %v1668
    %2326 = vmatpush2.bf16.msra.mxu0 %v1667
    %2327 = vmatprep.subr.bf16.mxu0 %v1664
    %2328 = vmatpush2.bf16.msra.mxu0 %v1663
    %2329 = vmatprep.mubr.bf16.mxu0 %v2209
    %2330 = vmatmul.mubr.bf16.gmra.mxu0 %v2205
    %v2331 = vpop.f32.mrf.mxu0
    %v2332 = vadd.f32 %v2289, %v2331
    %v2333 = vpop.f32.mrf.mxu0
    %v2334 = vadd.f32 %v2291, %v2333
    %v2335 = vpop.f32.mrf.mxu0
    %v2336 = vadd.f32 %v2293, %v2335
    %v2337 = vpop.f32.mrf.mxu0
    %v2338 = vadd.f32 %v2295, %v2337
    %2339 = vdwg.mxu0
    %2340 = vmatprep.subr.bf16.mxu0 %v1534
    %2341 = vmatpush1.bf16.msra.mxu0 %v1533
    %2342 = vmatprep.subr.bf16.mxu0 %v1530
    %2343 = vmatpush1.bf16.msra.mxu0 %v1529
    %2344 = vmatprep.subr.bf16.mxu0 %v1526
    %2345 = vmatpush1.bf16.msra.mxu0 %v1525
    %2346 = vmatprep.subr.bf16.mxu0 %v1522
    %2347 = vmatpush1.bf16.msra.mxu0 %v1521
    %2348 = vmatprep.subr.bf16.mxu0 %v1518
    %2349 = vmatpush1.bf16.msra.mxu0 %v1517
    %2350 = vmatprep.subr.bf16.mxu0 %v1514
    %2351 = vmatpush1.bf16.msra.mxu0 %v1513
    %2352 = vmatprep.subr.bf16.mxu0 %v1510
    %2353 = vmatpush1.bf16.msra.mxu0 %v1509
    %2354 = vmatprep.subr.bf16.mxu0 %v1506
    %2355 = vmatpush1.bf16.msra.mxu0 %v1505
    %2356 = vmatprep.subr.bf16.mxu0 %v1566
    %2357 = vmatpush2.bf16.msra.mxu0 %v1565
    %2358 = vmatprep.subr.bf16.mxu0 %v1562
    %2359 = vmatpush2.bf16.msra.mxu0 %v1561
    %2360 = vmatprep.subr.bf16.mxu0 %v1558
    %2361 = vmatpush2.bf16.msra.mxu0 %v1557
    %2362 = vmatprep.subr.bf16.mxu0 %v1554
    %2363 = vmatpush2.bf16.msra.mxu0 %v1553
    %2364 = vmatprep.subr.bf16.mxu0 %v1550
    %2365 = vmatpush2.bf16.msra.mxu0 %v1549
    %2366 = vmatprep.subr.bf16.mxu0 %v1546
    %2367 = vmatpush2.bf16.msra.mxu0 %v1545
    %2368 = vmatprep.subr.bf16.mxu0 %v1542
    %2369 = vmatpush2.bf16.msra.mxu0 %v1541
    %2370 = vmatprep.subr.bf16.mxu0 %v1538
    %2371 = vmatpush2.bf16.msra.mxu0 %v1537
    %2372 = vmatprep.mubr.bf16.mxu0 %v704
    %2373 = vmatmul.mubr.bf16.gmra.mxu0 %v700
    %v2374 = vpop.f32.mrf.mxu0
    %v2375 = vadd.f32 %v918, %v2374
    %v2376 = vpop.f32.mrf.mxu0
    %v2377 = vadd.f32 %v922, %v2376
    %v2378 = vpop.f32.mrf.mxu0
    %v2379 = vadd.f32 %v918, %v2378
    %v2380 = vpop.f32.mrf.mxu0
    %v2381 = vadd.f32 %v922, %v2380
    %2382 = vdwg.mxu0
    %2383 = vmatprep.subr.bf16.mxu0 %v1598
    %2384 = vmatpush1.bf16.msra.mxu0 %v1597
    %2385 = vmatprep.subr.bf16.mxu0 %v1594
    %2386 = vmatpush1.bf16.msra.mxu0 %v1593
    %2387 = vmatprep.subr.bf16.mxu0 %v1590
    %2388 = vmatpush1.bf16.msra.mxu0 %v1589
    %2389 = vmatprep.subr.bf16.mxu0 %v1586
    %2390 = vmatpush1.bf16.msra.mxu0 %v1585
    %2391 = vmatprep.subr.bf16.mxu0 %v1582
    %2392 = vmatpush1.bf16.msra.mxu0 %v1581
    %2393 = vmatprep.subr.bf16.mxu0 %v1578
    %2394 = vmatpush1.bf16.msra.mxu0 %v1577
    %2395 = vmatprep.subr.bf16.mxu0 %v1574
    %2396 = vmatpush1.bf16.msra.mxu0 %v1573
    %2397 = vmatprep.subr.bf16.mxu0 %v1570
    %2398 = vmatpush1.bf16.msra.mxu0 %v1569
    %2399 = vmatprep.subr.bf16.mxu0 %v1630
    %2400 = vmatpush2.bf16.msra.mxu0 %v1629
    %2401 = vmatprep.subr.bf16.mxu0 %v1626
    %2402 = vmatpush2.bf16.msra.mxu0 %v1625
    %2403 = vmatprep.subr.bf16.mxu0 %v1622
    %2404 = vmatpush2.bf16.msra.mxu0 %v1621
    %2405 = vmatprep.subr.bf16.mxu0 %v1618
    %2406 = vmatpush2.bf16.msra.mxu0 %v1617
    %2407 = vmatprep.subr.bf16.mxu0 %v1614
    %2408 = vmatpush2.bf16.msra.mxu0 %v1613
    %2409 = vmatprep.subr.bf16.mxu0 %v1610
    %2410 = vmatpush2.bf16.msra.mxu0 %v1609
    %2411 = vmatprep.subr.bf16.mxu0 %v1606
    %2412 = vmatpush2.bf16.msra.mxu0 %v1605
    %2413 = vmatprep.subr.bf16.mxu0 %v1602
    %2414 = vmatpush2.bf16.msra.mxu0 %v1601
    %2415 = vmatprep.mubr.bf16.mxu0 %v712
    %2416 = vmatmul.mubr.bf16.gmra.mxu0 %v708
    %v2417 = vpop.f32.mrf.mxu0
    %v2418 = vadd.f32 %v2375, %v2417
    %v2419 = vpop.f32.mrf.mxu0
    %v2420 = vadd.f32 %v2377, %v2419
    %v2421 = vpop.f32.mrf.mxu0
    %v2422 = vadd.f32 %v2379, %v2421
    %v2423 = vpop.f32.mrf.mxu0
    %v2424 = vadd.f32 %v2381, %v2423
    %2425 = vdwg.mxu0
    %2426 = vmatprep.subr.bf16.mxu0 %v1662
    %2427 = vmatpush1.bf16.msra.mxu0 %v1661
    %2428 = vmatprep.subr.bf16.mxu0 %v1658
    %2429 = vmatpush1.bf16.msra.mxu0 %v1657
    %2430 = vmatprep.subr.bf16.mxu0 %v1654
    %2431 = vmatpush1.bf16.msra.mxu0 %v1653
    %2432 = vmatprep.subr.bf16.mxu0 %v1650
    %2433 = vmatpush1.bf16.msra.mxu0 %v1649
    %2434 = vmatprep.subr.bf16.mxu0 %v1646
    %2435 = vmatpush1.bf16.msra.mxu0 %v1645
    %2436 = vmatprep.subr.bf16.mxu0 %v1642
    %2437 = vmatpush1.bf16.msra.mxu0 %v1641
    %2438 = vmatprep.subr.bf16.mxu0 %v1638
    %2439 = vmatpush1.bf16.msra.mxu0 %v1637
    %2440 = vmatprep.subr.bf16.mxu0 %v1634
    %2441 = vmatpush1.bf16.msra.mxu0 %v1633
    %2442 = vmatprep.subr.bf16.mxu0 %v1694
    %2443 = vmatpush2.bf16.msra.mxu0 %v1693
    %2444 = vmatprep.subr.bf16.mxu0 %v1690
    %2445 = vmatpush2.bf16.msra.mxu0 %v1689
    %2446 = vmatprep.subr.bf16.mxu0 %v1686
    %2447 = vmatpush2.bf16.msra.mxu0 %v1685
    %2448 = vmatprep.subr.bf16.mxu0 %v1682
    %2449 = vmatpush2.bf16.msra.mxu0 %v1681
    %2450 = vmatprep.subr.bf16.mxu0 %v1678
    %2451 = vmatpush2.bf16.msra.mxu0 %v1677
    %2452 = vmatprep.subr.bf16.mxu0 %v1674
    %2453 = vmatpush2.bf16.msra.mxu0 %v1673
    %2454 = vmatprep.subr.bf16.mxu0 %v1670
    %2455 = vmatpush2.bf16.msra.mxu0 %v1669
    %2456 = vmatprep.subr.bf16.mxu0 %v1666
    %2457 = vmatpush2.bf16.msra.mxu0 %v1665
    %2458 = vmatprep.mubr.bf16.mxu0 %v2209
    %2459 = vmatmul.mubr.bf16.gmra.mxu0 %v2205
    %v2460 = vpop.f32.mrf.mxu0
    %v2461 = vadd.f32 %v2418, %v2460
    %v2462 = vpop.f32.mrf.mxu0
    %v2463 = vadd.f32 %v2420, %v2462
    %v2464 = vpop.f32.mrf.mxu0
    %v2465 = vadd.f32 %v2422, %v2464
    %v2466 = vpop.f32.mrf.mxu0
    %v2467 = vadd.f32 %v2424, %v2466
    %2468 = vdwg.mxu0
    %v2469 = vmax.f32 %v2332, 0.0
    %v2470 = vmax.f32 %v2334, 0.0
    %v2471 = vmax.f32 %v2461, 0.0
    %v2472 = vmax.f32 %v2463, 0.0
    %v2473 = vmax.f32 %v2336, 0.0
    %v2474 = vmax.f32 %v2338, 0.0
    %v2475 = vmax.f32 %v2465, 0.0
    %v2476 = vmax.f32 %v2467, 0.0
    %v2477 = vmax.f32 %v2145, %v2469
    %v2478 = vmax.f32 %v2146, %v2470
    %v2479 = vmax.f32 %v2147, %v2471
    %v2480 = vmax.f32 %v2148, %v2472
    %v2481 = vmax.f32 %v2149, %v2473
    %v2482 = vmax.f32 %v2150, %v2474
    %v2483 = vmax.f32 %v2151, %v2475
    %v2484 = vmax.f32 %v2152, %v2476
    %v2485 = vmax.f32 %v2477, %v2479
    %v2486 = vmax.f32 %v2478, %v2480
    %v2487 = vmax.f32 %v2481, %v2483
    %v2488 = vmax.f32 %v2482, %v2484
    %v2489 = vpack.c.bf16 %v2487, %v2485
    %v2490 = vpack.c.bf16 %v2488, %v2486
    %v2492 = vshrl.u32 %v2489, 16
    %v2495 = vshrl.u32 %v2490, 16
    %v2501 = vrot.slane %v2489, 1
    %v2502 = vrot.slane %v2490, 1
    %v2505 = vrot.slane %v2492, 1
    %v2506 = vrot.slane %v2495, 1
    %v2509 = vrot.slane %v2489, 2
    %v2510 = vrot.slane %v2490, 2
    %v2513 = vrot.slane %v2492, 2
    %v2514 = vrot.slane %v2495, 2
    %v2517 = vrot.slane %v2489, 3
    %v2518 = vrot.slane %v2490, 3
    %v2521 = vrot.slane %v2492, 3
    %v2522 = vrot.slane %v2495, 3
    %v2525 = vshll.u32 %v2489, 16
    %v2527 = vrot.slane %v2525, 4
    %v2528 = vshll.u32 %v2490, 16
    %v2530 = vrot.slane %v2528, 4
    %v2532 = vshll.u32 %v2492, 16
    %v2534 = vrot.slane %v2532, 4
    %v2536 = vshll.u32 %v2495, 16
    %v2538 = vrot.slane %v2536, 4
    %v2540 = vshll.u32 %v2501, 16
    %v2542 = vrot.slane %v2540, 4
    %v2544 = vshll.u32 %v2502, 16
    %v2546 = vrot.slane %v2544, 4
    %v2548 = vshll.u32 %v2505, 16
    %v2550 = vrot.slane %v2548, 4
    %v2552 = vshll.u32 %v2506, 16
    %v2554 = vrot.slane %v2552, 4
    %v2556 = vshll.u32 %v2509, 16
    %v2558 = vrot.slane %v2556, 4
    %v2560 = vshll.u32 %v2510, 16
    %v2562 = vrot.slane %v2560, 4
    %v2564 = vshll.u32 %v2513, 16
    %v2566 = vrot.slane %v2564, 4
    %v2568 = vshll.u32 %v2514, 16
    %v2570 = vrot.slane %v2568, 4
    %v2572 = vshll.u32 %v2517, 16
    %v2574 = vrot.slane %v2572, 4
    %v2576 = vshll.u32 %v2518, 16
    %v2578 = vrot.slane %v2576, 4
    %v2580 = vshll.u32 %v2521, 16
    %v2582 = vrot.slane %v2580, 4
    %v2584 = vshll.u32 %v2522, 16
    %v2586 = vrot.slane %v2584, 4
    %v2603 = vsel %vm570, %v2489, %v2527
    %v2604 = vsel %vm570, %v2490, %v2530
    %v2605 = vsel %vm570, %v2492, %v2534
    %v2606 = vsel %vm570, %v2495, %v2538
    %v2607 = vsel %vm570, %v2501, %v2542
    %v2608 = vsel %vm570, %v2502, %v2546
    %v2609 = vsel %vm570, %v2505, %v2550
    %v2610 = vsel %vm570, %v2506, %v2554
    %v2611 = vsel %vm570, %v2509, %v2558
    %v2612 = vsel %vm570, %v2510, %v2562
    %v2613 = vsel %vm570, %v2513, %v2566
    %v2614 = vsel %vm570, %v2514, %v2570
    %v2615 = vsel %vm570, %v2517, %v2574
    %v2616 = vsel %vm570, %v2518, %v2578
    %v2617 = vsel %vm570, %v2521, %v2582
    %v2618 = vsel %vm570, %v2522, %v2586
    %s2619 = smul.u32 4, 256
    %s2620 = smul.u32 %s2619, 2
    %s2621 = sshll.u32 %s2620, 4
    %2622 = dma.done [#allocation4], %s2621
    %v2623 = vld [vmem:[#allocation3] sm:$0xff]
    %v2624 = vld [vmem:[#allocation3 + $0x8] sm:$0xff]
    %v2625 = vld [vmem:[#allocation3 + $0x10] sm:$0xff]
    %v2626 = vld [vmem:[#allocation3 + $0x18] sm:$0xff]
    %v2627 = vld [vmem:[#allocation3 + $0x20] sm:$0xff]
    %v2628 = vld [vmem:[#allocation3 + $0x28] sm:$0xff]
    %v2629 = vld [vmem:[#allocation3 + $0x30] sm:$0xff]
    %v2630 = vld [vmem:[#allocation3 + $0x38] sm:$0xff]
    %v2631 = vld [vmem:[#allocation3 + $0x40] sm:$0xff]
    %v2632 = vld [vmem:[#allocation3 + $0x48] sm:$0xff]
    %v2633 = vld [vmem:[#allocation3 + $0x50] sm:$0xff]
    %v2634 = vld [vmem:[#allocation3 + $0x58] sm:$0xff]
    %v2635 = vld [vmem:[#allocation3 + $0x60] sm:$0xff]
    %v2636 = vld [vmem:[#allocation3 + $0x68] sm:$0xff]
    %v2637 = vld [vmem:[#allocation3 + $0x70] sm:$0xff]
    %v2638 = vld [vmem:[#allocation3 + $0x78] sm:$0xff]
    %v2639 = vld [vmem:[#allocation3 + $0x80] sm:$0xff]
    %v2640 = vld [vmem:[#allocation3 + $0x88] sm:$0xff]
    %v2641 = vld [vmem:[#allocation3 + $0x90] sm:$0xff]
    %v2642 = vld [vmem:[#allocation3 + $0x98] sm:$0xff]
    %v2643 = vld [vmem:[#allocation3 + $0xa0] sm:$0xff]
    %v2644 = vld [vmem:[#allocation3 + $0xa8] sm:$0xff]
    %v2645 = vld [vmem:[#allocation3 + $0xb0] sm:$0xff]
    %v2646 = vld [vmem:[#allocation3 + $0xb8] sm:$0xff]
    %v2647 = vld [vmem:[#allocation3 + $0xc0] sm:$0xff]
    %v2648 = vld [vmem:[#allocation3 + $0xc8] sm:$0xff]
    %v2649 = vld [vmem:[#allocation3 + $0xd0] sm:$0xff]
    %v2650 = vld [vmem:[#allocation3 + $0xd8] sm:$0xff]
    %v2651 = vld [vmem:[#allocation3 + $0xe0] sm:$0xff]
    %v2652 = vld [vmem:[#allocation3 + $0xe8] sm:$0xff]
    %v2653 = vld [vmem:[#allocation3 + $0xf0] sm:$0xff]
    %v2654 = vld [vmem:[#allocation3 + $0xf8] sm:$0xff]
    %v2655 = vld [vmem:[#allocation3 + $0x100] sm:$0xff]
    %v2656 = vld [vmem:[#allocation3 + $0x108] sm:$0xff]
    %v2657 = vld [vmem:[#allocation3 + $0x110] sm:$0xff]
    %v2658 = vld [vmem:[#allocation3 + $0x118] sm:$0xff]
    %v2659 = vld [vmem:[#allocation3 + $0x120] sm:$0xff]
    %v2660 = vld [vmem:[#allocation3 + $0x128] sm:$0xff]
    %v2661 = vld [vmem:[#allocation3 + $0x130] sm:$0xff]
    %v2662 = vld [vmem:[#allocation3 + $0x138] sm:$0xff]
    %v2663 = vld [vmem:[#allocation3 + $0x140] sm:$0xff]
    %v2664 = vld [vmem:[#allocation3 + $0x148] sm:$0xff]
    %v2665 = vld [vmem:[#allocation3 + $0x150] sm:$0xff]
    %v2666 = vld [vmem:[#allocation3 + $0x158] sm:$0xff]
    %v2667 = vld [vmem:[#allocation3 + $0x160] sm:$0xff]
    %v2668 = vld [vmem:[#allocation3 + $0x168] sm:$0xff]
    %v2669 = vld [vmem:[#allocation3 + $0x170] sm:$0xff]
    %v2670 = vld [vmem:[#allocation3 + $0x178] sm:$0xff]
    %v2671 = vld [vmem:[#allocation3 + $0x180] sm:$0xff]
    %v2672 = vld [vmem:[#allocation3 + $0x188] sm:$0xff]
    %v2673 = vld [vmem:[#allocation3 + $0x190] sm:$0xff]
    %v2674 = vld [vmem:[#allocation3 + $0x198] sm:$0xff]
    %v2675 = vld [vmem:[#allocation3 + $0x1a0] sm:$0xff]
    %v2676 = vld [vmem:[#allocation3 + $0x1a8] sm:$0xff]
    %v2677 = vld [vmem:[#allocation3 + $0x1b0] sm:$0xff]
    %v2678 = vld [vmem:[#allocation3 + $0x1b8] sm:$0xff]
    %v2679 = vld [vmem:[#allocation3 + $0x1c0] sm:$0xff]
    %v2680 = vld [vmem:[#allocation3 + $0x1c8] sm:$0xff]
    %v2681 = vld [vmem:[#allocation3 + $0x1d0] sm:$0xff]
    %v2682 = vld [vmem:[#allocation3 + $0x1d8] sm:$0xff]
    %v2683 = vld [vmem:[#allocation3 + $0x1e0] sm:$0xff]
    %v2684 = vld [vmem:[#allocation3 + $0x1e8] sm:$0xff]
    %v2685 = vld [vmem:[#allocation3 + $0x1f0] sm:$0xff]
    %v2686 = vld [vmem:[#allocation3 + $0x1f8] sm:$0xff]
    %v2687 = vld [vmem:[#allocation3 + $0x200] sm:$0xff]
    %v2688 = vld [vmem:[#allocation3 + $0x208] sm:$0xff]
    %v2689 = vld [vmem:[#allocation3 + $0x210] sm:$0xff]
    %v2690 = vld [vmem:[#allocation3 + $0x218] sm:$0xff]
    %v2691 = vld [vmem:[#allocation3 + $0x220] sm:$0xff]
    %v2692 = vld [vmem:[#allocation3 + $0x228] sm:$0xff]
    %v2693 = vld [vmem:[#allocation3 + $0x230] sm:$0xff]
    %v2694 = vld [vmem:[#allocation3 + $0x238] sm:$0xff]
    %v2695 = vld [vmem:[#allocation3 + $0x240] sm:$0xff]
    %v2696 = vld [vmem:[#allocation3 + $0x248] sm:$0xff]
    %v2697 = vld [vmem:[#allocation3 + $0x250] sm:$0xff]
    %v2698 = vld [vmem:[#allocation3 + $0x258] sm:$0xff]
    %v2699 = vld [vmem:[#allocation3 + $0x260] sm:$0xff]
    %v2700 = vld [vmem:[#allocation3 + $0x268] sm:$0xff]
    %v2701 = vld [vmem:[#allocation3 + $0x270] sm:$0xff]
    %v2702 = vld [vmem:[#allocation3 + $0x278] sm:$0xff]
    %v2703 = vld [vmem:[#allocation3 + $0x280] sm:$0xff]
    %v2704 = vld [vmem:[#allocation3 + $0x288] sm:$0xff]
    %v2705 = vld [vmem:[#allocation3 + $0x290] sm:$0xff]
    %v2706 = vld [vmem:[#allocation3 + $0x298] sm:$0xff]
    %v2707 = vld [vmem:[#allocation3 + $0x2a0] sm:$0xff]
    %v2708 = vld [vmem:[#allocation3 + $0x2a8] sm:$0xff]
    %v2709 = vld [vmem:[#allocation3 + $0x2b0] sm:$0xff]
    %v2710 = vld [vmem:[#allocation3 + $0x2b8] sm:$0xff]
    %v2711 = vld [vmem:[#allocation3 + $0x2c0] sm:$0xff]
    %v2712 = vld [vmem:[#allocation3 + $0x2c8] sm:$0xff]
    %v2713 = vld [vmem:[#allocation3 + $0x2d0] sm:$0xff]
    %v2714 = vld [vmem:[#allocation3 + $0x2d8] sm:$0xff]
    %v2715 = vld [vmem:[#allocation3 + $0x2e0] sm:$0xff]
    %v2716 = vld [vmem:[#allocation3 + $0x2e8] sm:$0xff]
    %v2717 = vld [vmem:[#allocation3 + $0x2f0] sm:$0xff]
    %v2718 = vld [vmem:[#allocation3 + $0x2f8] sm:$0xff]
    %v2719 = vld [vmem:[#allocation3 + $0x300] sm:$0xff]
    %v2720 = vld [vmem:[#allocation3 + $0x308] sm:$0xff]
    %v2721 = vld [vmem:[#allocation3 + $0x310] sm:$0xff]
    %v2722 = vld [vmem:[#allocation3 + $0x318] sm:$0xff]
    %v2723 = vld [vmem:[#allocation3 + $0x320] sm:$0xff]
    %v2724 = vld [vmem:[#allocation3 + $0x328] sm:$0xff]
    %v2725 = vld [vmem:[#allocation3 + $0x330] sm:$0xff]
    %v2726 = vld [vmem:[#allocation3 + $0x338] sm:$0xff]
    %v2727 = vld [vmem:[#allocation3 + $0x340] sm:$0xff]
    %v2728 = vld [vmem:[#allocation3 + $0x348] sm:$0xff]
    %v2729 = vld [vmem:[#allocation3 + $0x350] sm:$0xff]
    %v2730 = vld [vmem:[#allocation3 + $0x358] sm:$0xff]
    %v2731 = vld [vmem:[#allocation3 + $0x360] sm:$0xff]
    %v2732 = vld [vmem:[#allocation3 + $0x368] sm:$0xff]
    %v2733 = vld [vmem:[#allocation3 + $0x370] sm:$0xff]
    %v2734 = vld [vmem:[#allocation3 + $0x378] sm:$0xff]
    %v2735 = vld [vmem:[#allocation3 + $0x380] sm:$0xff]
    %v2736 = vld [vmem:[#allocation3 + $0x388] sm:$0xff]
    %v2737 = vld [vmem:[#allocation3 + $0x390] sm:$0xff]
    %v2738 = vld [vmem:[#allocation3 + $0x398] sm:$0xff]
    %v2739 = vld [vmem:[#allocation3 + $0x3a0] sm:$0xff]
    %v2740 = vld [vmem:[#allocation3 + $0x3a8] sm:$0xff]
    %v2741 = vld [vmem:[#allocation3 + $0x3b0] sm:$0xff]
    %v2742 = vld [vmem:[#allocation3 + $0x3b8] sm:$0xff]
    %v2743 = vld [vmem:[#allocation3 + $0x3c0] sm:$0xff]
    %v2744 = vld [vmem:[#allocation3 + $0x3c8] sm:$0xff]
    %v2745 = vld [vmem:[#allocation3 + $0x3d0] sm:$0xff]
    %v2746 = vld [vmem:[#allocation3 + $0x3d8] sm:$0xff]
    %v2747 = vld [vmem:[#allocation3 + $0x3e0] sm:$0xff]
    %v2748 = vld [vmem:[#allocation3 + $0x3e8] sm:$0xff]
    %v2749 = vld [vmem:[#allocation3 + $0x3f0] sm:$0xff]
    %v2750 = vld [vmem:[#allocation3 + $0x3f8] sm:$0xff]
    %v2751 = vld [vmem:[#allocation3 + $0x400] sm:$0xff]
    %v2752 = vld [vmem:[#allocation3 + $0x408] sm:$0xff]
    %v2753 = vld [vmem:[#allocation3 + $0x410] sm:$0xff]
    %v2754 = vld [vmem:[#allocation3 + $0x418] sm:$0xff]
    %v2755 = vld [vmem:[#allocation3 + $0x420] sm:$0xff]
    %v2756 = vld [vmem:[#allocation3 + $0x428] sm:$0xff]
    %v2757 = vld [vmem:[#allocation3 + $0x430] sm:$0xff]
    %v2758 = vld [vmem:[#allocation3 + $0x438] sm:$0xff]
    %v2759 = vld [vmem:[#allocation3 + $0x440] sm:$0xff]
    %v2760 = vld [vmem:[#allocation3 + $0x448] sm:$0xff]
    %v2761 = vld [vmem:[#allocation3 + $0x450] sm:$0xff]
    %v2762 = vld [vmem:[#allocation3 + $0x458] sm:$0xff]
    %v2763 = vld [vmem:[#allocation3 + $0x460] sm:$0xff]
    %v2764 = vld [vmem:[#allocation3 + $0x468] sm:$0xff]
    %v2765 = vld [vmem:[#allocation3 + $0x470] sm:$0xff]
    %v2766 = vld [vmem:[#allocation3 + $0x478] sm:$0xff]
    %v2767 = vld [vmem:[#allocation3 + $0x480] sm:$0xff]
    %v2768 = vld [vmem:[#allocation3 + $0x488] sm:$0xff]
    %v2769 = vld [vmem:[#allocation3 + $0x490] sm:$0xff]
    %v2770 = vld [vmem:[#allocation3 + $0x498] sm:$0xff]
    %v2771 = vld [vmem:[#allocation3 + $0x4a0] sm:$0xff]
    %v2772 = vld [vmem:[#allocation3 + $0x4a8] sm:$0xff]
    %v2773 = vld [vmem:[#allocation3 + $0x4b0] sm:$0xff]
    %v2774 = vld [vmem:[#allocation3 + $0x4b8] sm:$0xff]
    %v2775 = vld [vmem:[#allocation3 + $0x4c0] sm:$0xff]
    %v2776 = vld [vmem:[#allocation3 + $0x4c8] sm:$0xff]
    %v2777 = vld [vmem:[#allocation3 + $0x4d0] sm:$0xff]
    %v2778 = vld [vmem:[#allocation3 + $0x4d8] sm:$0xff]
    %v2779 = vld [vmem:[#allocation3 + $0x4e0] sm:$0xff]
    %v2780 = vld [vmem:[#allocation3 + $0x4e8] sm:$0xff]
    %v2781 = vld [vmem:[#allocation3 + $0x4f0] sm:$0xff]
    %v2782 = vld [vmem:[#allocation3 + $0x4f8] sm:$0xff]
    %v2783 = vld [vmem:[#allocation3 + $0x500] sm:$0xff]
    %v2784 = vld [vmem:[#allocation3 + $0x508] sm:$0xff]
    %v2785 = vld [vmem:[#allocation3 + $0x510] sm:$0xff]
    %v2786 = vld [vmem:[#allocation3 + $0x518] sm:$0xff]
    %v2787 = vld [vmem:[#allocation3 + $0x520] sm:$0xff]
    %v2788 = vld [vmem:[#allocation3 + $0x528] sm:$0xff]
    %v2789 = vld [vmem:[#allocation3 + $0x530] sm:$0xff]
    %v2790 = vld [vmem:[#allocation3 + $0x538] sm:$0xff]
    %v2791 = vld [vmem:[#allocation3 + $0x540] sm:$0xff]
    %v2792 = vld [vmem:[#allocation3 + $0x548] sm:$0xff]
    %v2793 = vld [vmem:[#allocation3 + $0x550] sm:$0xff]
    %v2794 = vld [vmem:[#allocation3 + $0x558] sm:$0xff]
    %v2795 = vld [vmem:[#allocation3 + $0x560] sm:$0xff]
    %v2796 = vld [vmem:[#allocation3 + $0x568] sm:$0xff]
    %v2797 = vld [vmem:[#allocation3 + $0x570] sm:$0xff]
    %v2798 = vld [vmem:[#allocation3 + $0x578] sm:$0xff]
    %v2799 = vld [vmem:[#allocation3 + $0x580] sm:$0xff]
    %v2800 = vld [vmem:[#allocation3 + $0x588] sm:$0xff]
    %v2801 = vld [vmem:[#allocation3 + $0x590] sm:$0xff]
    %v2802 = vld [vmem:[#allocation3 + $0x598] sm:$0xff]
    %v2803 = vld [vmem:[#allocation3 + $0x5a0] sm:$0xff]
    %v2804 = vld [vmem:[#allocation3 + $0x5a8] sm:$0xff]
    %v2805 = vld [vmem:[#allocation3 + $0x5b0] sm:$0xff]
    %v2806 = vld [vmem:[#allocation3 + $0x5b8] sm:$0xff]
    %v2807 = vld [vmem:[#allocation3 + $0x5c0] sm:$0xff]
    %v2808 = vld [vmem:[#allocation3 + $0x5c8] sm:$0xff]
    %v2809 = vld [vmem:[#allocation3 + $0x5d0] sm:$0xff]
    %v2810 = vld [vmem:[#allocation3 + $0x5d8] sm:$0xff]
    %v2811 = vld [vmem:[#allocation3 + $0x5e0] sm:$0xff]
    %v2812 = vld [vmem:[#allocation3 + $0x5e8] sm:$0xff]
    %v2813 = vld [vmem:[#allocation3 + $0x5f0] sm:$0xff]
    %v2814 = vld [vmem:[#allocation3 + $0x5f8] sm:$0xff]
    %v2815 = vld [vmem:[#allocation3 + $0x600] sm:$0xff]
    %v2816 = vld [vmem:[#allocation3 + $0x608] sm:$0xff]
    %v2817 = vld [vmem:[#allocation3 + $0x610] sm:$0xff]
    %v2818 = vld [vmem:[#allocation3 + $0x618] sm:$0xff]
    %v2819 = vld [vmem:[#allocation3 + $0x620] sm:$0xff]
    %v2820 = vld [vmem:[#allocation3 + $0x628] sm:$0xff]
    %v2821 = vld [vmem:[#allocation3 + $0x630] sm:$0xff]
    %v2822 = vld [vmem:[#allocation3 + $0x638] sm:$0xff]
    %v2823 = vld [vmem:[#allocation3 + $0x640] sm:$0xff]
    %v2824 = vld [vmem:[#allocation3 + $0x648] sm:$0xff]
    %v2825 = vld [vmem:[#allocation3 + $0x650] sm:$0xff]
    %v2826 = vld [vmem:[#allocation3 + $0x658] sm:$0xff]
    %v2827 = vld [vmem:[#allocation3 + $0x660] sm:$0xff]
    %v2828 = vld [vmem:[#allocation3 + $0x668] sm:$0xff]
    %v2829 = vld [vmem:[#allocation3 + $0x670] sm:$0xff]
    %v2830 = vld [vmem:[#allocation3 + $0x678] sm:$0xff]
    %v2831 = vld [vmem:[#allocation3 + $0x680] sm:$0xff]
    %v2832 = vld [vmem:[#allocation3 + $0x688] sm:$0xff]
    %v2833 = vld [vmem:[#allocation3 + $0x690] sm:$0xff]
    %v2834 = vld [vmem:[#allocation3 + $0x698] sm:$0xff]
    %v2835 = vld [vmem:[#allocation3 + $0x6a0] sm:$0xff]
    %v2836 = vld [vmem:[#allocation3 + $0x6a8] sm:$0xff]
    %v2837 = vld [vmem:[#allocation3 + $0x6b0] sm:$0xff]
    %v2838 = vld [vmem:[#allocation3 + $0x6b8] sm:$0xff]
    %v2839 = vld [vmem:[#allocation3 + $0x6c0] sm:$0xff]
    %v2840 = vld [vmem:[#allocation3 + $0x6c8] sm:$0xff]
    %v2841 = vld [vmem:[#allocation3 + $0x6d0] sm:$0xff]
    %v2842 = vld [vmem:[#allocation3 + $0x6d8] sm:$0xff]
    %v2843 = vld [vmem:[#allocation3 + $0x6e0] sm:$0xff]
    %v2844 = vld [vmem:[#allocation3 + $0x6e8] sm:$0xff]
    %v2845 = vld [vmem:[#allocation3 + $0x6f0] sm:$0xff]
    %v2846 = vld [vmem:[#allocation3 + $0x6f8] sm:$0xff]
    %v2847 = vld [vmem:[#allocation3 + $0x700] sm:$0xff]
    %v2848 = vld [vmem:[#allocation3 + $0x708] sm:$0xff]
    %v2849 = vld [vmem:[#allocation3 + $0x710] sm:$0xff]
    %v2850 = vld [vmem:[#allocation3 + $0x718] sm:$0xff]
    %v2851 = vld [vmem:[#allocation3 + $0x720] sm:$0xff]
    %v2852 = vld [vmem:[#allocation3 + $0x728] sm:$0xff]
    %v2853 = vld [vmem:[#allocation3 + $0x730] sm:$0xff]
    %v2854 = vld [vmem:[#allocation3 + $0x738] sm:$0xff]
    %v2855 = vld [vmem:[#allocation3 + $0x740] sm:$0xff]
    %v2856 = vld [vmem:[#allocation3 + $0x748] sm:$0xff]
    %v2857 = vld [vmem:[#allocation3 + $0x750] sm:$0xff]
    %v2858 = vld [vmem:[#allocation3 + $0x758] sm:$0xff]
    %v2859 = vld [vmem:[#allocation3 + $0x760] sm:$0xff]
    %v2860 = vld [vmem:[#allocation3 + $0x768] sm:$0xff]
    %v2861 = vld [vmem:[#allocation3 + $0x770] sm:$0xff]
    %v2862 = vld [vmem:[#allocation3 + $0x778] sm:$0xff]
    %v2863 = vld [vmem:[#allocation3 + $0x780] sm:$0xff]
    %v2864 = vld [vmem:[#allocation3 + $0x788] sm:$0xff]
    %v2865 = vld [vmem:[#allocation3 + $0x790] sm:$0xff]
    %v2866 = vld [vmem:[#allocation3 + $0x798] sm:$0xff]
    %v2867 = vld [vmem:[#allocation3 + $0x7a0] sm:$0xff]
    %v2868 = vld [vmem:[#allocation3 + $0x7a8] sm:$0xff]
    %v2869 = vld [vmem:[#allocation3 + $0x7b0] sm:$0xff]
    %v2870 = vld [vmem:[#allocation3 + $0x7b8] sm:$0xff]
    %v2871 = vld [vmem:[#allocation3 + $0x7c0] sm:$0xff]
    %v2872 = vld [vmem:[#allocation3 + $0x7c8] sm:$0xff]
    %v2873 = vld [vmem:[#allocation3 + $0x7d0] sm:$0xff]
    %v2874 = vld [vmem:[#allocation3 + $0x7d8] sm:$0xff]
    %v2875 = vld [vmem:[#allocation3 + $0x7e0] sm:$0xff]
    %v2876 = vld [vmem:[#allocation3 + $0x7e8] sm:$0xff]
    %v2877 = vld [vmem:[#allocation3 + $0x7f0] sm:$0xff]
    %v2878 = vld [vmem:[#allocation3 + $0x7f8] sm:$0xff]
    %v2879 = vld [vmem:[%s6] sm:$0x3]
    %v2881 = vlaneseq
    %v2882 = vshrl.u32 %v2881, 7
    %v2883 = vsub.s32 0, %v2882
    %v2884 = vrot.slane %v2879, %v2883
    %v2885 = vlaneseq
    %v2886 = vshrl.u32 %v2885, 7
    %v2887 = vsub.s32 1, %v2886
    %v2888 = vrot.slane %v2879, %v2887
    %v3147 = vunpack.c.l.b16 %v2623
    %v3148 = vunpack.c.h.b16 %v2623
    %v3149 = vunpack.c.l.b16 %v2624
    %v3150 = vunpack.c.h.b16 %v2624
    %v3151 = vunpack.c.l.b16 %v2625
    %v3152 = vunpack.c.h.b16 %v2625
    %v3153 = vunpack.c.l.b16 %v2626
    %v3154 = vunpack.c.h.b16 %v2626
    %v3155 = vunpack.c.l.b16 %v2627
    %v3156 = vunpack.c.h.b16 %v2627
    %v3157 = vunpack.c.l.b16 %v2628
    %v3158 = vunpack.c.h.b16 %v2628
    %v3159 = vunpack.c.l.b16 %v2629
    %v3160 = vunpack.c.h.b16 %v2629
    %v3161 = vunpack.c.l.b16 %v2630
    %v3162 = vunpack.c.h.b16 %v2630
    %v3163 = vunpack.c.l.b16 %v2631
    %v3164 = vunpack.c.h.b16 %v2631
    %v3165 = vunpack.c.l.b16 %v2632
    %v3166 = vunpack.c.h.b16 %v2632
    %v3167 = vunpack.c.l.b16 %v2633
    %v3168 = vunpack.c.h.b16 %v2633
    %v3169 = vunpack.c.l.b16 %v2634
    %v3170 = vunpack.c.h.b16 %v2634
    %v3171 = vunpack.c.l.b16 %v2635
    %v3172 = vunpack.c.h.b16 %v2635
    %v3173 = vunpack.c.l.b16 %v2636
    %v3174 = vunpack.c.h.b16 %v2636
    %v3175 = vunpack.c.l.b16 %v2637
    %v3176 = vunpack.c.h.b16 %v2637
    %v3177 = vunpack.c.l.b16 %v2638
    %v3178 = vunpack.c.h.b16 %v2638
    %v3179 = vunpack.c.l.b16 %v2639
    %v3180 = vunpack.c.h.b16 %v2639
    %v3181 = vunpack.c.l.b16 %v2640
    %v3182 = vunpack.c.h.b16 %v2640
    %v3183 = vunpack.c.l.b16 %v2641
    %v3184 = vunpack.c.h.b16 %v2641
    %v3185 = vunpack.c.l.b16 %v2642
    %v3186 = vunpack.c.h.b16 %v2642
    %v3187 = vunpack.c.l.b16 %v2643
    %v3188 = vunpack.c.h.b16 %v2643
    %v3189 = vunpack.c.l.b16 %v2644
    %v3190 = vunpack.c.h.b16 %v2644
    %v3191 = vunpack.c.l.b16 %v2645
    %v3192 = vunpack.c.h.b16 %v2645
    %v3193 = vunpack.c.l.b16 %v2646
    %v3194 = vunpack.c.h.b16 %v2646
    %v3195 = vunpack.c.l.b16 %v2647
    %v3196 = vunpack.c.h.b16 %v2647
    %v3197 = vunpack.c.l.b16 %v2648
    %v3198 = vunpack.c.h.b16 %v2648
    %v3199 = vunpack.c.l.b16 %v2649
    %v3200 = vunpack.c.h.b16 %v2649
    %v3201 = vunpack.c.l.b16 %v2650
    %v3202 = vunpack.c.h.b16 %v2650
    %v3203 = vunpack.c.l.b16 %v2651
    %v3204 = vunpack.c.h.b16 %v2651
    %v3205 = vunpack.c.l.b16 %v2652
    %v3206 = vunpack.c.h.b16 %v2652
    %v3207 = vunpack.c.l.b16 %v2653
    %v3208 = vunpack.c.h.b16 %v2653
    %v3209 = vunpack.c.l.b16 %v2654
    %v3210 = vunpack.c.h.b16 %v2654
    %v3211 = vunpack.c.l.b16 %v2655
    %v3212 = vunpack.c.h.b16 %v2655
    %v3213 = vunpack.c.l.b16 %v2656
    %v3214 = vunpack.c.h.b16 %v2656
    %v3215 = vunpack.c.l.b16 %v2657
    %v3216 = vunpack.c.h.b16 %v2657
    %v3217 = vunpack.c.l.b16 %v2658
    %v3218 = vunpack.c.h.b16 %v2658
    %v3219 = vunpack.c.l.b16 %v2659
    %v3220 = vunpack.c.h.b16 %v2659
    %v3221 = vunpack.c.l.b16 %v2660
    %v3222 = vunpack.c.h.b16 %v2660
    %v3223 = vunpack.c.l.b16 %v2661
    %v3224 = vunpack.c.h.b16 %v2661
    %v3225 = vunpack.c.l.b16 %v2662
    %v3226 = vunpack.c.h.b16 %v2662
    %v3227 = vunpack.c.l.b16 %v2663
    %v3228 = vunpack.c.h.b16 %v2663
    %v3229 = vunpack.c.l.b16 %v2664
    %v3230 = vunpack.c.h.b16 %v2664
    %v3231 = vunpack.c.l.b16 %v2665
    %v3232 = vunpack.c.h.b16 %v2665
    %v3233 = vunpack.c.l.b16 %v2666
    %v3234 = vunpack.c.h.b16 %v2666
    %v3235 = vunpack.c.l.b16 %v2667
    %v3236 = vunpack.c.h.b16 %v2667
    %v3237 = vunpack.c.l.b16 %v2668
    %v3238 = vunpack.c.h.b16 %v2668
    %v3239 = vunpack.c.l.b16 %v2669
    %v3240 = vunpack.c.h.b16 %v2669
    %v3241 = vunpack.c.l.b16 %v2670
    %v3242 = vunpack.c.h.b16 %v2670
    %v3243 = vunpack.c.l.b16 %v2671
    %v3244 = vunpack.c.h.b16 %v2671
    %v3245 = vunpack.c.l.b16 %v2672
    %v3246 = vunpack.c.h.b16 %v2672
    %v3247 = vunpack.c.l.b16 %v2673
    %v3248 = vunpack.c.h.b16 %v2673
    %v3249 = vunpack.c.l.b16 %v2674
    %v3250 = vunpack.c.h.b16 %v2674
    %v3251 = vunpack.c.l.b16 %v2675
    %v3252 = vunpack.c.h.b16 %v2675
    %v3253 = vunpack.c.l.b16 %v2676
    %v3254 = vunpack.c.h.b16 %v2676
    %v3255 = vunpack.c.l.b16 %v2677
    %v3256 = vunpack.c.h.b16 %v2677
    %v3257 = vunpack.c.l.b16 %v2678
    %v3258 = vunpack.c.h.b16 %v2678
    %v3259 = vunpack.c.l.b16 %v2679
    %v3260 = vunpack.c.h.b16 %v2679
    %v3261 = vunpack.c.l.b16 %v2680
    %v3262 = vunpack.c.h.b16 %v2680
    %v3263 = vunpack.c.l.b16 %v2681
    %v3264 = vunpack.c.h.b16 %v2681
    %v3265 = vunpack.c.l.b16 %v2682
    %v3266 = vunpack.c.h.b16 %v2682
    %v3267 = vunpack.c.l.b16 %v2683
    %v3268 = vunpack.c.h.b16 %v2683
    %v3269 = vunpack.c.l.b16 %v2684
    %v3270 = vunpack.c.h.b16 %v2684
    %v3271 = vunpack.c.l.b16 %v2685
    %v3272 = vunpack.c.h.b16 %v2685
    %v3273 = vunpack.c.l.b16 %v2686
    %v3274 = vunpack.c.h.b16 %v2686
    %v3275 = vunpack.c.l.b16 %v2687
    %v3276 = vunpack.c.h.b16 %v2687
    %v3277 = vunpack.c.l.b16 %v2688
    %v3278 = vunpack.c.h.b16 %v2688
    %v3279 = vunpack.c.l.b16 %v2689
    %v3280 = vunpack.c.h.b16 %v2689
    %v3281 = vunpack.c.l.b16 %v2690
    %v3282 = vunpack.c.h.b16 %v2690
    %v3283 = vunpack.c.l.b16 %v2691
    %v3284 = vunpack.c.h.b16 %v2691
    %v3285 = vunpack.c.l.b16 %v2692
    %v3286 = vunpack.c.h.b16 %v2692
    %v3287 = vunpack.c.l.b16 %v2693
    %v3288 = vunpack.c.h.b16 %v2693
    %v3289 = vunpack.c.l.b16 %v2694
    %v3290 = vunpack.c.h.b16 %v2694
    %v3291 = vunpack.c.l.b16 %v2695
    %v3292 = vunpack.c.h.b16 %v2695
    %v3293 = vunpack.c.l.b16 %v2696
    %v3294 = vunpack.c.h.b16 %v2696
    %v3295 = vunpack.c.l.b16 %v2697
    %v3296 = vunpack.c.h.b16 %v2697
    %v3297 = vunpack.c.l.b16 %v2698
    %v3298 = vunpack.c.h.b16 %v2698
    %v3299 = vunpack.c.l.b16 %v2699
    %v3300 = vunpack.c.h.b16 %v2699
    %v3301 = vunpack.c.l.b16 %v2700
    %v3302 = vunpack.c.h.b16 %v2700
    %v3303 = vunpack.c.l.b16 %v2701
    %v3304 = vunpack.c.h.b16 %v2701
    %v3305 = vunpack.c.l.b16 %v2702
    %v3306 = vunpack.c.h.b16 %v2702
    %v3307 = vunpack.c.l.b16 %v2703
    %v3308 = vunpack.c.h.b16 %v2703
    %v3309 = vunpack.c.l.b16 %v2704
    %v3310 = vunpack.c.h.b16 %v2704
    %v3311 = vunpack.c.l.b16 %v2705
    %v3312 = vunpack.c.h.b16 %v2705
    %v3313 = vunpack.c.l.b16 %v2706
    %v3314 = vunpack.c.h.b16 %v2706
    %v3315 = vunpack.c.l.b16 %v2707
    %v3316 = vunpack.c.h.b16 %v2707
    %v3317 = vunpack.c.l.b16 %v2708
    %v3318 = vunpack.c.h.b16 %v2708
    %v3319 = vunpack.c.l.b16 %v2709
    %v3320 = vunpack.c.h.b16 %v2709
    %v3321 = vunpack.c.l.b16 %v2710
    %v3322 = vunpack.c.h.b16 %v2710
    %v3323 = vunpack.c.l.b16 %v2711
    %v3324 = vunpack.c.h.b16 %v2711
    %v3325 = vunpack.c.l.b16 %v2712
    %v3326 = vunpack.c.h.b16 %v2712
    %v3327 = vunpack.c.l.b16 %v2713
    %v3328 = vunpack.c.h.b16 %v2713
    %v3329 = vunpack.c.l.b16 %v2714
    %v3330 = vunpack.c.h.b16 %v2714
    %v3331 = vunpack.c.l.b16 %v2715
    %v3332 = vunpack.c.h.b16 %v2715
    %v3333 = vunpack.c.l.b16 %v2716
    %v3334 = vunpack.c.h.b16 %v2716
    %v3335 = vunpack.c.l.b16 %v2717
    %v3336 = vunpack.c.h.b16 %v2717
    %v3337 = vunpack.c.l.b16 %v2718
    %v3338 = vunpack.c.h.b16 %v2718
    %v3339 = vunpack.c.l.b16 %v2719
    %v3340 = vunpack.c.h.b16 %v2719
    %v3341 = vunpack.c.l.b16 %v2720
    %v3342 = vunpack.c.h.b16 %v2720
    %v3343 = vunpack.c.l.b16 %v2721
    %v3344 = vunpack.c.h.b16 %v2721
    %v3345 = vunpack.c.l.b16 %v2722
    %v3346 = vunpack.c.h.b16 %v2722
    %v3347 = vunpack.c.l.b16 %v2723
    %v3348 = vunpack.c.h.b16 %v2723
    %v3349 = vunpack.c.l.b16 %v2724
    %v3350 = vunpack.c.h.b16 %v2724
    %v3351 = vunpack.c.l.b16 %v2725
    %v3352 = vunpack.c.h.b16 %v2725
    %v3353 = vunpack.c.l.b16 %v2726
    %v3354 = vunpack.c.h.b16 %v2726
    %v3355 = vunpack.c.l.b16 %v2727
    %v3356 = vunpack.c.h.b16 %v2727
    %v3357 = vunpack.c.l.b16 %v2728
    %v3358 = vunpack.c.h.b16 %v2728
    %v3359 = vunpack.c.l.b16 %v2729
    %v3360 = vunpack.c.h.b16 %v2729
    %v3361 = vunpack.c.l.b16 %v2730
    %v3362 = vunpack.c.h.b16 %v2730
    %v3363 = vunpack.c.l.b16 %v2731
    %v3364 = vunpack.c.h.b16 %v2731
    %v3365 = vunpack.c.l.b16 %v2732
    %v3366 = vunpack.c.h.b16 %v2732
    %v3367 = vunpack.c.l.b16 %v2733
    %v3368 = vunpack.c.h.b16 %v2733
    %v3369 = vunpack.c.l.b16 %v2734
    %v3370 = vunpack.c.h.b16 %v2734
    %v3371 = vunpack.c.l.b16 %v2735
    %v3372 = vunpack.c.h.b16 %v2735
    %v3373 = vunpack.c.l.b16 %v2736
    %v3374 = vunpack.c.h.b16 %v2736
    %v3375 = vunpack.c.l.b16 %v2737
    %v3376 = vunpack.c.h.b16 %v2737
    %v3377 = vunpack.c.l.b16 %v2738
    %v3378 = vunpack.c.h.b16 %v2738
    %v3379 = vunpack.c.l.b16 %v2739
    %v3380 = vunpack.c.h.b16 %v2739
    %v3381 = vunpack.c.l.b16 %v2740
    %v3382 = vunpack.c.h.b16 %v2740
    %v3383 = vunpack.c.l.b16 %v2741
    %v3384 = vunpack.c.h.b16 %v2741
    %v3385 = vunpack.c.l.b16 %v2742
    %v3386 = vunpack.c.h.b16 %v2742
    %v3387 = vunpack.c.l.b16 %v2743
    %v3388 = vunpack.c.h.b16 %v2743
    %v3389 = vunpack.c.l.b16 %v2744
    %v3390 = vunpack.c.h.b16 %v2744
    %v3391 = vunpack.c.l.b16 %v2745
    %v3392 = vunpack.c.h.b16 %v2745
    %v3393 = vunpack.c.l.b16 %v2746
    %v3394 = vunpack.c.h.b16 %v2746
    %v3395 = vunpack.c.l.b16 %v2747
    %v3396 = vunpack.c.h.b16 %v2747
    %v3397 = vunpack.c.l.b16 %v2748
    %v3398 = vunpack.c.h.b16 %v2748
    %v3399 = vunpack.c.l.b16 %v2749
    %v3400 = vunpack.c.h.b16 %v2749
    %v3401 = vunpack.c.l.b16 %v2750
    %v3402 = vunpack.c.h.b16 %v2750
    %v3403 = vunpack.c.l.b16 %v2751
    %v3404 = vunpack.c.h.b16 %v2751
    %v3405 = vunpack.c.l.b16 %v2752
    %v3406 = vunpack.c.h.b16 %v2752
    %v3407 = vunpack.c.l.b16 %v2753
    %v3408 = vunpack.c.h.b16 %v2753
    %v3409 = vunpack.c.l.b16 %v2754
    %v3410 = vunpack.c.h.b16 %v2754
    %v3411 = vunpack.c.l.b16 %v2755
    %v3412 = vunpack.c.h.b16 %v2755
    %v3413 = vunpack.c.l.b16 %v2756
    %v3414 = vunpack.c.h.b16 %v2756
    %v3415 = vunpack.c.l.b16 %v2757
    %v3416 = vunpack.c.h.b16 %v2757
    %v3417 = vunpack.c.l.b16 %v2758
    %v3418 = vunpack.c.h.b16 %v2758
    %v3419 = vunpack.c.l.b16 %v2759
    %v3420 = vunpack.c.h.b16 %v2759
    %v3421 = vunpack.c.l.b16 %v2760
    %v3422 = vunpack.c.h.b16 %v2760
    %v3423 = vunpack.c.l.b16 %v2761
    %v3424 = vunpack.c.h.b16 %v2761
    %v3425 = vunpack.c.l.b16 %v2762
    %v3426 = vunpack.c.h.b16 %v2762
    %v3427 = vunpack.c.l.b16 %v2763
    %v3428 = vunpack.c.h.b16 %v2763
    %v3429 = vunpack.c.l.b16 %v2764
    %v3430 = vunpack.c.h.b16 %v2764
    %v3431 = vunpack.c.l.b16 %v2765
    %v3432 = vunpack.c.h.b16 %v2765
    %v3433 = vunpack.c.l.b16 %v2766
    %v3434 = vunpack.c.h.b16 %v2766
    %v3435 = vunpack.c.l.b16 %v2767
    %v3436 = vunpack.c.h.b16 %v2767
    %v3437 = vunpack.c.l.b16 %v2768
    %v3438 = vunpack.c.h.b16 %v2768
    %v3439 = vunpack.c.l.b16 %v2769
    %v3440 = vunpack.c.h.b16 %v2769
    %v3441 = vunpack.c.l.b16 %v2770
    %v3442 = vunpack.c.h.b16 %v2770
    %v3443 = vunpack.c.l.b16 %v2771
    %v3444 = vunpack.c.h.b16 %v2771
    %v3445 = vunpack.c.l.b16 %v2772
    %v3446 = vunpack.c.h.b16 %v2772
    %v3447 = vunpack.c.l.b16 %v2773
    %v3448 = vunpack.c.h.b16 %v2773
    %v3449 = vunpack.c.l.b16 %v2774
    %v3450 = vunpack.c.h.b16 %v2774
    %v3451 = vunpack.c.l.b16 %v2775
    %v3452 = vunpack.c.h.b16 %v2775
    %v3453 = vunpack.c.l.b16 %v2776
    %v3454 = vunpack.c.h.b16 %v2776
    %v3455 = vunpack.c.l.b16 %v2777
    %v3456 = vunpack.c.h.b16 %v2777
    %v3457 = vunpack.c.l.b16 %v2778
    %v3458 = vunpack.c.h.b16 %v2778
    %v3459 = vunpack.c.l.b16 %v2779
    %v3460 = vunpack.c.h.b16 %v2779
    %v3461 = vunpack.c.l.b16 %v2780
    %v3462 = vunpack.c.h.b16 %v2780
    %v3463 = vunpack.c.l.b16 %v2781
    %v3464 = vunpack.c.h.b16 %v2781
    %v3465 = vunpack.c.l.b16 %v2782
    %v3466 = vunpack.c.h.b16 %v2782
    %v3467 = vunpack.c.l.b16 %v2783
    %v3468 = vunpack.c.h.b16 %v2783
    %v3469 = vunpack.c.l.b16 %v2784
    %v3470 = vunpack.c.h.b16 %v2784
    %v3471 = vunpack.c.l.b16 %v2785
    %v3472 = vunpack.c.h.b16 %v2785
    %v3473 = vunpack.c.l.b16 %v2786
    %v3474 = vunpack.c.h.b16 %v2786
    %v3475 = vunpack.c.l.b16 %v2787
    %v3476 = vunpack.c.h.b16 %v2787
    %v3477 = vunpack.c.l.b16 %v2788
    %v3478 = vunpack.c.h.b16 %v2788
    %v3479 = vunpack.c.l.b16 %v2789
    %v3480 = vunpack.c.h.b16 %v2789
    %v3481 = vunpack.c.l.b16 %v2790
    %v3482 = vunpack.c.h.b16 %v2790
    %v3483 = vunpack.c.l.b16 %v2791
    %v3484 = vunpack.c.h.b16 %v2791
    %v3485 = vunpack.c.l.b16 %v2792
    %v3486 = vunpack.c.h.b16 %v2792
    %v3487 = vunpack.c.l.b16 %v2793
    %v3488 = vunpack.c.h.b16 %v2793
    %v3489 = vunpack.c.l.b16 %v2794
    %v3490 = vunpack.c.h.b16 %v2794
    %v3491 = vunpack.c.l.b16 %v2795
    %v3492 = vunpack.c.h.b16 %v2795
    %v3493 = vunpack.c.l.b16 %v2796
    %v3494 = vunpack.c.h.b16 %v2796
    %v3495 = vunpack.c.l.b16 %v2797
    %v3496 = vunpack.c.h.b16 %v2797
    %v3497 = vunpack.c.l.b16 %v2798
    %v3498 = vunpack.c.h.b16 %v2798
    %v3499 = vunpack.c.l.b16 %v2799
    %v3500 = vunpack.c.h.b16 %v2799
    %v3501 = vunpack.c.l.b16 %v2800
    %v3502 = vunpack.c.h.b16 %v2800
    %v3503 = vunpack.c.l.b16 %v2801
    %v3504 = vunpack.c.h.b16 %v2801
    %v3505 = vunpack.c.l.b16 %v2802
    %v3506 = vunpack.c.h.b16 %v2802
    %v3507 = vunpack.c.l.b16 %v2803
    %v3508 = vunpack.c.h.b16 %v2803
    %v3509 = vunpack.c.l.b16 %v2804
    %v3510 = vunpack.c.h.b16 %v2804
    %v3511 = vunpack.c.l.b16 %v2805
    %v3512 = vunpack.c.h.b16 %v2805
    %v3513 = vunpack.c.l.b16 %v2806
    %v3514 = vunpack.c.h.b16 %v2806
    %v3515 = vunpack.c.l.b16 %v2807
    %v3516 = vunpack.c.h.b16 %v2807
    %v3517 = vunpack.c.l.b16 %v2808
    %v3518 = vunpack.c.h.b16 %v2808
    %v3519 = vunpack.c.l.b16 %v2809
    %v3520 = vunpack.c.h.b16 %v2809
    %v3521 = vunpack.c.l.b16 %v2810
    %v3522 = vunpack.c.h.b16 %v2810
    %v3523 = vunpack.c.l.b16 %v2811
    %v3524 = vunpack.c.h.b16 %v2811
    %v3525 = vunpack.c.l.b16 %v2812
    %v3526 = vunpack.c.h.b16 %v2812
    %v3527 = vunpack.c.l.b16 %v2813
    %v3528 = vunpack.c.h.b16 %v2813
    %v3529 = vunpack.c.l.b16 %v2814
    %v3530 = vunpack.c.h.b16 %v2814
    %v3531 = vunpack.c.l.b16 %v2815
    %v3532 = vunpack.c.h.b16 %v2815
    %v3533 = vunpack.c.l.b16 %v2816
    %v3534 = vunpack.c.h.b16 %v2816
    %v3535 = vunpack.c.l.b16 %v2817
    %v3536 = vunpack.c.h.b16 %v2817
    %v3537 = vunpack.c.l.b16 %v2818
    %v3538 = vunpack.c.h.b16 %v2818
    %v3539 = vunpack.c.l.b16 %v2819
    %v3540 = vunpack.c.h.b16 %v2819
    %v3541 = vunpack.c.l.b16 %v2820
    %v3542 = vunpack.c.h.b16 %v2820
    %v3543 = vunpack.c.l.b16 %v2821
    %v3544 = vunpack.c.h.b16 %v2821
    %v3545 = vunpack.c.l.b16 %v2822
    %v3546 = vunpack.c.h.b16 %v2822
    %v3547 = vunpack.c.l.b16 %v2823
    %v3548 = vunpack.c.h.b16 %v2823
    %v3549 = vunpack.c.l.b16 %v2824
    %v3550 = vunpack.c.h.b16 %v2824
    %v3551 = vunpack.c.l.b16 %v2825
    %v3552 = vunpack.c.h.b16 %v2825
    %v3553 = vunpack.c.l.b16 %v2826
    %v3554 = vunpack.c.h.b16 %v2826
    %v3555 = vunpack.c.l.b16 %v2827
    %v3556 = vunpack.c.h.b16 %v2827
    %v3557 = vunpack.c.l.b16 %v2828
    %v3558 = vunpack.c.h.b16 %v2828
    %v3559 = vunpack.c.l.b16 %v2829
    %v3560 = vunpack.c.h.b16 %v2829
    %v3561 = vunpack.c.l.b16 %v2830
    %v3562 = vunpack.c.h.b16 %v2830
    %v3563 = vunpack.c.l.b16 %v2831
    %v3564 = vunpack.c.h.b16 %v2831
    %v3565 = vunpack.c.l.b16 %v2832
    %v3566 = vunpack.c.h.b16 %v2832
    %v3567 = vunpack.c.l.b16 %v2833
    %v3568 = vunpack.c.h.b16 %v2833
    %v3569 = vunpack.c.l.b16 %v2834
    %v3570 = vunpack.c.h.b16 %v2834
    %v3571 = vunpack.c.l.b16 %v2835
    %v3572 = vunpack.c.h.b16 %v2835
    %v3573 = vunpack.c.l.b16 %v2836
    %v3574 = vunpack.c.h.b16 %v2836
    %v3575 = vunpack.c.l.b16 %v2837
    %v3576 = vunpack.c.h.b16 %v2837
    %v3577 = vunpack.c.l.b16 %v2838
    %v3578 = vunpack.c.h.b16 %v2838
    %v3579 = vunpack.c.l.b16 %v2839
    %v3580 = vunpack.c.h.b16 %v2839
    %v3581 = vunpack.c.l.b16 %v2840
    %v3582 = vunpack.c.h.b16 %v2840
    %v3583 = vunpack.c.l.b16 %v2841
    %v3584 = vunpack.c.h.b16 %v2841
    %v3585 = vunpack.c.l.b16 %v2842
    %v3586 = vunpack.c.h.b16 %v2842
    %v3587 = vunpack.c.l.b16 %v2843
    %v3588 = vunpack.c.h.b16 %v2843
    %v3589 = vunpack.c.l.b16 %v2844
    %v3590 = vunpack.c.h.b16 %v2844
    %v3591 = vunpack.c.l.b16 %v2845
    %v3592 = vunpack.c.h.b16 %v2845
    %v3593 = vunpack.c.l.b16 %v2846
    %v3594 = vunpack.c.h.b16 %v2846
    %v3595 = vunpack.c.l.b16 %v2847
    %v3596 = vunpack.c.h.b16 %v2847
    %v3597 = vunpack.c.l.b16 %v2848
    %v3598 = vunpack.c.h.b16 %v2848
    %v3599 = vunpack.c.l.b16 %v2849
    %v3600 = vunpack.c.h.b16 %v2849
    %v3601 = vunpack.c.l.b16 %v2850
    %v3602 = vunpack.c.h.b16 %v2850
    %v3603 = vunpack.c.l.b16 %v2851
    %v3604 = vunpack.c.h.b16 %v2851
    %v3605 = vunpack.c.l.b16 %v2852
    %v3606 = vunpack.c.h.b16 %v2852
    %v3607 = vunpack.c.l.b16 %v2853
    %v3608 = vunpack.c.h.b16 %v2853
    %v3609 = vunpack.c.l.b16 %v2854
    %v3610 = vunpack.c.h.b16 %v2854
    %v3611 = vunpack.c.l.b16 %v2855
    %v3612 = vunpack.c.h.b16 %v2855
    %v3613 = vunpack.c.l.b16 %v2856
    %v3614 = vunpack.c.h.b16 %v2856
    %v3615 = vunpack.c.l.b16 %v2857
    %v3616 = vunpack.c.h.b16 %v2857
    %v3617 = vunpack.c.l.b16 %v2858
    %v3618 = vunpack.c.h.b16 %v2858
    %v3619 = vunpack.c.l.b16 %v2859
    %v3620 = vunpack.c.h.b16 %v2859
    %v3621 = vunpack.c.l.b16 %v2860
    %v3622 = vunpack.c.h.b16 %v2860
    %v3623 = vunpack.c.l.b16 %v2861
    %v3624 = vunpack.c.h.b16 %v2861
    %v3625 = vunpack.c.l.b16 %v2862
    %v3626 = vunpack.c.h.b16 %v2862
    %v3627 = vunpack.c.l.b16 %v2863
    %v3628 = vunpack.c.h.b16 %v2863
    %v3629 = vunpack.c.l.b16 %v2864
    %v3630 = vunpack.c.h.b16 %v2864
    %v3631 = vunpack.c.l.b16 %v2865
    %v3632 = vunpack.c.h.b16 %v2865
    %v3633 = vunpack.c.l.b16 %v2866
    %v3634 = vunpack.c.h.b16 %v2866
    %v3635 = vunpack.c.l.b16 %v2867
    %v3636 = vunpack.c.h.b16 %v2867
    %v3637 = vunpack.c.l.b16 %v2868
    %v3638 = vunpack.c.h.b16 %v2868
    %v3639 = vunpack.c.l.b16 %v2869
    %v3640 = vunpack.c.h.b16 %v2869
    %v3641 = vunpack.c.l.b16 %v2870
    %v3642 = vunpack.c.h.b16 %v2870
    %v3643 = vunpack.c.l.b16 %v2871
    %v3644 = vunpack.c.h.b16 %v2871
    %v3645 = vunpack.c.l.b16 %v2872
    %v3646 = vunpack.c.h.b16 %v2872
    %v3647 = vunpack.c.l.b16 %v2873
    %v3648 = vunpack.c.h.b16 %v2873
    %v3649 = vunpack.c.l.b16 %v2874
    %v3650 = vunpack.c.h.b16 %v2874
    %v3651 = vunpack.c.l.b16 %v2875
    %v3652 = vunpack.c.h.b16 %v2875
    %v3653 = vunpack.c.l.b16 %v2876
    %v3654 = vunpack.c.h.b16 %v2876
    %v3655 = vunpack.c.l.b16 %v2877
    %v3656 = vunpack.c.h.b16 %v2877
    %v3657 = vunpack.c.l.b16 %v2878
    %v3658 = vunpack.c.h.b16 %v2878
    %v3659 = vpack.c.b16 %v3149, %v3147
    %v3660 = vpack.c.b16 %v3150, %v3148
    %v3661 = vpack.c.b16 %v3153, %v3151
    %v3662 = vpack.c.b16 %v3154, %v3152
    %v3663 = vpack.c.b16 %v3157, %v3155
    %v3664 = vpack.c.b16 %v3158, %v3156
    %v3665 = vpack.c.b16 %v3161, %v3159
    %v3666 = vpack.c.b16 %v3162, %v3160
    %v3667 = vpack.c.b16 %v3165, %v3163
    %v3668 = vpack.c.b16 %v3166, %v3164
    %v3669 = vpack.c.b16 %v3169, %v3167
    %v3670 = vpack.c.b16 %v3170, %v3168
    %v3671 = vpack.c.b16 %v3173, %v3171
    %v3672 = vpack.c.b16 %v3174, %v3172
    %v3673 = vpack.c.b16 %v3177, %v3175
    %v3674 = vpack.c.b16 %v3178, %v3176
    %v3675 = vpack.c.b16 %v3181, %v3179
    %v3676 = vpack.c.b16 %v3182, %v3180
    %v3677 = vpack.c.b16 %v3185, %v3183
    %v3678 = vpack.c.b16 %v3186, %v3184
    %v3679 = vpack.c.b16 %v3189, %v3187
    %v3680 = vpack.c.b16 %v3190, %v3188
    %v3681 = vpack.c.b16 %v3193, %v3191
    %v3682 = vpack.c.b16 %v3194, %v3192
    %v3683 = vpack.c.b16 %v3197, %v3195
    %v3684 = vpack.c.b16 %v3198, %v3196
    %v3685 = vpack.c.b16 %v3201, %v3199
    %v3686 = vpack.c.b16 %v3202, %v3200
    %v3687 = vpack.c.b16 %v3205, %v3203
    %v3688 = vpack.c.b16 %v3206, %v3204
    %v3689 = vpack.c.b16 %v3209, %v3207
    %v3690 = vpack.c.b16 %v3210, %v3208
    %v3691 = vpack.c.b16 %v3213, %v3211
    %v3692 = vpack.c.b16 %v3214, %v3212
    %v3693 = vpack.c.b16 %v3217, %v3215
    %v3694 = vpack.c.b16 %v3218, %v3216
    %v3695 = vpack.c.b16 %v3221, %v3219
    %v3696 = vpack.c.b16 %v3222, %v3220
    %v3697 = vpack.c.b16 %v3225, %v3223
    %v3698 = vpack.c.b16 %v3226, %v3224
    %v3699 = vpack.c.b16 %v3229, %v3227
    %v3700 = vpack.c.b16 %v3230, %v3228
    %v3701 = vpack.c.b16 %v3233, %v3231
    %v3702 = vpack.c.b16 %v3234, %v3232
    %v3703 = vpack.c.b16 %v3237, %v3235
    %v3704 = vpack.c.b16 %v3238, %v3236
    %v3705 = vpack.c.b16 %v3241, %v3239
    %v3706 = vpack.c.b16 %v3242, %v3240
    %v3707 = vpack.c.b16 %v3245, %v3243
    %v3708 = vpack.c.b16 %v3246, %v3244
    %v3709 = vpack.c.b16 %v3249, %v3247
    %v3710 = vpack.c.b16 %v3250, %v3248
    %v3711 = vpack.c.b16 %v3253, %v3251
    %v3712 = vpack.c.b16 %v3254, %v3252
    %v3713 = vpack.c.b16 %v3257, %v3255
    %v3714 = vpack.c.b16 %v3258, %v3256
    %v3715 = vpack.c.b16 %v3261, %v3259
    %v3716 = vpack.c.b16 %v3262, %v3260
    %v3717 = vpack.c.b16 %v3265, %v3263
    %v3718 = vpack.c.b16 %v3266, %v3264
    %v3719 = vpack.c.b16 %v3269, %v3267
    %v3720 = vpack.c.b16 %v3270, %v3268
    %v3721 = vpack.c.b16 %v3273, %v3271
    %v3722 = vpack.c.b16 %v3274, %v3272
    %v3723 = vpack.c.b16 %v3277, %v3275
    %v3724 = vpack.c.b16 %v3278, %v3276
    %v3725 = vpack.c.b16 %v3281, %v3279
    %v3726 = vpack.c.b16 %v3282, %v3280
    %v3727 = vpack.c.b16 %v3285, %v3283
    %v3728 = vpack.c.b16 %v3286, %v3284
    %v3729 = vpack.c.b16 %v3289, %v3287
    %v3730 = vpack.c.b16 %v3290, %v3288
    %v3731 = vpack.c.b16 %v3293, %v3291
    %v3732 = vpack.c.b16 %v3294, %v3292
    %v3733 = vpack.c.b16 %v3297, %v3295
    %v3734 = vpack.c.b16 %v3298, %v3296
    %v3735 = vpack.c.b16 %v3301, %v3299
    %v3736 = vpack.c.b16 %v3302, %v3300
    %v3737 = vpack.c.b16 %v3305, %v3303
    %v3738 = vpack.c.b16 %v3306, %v3304
    %v3739 = vpack.c.b16 %v3309, %v3307
    %v3740 = vpack.c.b16 %v3310, %v3308
    %v3741 = vpack.c.b16 %v3313, %v3311
    %v3742 = vpack.c.b16 %v3314, %v3312
    %v3743 = vpack.c.b16 %v3317, %v3315
    %v3744 = vpack.c.b16 %v3318, %v3316
    %v3745 = vpack.c.b16 %v3321, %v3319
    %v3746 = vpack.c.b16 %v3322, %v3320
    %v3747 = vpack.c.b16 %v3325, %v3323
    %v3748 = vpack.c.b16 %v3326, %v3324
    %v3749 = vpack.c.b16 %v3329, %v3327
    %v3750 = vpack.c.b16 %v3330, %v3328
    %v3751 = vpack.c.b16 %v3333, %v3331
    %v3752 = vpack.c.b16 %v3334, %v3332
    %v3753 = vpack.c.b16 %v3337, %v3335
    %v3754 = vpack.c.b16 %v3338, %v3336
    %v3755 = vpack.c.b16 %v3341, %v3339
    %v3756 = vpack.c.b16 %v3342, %v3340
    %v3757 = vpack.c.b16 %v3345, %v3343
    %v3758 = vpack.c.b16 %v3346, %v3344
    %v3759 = vpack.c.b16 %v3349, %v3347
    %v3760 = vpack.c.b16 %v3350, %v3348
    %v3761 = vpack.c.b16 %v3353, %v3351
    %v3762 = vpack.c.b16 %v3354, %v3352
    %v3763 = vpack.c.b16 %v3357, %v3355
    %v3764 = vpack.c.b16 %v3358, %v3356
    %v3765 = vpack.c.b16 %v3361, %v3359
    %v3766 = vpack.c.b16 %v3362, %v3360
    %v3767 = vpack.c.b16 %v3365, %v3363
    %v3768 = vpack.c.b16 %v3366, %v3364
    %v3769 = vpack.c.b16 %v3369, %v3367
    %v3770 = vpack.c.b16 %v3370, %v3368
    %v3771 = vpack.c.b16 %v3373, %v3371
    %v3772 = vpack.c.b16 %v3374, %v3372
    %v3773 = vpack.c.b16 %v3377, %v3375
    %v3774 = vpack.c.b16 %v3378, %v3376
    %v3775 = vpack.c.b16 %v3381, %v3379
    %v3776 = vpack.c.b16 %v3382, %v3380
    %v3777 = vpack.c.b16 %v3385, %v3383
    %v3778 = vpack.c.b16 %v3386, %v3384
    %v3779 = vpack.c.b16 %v3389, %v3387
    %v3780 = vpack.c.b16 %v3390, %v3388
    %v3781 = vpack.c.b16 %v3393, %v3391
    %v3782 = vpack.c.b16 %v3394, %v3392
    %v3783 = vpack.c.b16 %v3397, %v3395
    %v3784 = vpack.c.b16 %v3398, %v3396
    %v3785 = vpack.c.b16 %v3401, %v3399
    %v3786 = vpack.c.b16 %v3402, %v3400
    %v3787 = vpack.c.b16 %v3405, %v3403
    %v3788 = vpack.c.b16 %v3406, %v3404
    %v3789 = vpack.c.b16 %v3409, %v3407
    %v3790 = vpack.c.b16 %v3410, %v3408
    %v3791 = vpack.c.b16 %v3413, %v3411
    %v3792 = vpack.c.b16 %v3414, %v3412
    %v3793 = vpack.c.b16 %v3417, %v3415
    %v3794 = vpack.c.b16 %v3418, %v3416
    %v3795 = vpack.c.b16 %v3421, %v3419
    %v3796 = vpack.c.b16 %v3422, %v3420
    %v3797 = vpack.c.b16 %v3425, %v3423
    %v3798 = vpack.c.b16 %v3426, %v3424
    %v3799 = vpack.c.b16 %v3429, %v3427
    %v3800 = vpack.c.b16 %v3430, %v3428
    %v3801 = vpack.c.b16 %v3433, %v3431
    %v3802 = vpack.c.b16 %v3434, %v3432
    %v3803 = vpack.c.b16 %v3437, %v3435
    %v3804 = vpack.c.b16 %v3438, %v3436
    %v3805 = vpack.c.b16 %v3441, %v3439
    %v3806 = vpack.c.b16 %v3442, %v3440
    %v3807 = vpack.c.b16 %v3445, %v3443
    %v3808 = vpack.c.b16 %v3446, %v3444
    %v3809 = vpack.c.b16 %v3449, %v3447
    %v3810 = vpack.c.b16 %v3450, %v3448
    %v3811 = vpack.c.b16 %v3453, %v3451
    %v3812 = vpack.c.b16 %v3454, %v3452
    %v3813 = vpack.c.b16 %v3457, %v3455
    %v3814 = vpack.c.b16 %v3458, %v3456
    %v3815 = vpack.c.b16 %v3461, %v3459
    %v3816 = vpack.c.b16 %v3462, %v3460
    %v3817 = vpack.c.b16 %v3465, %v3463
    %v3818 = vpack.c.b16 %v3466, %v3464
    %v3819 = vpack.c.b16 %v3469, %v3467
    %v3820 = vpack.c.b16 %v3470, %v3468
    %v3821 = vpack.c.b16 %v3473, %v3471
    %v3822 = vpack.c.b16 %v3474, %v3472
    %v3823 = vpack.c.b16 %v3477, %v3475
    %v3824 = vpack.c.b16 %v3478, %v3476
    %v3825 = vpack.c.b16 %v3481, %v3479
    %v3826 = vpack.c.b16 %v3482, %v3480
    %v3827 = vpack.c.b16 %v3485, %v3483
    %v3828 = vpack.c.b16 %v3486, %v3484
    %v3829 = vpack.c.b16 %v3489, %v3487
    %v3830 = vpack.c.b16 %v3490, %v3488
    %v3831 = vpack.c.b16 %v3493, %v3491
    %v3832 = vpack.c.b16 %v3494, %v3492
    %v3833 = vpack.c.b16 %v3497, %v3495
    %v3834 = vpack.c.b16 %v3498, %v3496
    %v3835 = vpack.c.b16 %v3501, %v3499
    %v3836 = vpack.c.b16 %v3502, %v3500
    %v3837 = vpack.c.b16 %v3505, %v3503
    %v3838 = vpack.c.b16 %v3506, %v3504
    %v3839 = vpack.c.b16 %v3509, %v3507
    %v3840 = vpack.c.b16 %v3510, %v3508
    %v3841 = vpack.c.b16 %v3513, %v3511
    %v3842 = vpack.c.b16 %v3514, %v3512
    %v3843 = vpack.c.b16 %v3517, %v3515
    %v3844 = vpack.c.b16 %v3518, %v3516
    %v3845 = vpack.c.b16 %v3521, %v3519
    %v3846 = vpack.c.b16 %v3522, %v3520
    %v3847 = vpack.c.b16 %v3525, %v3523
    %v3848 = vpack.c.b16 %v3526, %v3524
    %v3849 = vpack.c.b16 %v3529, %v3527
    %v3850 = vpack.c.b16 %v3530, %v3528
    %v3851 = vpack.c.b16 %v3533, %v3531
    %v3852 = vpack.c.b16 %v3534, %v3532
    %v3853 = vpack.c.b16 %v3537, %v3535
    %v3854 = vpack.c.b16 %v3538, %v3536
    %v3855 = vpack.c.b16 %v3541, %v3539
    %v3856 = vpack.c.b16 %v3542, %v3540
    %v3857 = vpack.c.b16 %v3545, %v3543
    %v3858 = vpack.c.b16 %v3546, %v3544
    %v3859 = vpack.c.b16 %v3549, %v3547
    %v3860 = vpack.c.b16 %v3550, %v3548
    %v3861 = vpack.c.b16 %v3553, %v3551
    %v3862 = vpack.c.b16 %v3554, %v3552
    %v3863 = vpack.c.b16 %v3557, %v3555
    %v3864 = vpack.c.b16 %v3558, %v3556
    %v3865 = vpack.c.b16 %v3561, %v3559
    %v3866 = vpack.c.b16 %v3562, %v3560
    %v3867 = vpack.c.b16 %v3565, %v3563
    %v3868 = vpack.c.b16 %v3566, %v3564
    %v3869 = vpack.c.b16 %v3569, %v3567
    %v3870 = vpack.c.b16 %v3570, %v3568
    %v3871 = vpack.c.b16 %v3573, %v3571
    %v3872 = vpack.c.b16 %v3574, %v3572
    %v3873 = vpack.c.b16 %v3577, %v3575
    %v3874 = vpack.c.b16 %v3578, %v3576
    %v3875 = vpack.c.b16 %v3581, %v3579
    %v3876 = vpack.c.b16 %v3582, %v3580
    %v3877 = vpack.c.b16 %v3585, %v3583
    %v3878 = vpack.c.b16 %v3586, %v3584
    %v3879 = vpack.c.b16 %v3589, %v3587
    %v3880 = vpack.c.b16 %v3590, %v3588
    %v3881 = vpack.c.b16 %v3593, %v3591
    %v3882 = vpack.c.b16 %v3594, %v3592
    %v3883 = vpack.c.b16 %v3597, %v3595
    %v3884 = vpack.c.b16 %v3598, %v3596
    %v3885 = vpack.c.b16 %v3601, %v3599
    %v3886 = vpack.c.b16 %v3602, %v3600
    %v3887 = vpack.c.b16 %v3605, %v3603
    %v3888 = vpack.c.b16 %v3606, %v3604
    %v3889 = vpack.c.b16 %v3609, %v3607
    %v3890 = vpack.c.b16 %v3610, %v3608
    %v3891 = vpack.c.b16 %v3613, %v3611
    %v3892 = vpack.c.b16 %v3614, %v3612
    %v3893 = vpack.c.b16 %v3617, %v3615
    %v3894 = vpack.c.b16 %v3618, %v3616
    %v3895 = vpack.c.b16 %v3621, %v3619
    %v3896 = vpack.c.b16 %v3622, %v3620
    %v3897 = vpack.c.b16 %v3625, %v3623
    %v3898 = vpack.c.b16 %v3626, %v3624
    %v3899 = vpack.c.b16 %v3629, %v3627
    %v3900 = vpack.c.b16 %v3630, %v3628
    %v3901 = vpack.c.b16 %v3633, %v3631
    %v3902 = vpack.c.b16 %v3634, %v3632
    %v3903 = vpack.c.b16 %v3637, %v3635
    %v3904 = vpack.c.b16 %v3638, %v3636
    %v3905 = vpack.c.b16 %v3641, %v3639
    %v3906 = vpack.c.b16 %v3642, %v3640
    %v3907 = vpack.c.b16 %v3645, %v3643
    %v3908 = vpack.c.b16 %v3646, %v3644
    %v3909 = vpack.c.b16 %v3649, %v3647
    %v3910 = vpack.c.b16 %v3650, %v3648
    %v3911 = vpack.c.b16 %v3653, %v3651
    %v3912 = vpack.c.b16 %v3654, %v3652
    %v3913 = vpack.c.b16 %v3657, %v3655
    %v3914 = vpack.c.b16 %v3658, %v3656
    %4171 = vmatprep.subr.bf16.mxu0 %v3674
    %4172 = vmatpush1.bf16.msra.mxu0 %v3673
    %4173 = vmatprep.subr.bf16.mxu0 %v3672
    %4174 = vmatpush1.bf16.msra.mxu0 %v3671
    %4175 = vmatprep.subr.bf16.mxu0 %v3670
    %4176 = vmatpush1.bf16.msra.mxu0 %v3669
    %4177 = vmatprep.subr.bf16.mxu0 %v3668
    %4178 = vmatpush1.bf16.msra.mxu0 %v3667
    %4179 = vmatprep.subr.bf16.mxu0 %v3666
    %4180 = vmatpush1.bf16.msra.mxu0 %v3665
    %4181 = vmatprep.subr.bf16.mxu0 %v3664
    %4182 = vmatpush1.bf16.msra.mxu0 %v3663
    %4183 = vmatprep.subr.bf16.mxu0 %v3662
    %4184 = vmatpush1.bf16.msra.mxu0 %v3661
    %4185 = vmatprep.subr.bf16.mxu0 %v3660
    %4186 = vmatpush1.bf16.msra.mxu0 %v3659
    %4187 = vmatprep.subr.bf16.mxu0 %v3690
    %4188 = vmatpush2.bf16.msra.mxu0 %v3689
    %4189 = vmatprep.subr.bf16.mxu0 %v3688
    %4190 = vmatpush2.bf16.msra.mxu0 %v3687
    %4191 = vmatprep.subr.bf16.mxu0 %v3686
    %4192 = vmatpush2.bf16.msra.mxu0 %v3685
    %4193 = vmatprep.subr.bf16.mxu0 %v3684
    %4194 = vmatpush2.bf16.msra.mxu0 %v3683
    %4195 = vmatprep.subr.bf16.mxu0 %v3682
    %4196 = vmatpush2.bf16.msra.mxu0 %v3681
    %4197 = vmatprep.subr.bf16.mxu0 %v3680
    %4198 = vmatpush2.bf16.msra.mxu0 %v3679
    %4199 = vmatprep.subr.bf16.mxu0 %v3678
    %4200 = vmatpush2.bf16.msra.mxu0 %v3677
    %4201 = vmatprep.subr.bf16.mxu0 %v3676
    %4202 = vmatpush2.bf16.msra.mxu0 %v3675
    %4203 = vmatprep.mubr.bf16.mxu0 %v2604
    %4204 = vmatmul.mubr.bf16.gmra.mxu0 %v2603
    %v4205 = vpop.f32.mrf.mxu0
    %v4206 = vadd.f32 %v2884, %v4205
    %v4207 = vpop.f32.mrf.mxu0
    %v4208 = vadd.f32 %v2888, %v4207
    %v4209 = vpop.f32.mrf.mxu0
    %v4210 = vpop.f32.mrf.mxu0
    %4211 = vdwg.mxu0
    %4212 = vmatprep.subr.bf16.mxu0 %v3706
    %4213 = vmatpush1.bf16.msra.mxu0 %v3705
    %4214 = vmatprep.subr.bf16.mxu0 %v3704
    %4215 = vmatpush1.bf16.msra.mxu0 %v3703
    %4216 = vmatprep.subr.bf16.mxu0 %v3702
    %4217 = vmatpush1.bf16.msra.mxu0 %v3701
    %4218 = vmatprep.subr.bf16.mxu0 %v3700
    %4219 = vmatpush1.bf16.msra.mxu0 %v3699
    %4220 = vmatprep.subr.bf16.mxu0 %v3698
    %4221 = vmatpush1.bf16.msra.mxu0 %v3697
    %4222 = vmatprep.subr.bf16.mxu0 %v3696
    %4223 = vmatpush1.bf16.msra.mxu0 %v3695
    %4224 = vmatprep.subr.bf16.mxu0 %v3694
    %4225 = vmatpush1.bf16.msra.mxu0 %v3693
    %4226 = vmatprep.subr.bf16.mxu0 %v3692
    %4227 = vmatpush1.bf16.msra.mxu0 %v3691
    %4228 = vmatprep.subr.bf16.mxu0 %v3722
    %4229 = vmatpush2.bf16.msra.mxu0 %v3721
    %4230 = vmatprep.subr.bf16.mxu0 %v3720
    %4231 = vmatpush2.bf16.msra.mxu0 %v3719
    %4232 = vmatprep.subr.bf16.mxu0 %v3718
    %4233 = vmatpush2.bf16.msra.mxu0 %v3717
    %4234 = vmatprep.subr.bf16.mxu0 %v3716
    %4235 = vmatpush2.bf16.msra.mxu0 %v3715
    %4236 = vmatprep.subr.bf16.mxu0 %v3714
    %4237 = vmatpush2.bf16.msra.mxu0 %v3713
    %4238 = vmatprep.subr.bf16.mxu0 %v3712
    %4239 = vmatpush2.bf16.msra.mxu0 %v3711
    %4240 = vmatprep.subr.bf16.mxu0 %v3710
    %4241 = vmatpush2.bf16.msra.mxu0 %v3709
    %4242 = vmatprep.subr.bf16.mxu0 %v3708
    %4243 = vmatpush2.bf16.msra.mxu0 %v3707
    %4244 = vmatprep.mubr.bf16.mxu0 %v2606
    %4245 = vmatmul.mubr.bf16.gmra.mxu0 %v2605
    %v4246 = vpop.f32.mrf.mxu0
    %v4247 = vadd.f32 %v4206, %v4246
    %v4248 = vpop.f32.mrf.mxu0
    %v4249 = vadd.f32 %v4208, %v4248
    %v4250 = vpop.f32.mrf.mxu0
    %v4251 = vpop.f32.mrf.mxu0
    %4252 = vdwg.mxu0
    %4253 = vmatprep.subr.bf16.mxu0 %v3738
    %4254 = vmatpush1.bf16.msra.mxu0 %v3737
    %4255 = vmatprep.subr.bf16.mxu0 %v3736
    %4256 = vmatpush1.bf16.msra.mxu0 %v3735
    %4257 = vmatprep.subr.bf16.mxu0 %v3734
    %4258 = vmatpush1.bf16.msra.mxu0 %v3733
    %4259 = vmatprep.subr.bf16.mxu0 %v3732
    %4260 = vmatpush1.bf16.msra.mxu0 %v3731
    %4261 = vmatprep.subr.bf16.mxu0 %v3730
    %4262 = vmatpush1.bf16.msra.mxu0 %v3729
    %4263 = vmatprep.subr.bf16.mxu0 %v3728
    %4264 = vmatpush1.bf16.msra.mxu0 %v3727
    %4265 = vmatprep.subr.bf16.mxu0 %v3726
    %4266 = vmatpush1.bf16.msra.mxu0 %v3725
    %4267 = vmatprep.subr.bf16.mxu0 %v3724
    %4268 = vmatpush1.bf16.msra.mxu0 %v3723
    %4269 = vmatprep.subr.bf16.mxu0 %v3754
    %4270 = vmatpush2.bf16.msra.mxu0 %v3753
    %4271 = vmatprep.subr.bf16.mxu0 %v3752
    %4272 = vmatpush2.bf16.msra.mxu0 %v3751
    %4273 = vmatprep.subr.bf16.mxu0 %v3750
    %4274 = vmatpush2.bf16.msra.mxu0 %v3749
    %4275 = vmatprep.subr.bf16.mxu0 %v3748
    %4276 = vmatpush2.bf16.msra.mxu0 %v3747
    %4277 = vmatprep.subr.bf16.mxu0 %v3746
    %4278 = vmatpush2.bf16.msra.mxu0 %v3745
    %4279 = vmatprep.subr.bf16.mxu0 %v3744
    %4280 = vmatpush2.bf16.msra.mxu0 %v3743
    %4281 = vmatprep.subr.bf16.mxu0 %v3742
    %4282 = vmatpush2.bf16.msra.mxu0 %v3741
    %4283 = vmatprep.subr.bf16.mxu0 %v3740
    %4284 = vmatpush2.bf16.msra.mxu0 %v3739
    %4285 = vmatprep.mubr.bf16.mxu0 %v2608
    %4286 = vmatmul.mubr.bf16.gmra.mxu0 %v2607
    %v4287 = vpop.f32.mrf.mxu0
    %v4288 = vadd.f32 %v4247, %v4287
    %v4289 = vpop.f32.mrf.mxu0
    %v4290 = vadd.f32 %v4249, %v4289
    %v4291 = vpop.f32.mrf.mxu0
    %v4292 = vpop.f32.mrf.mxu0
    %4293 = vdwg.mxu0
    %4294 = vmatprep.subr.bf16.mxu0 %v3770
    %4295 = vmatpush1.bf16.msra.mxu0 %v3769
    %4296 = vmatprep.subr.bf16.mxu0 %v3768
    %4297 = vmatpush1.bf16.msra.mxu0 %v3767
    %4298 = vmatprep.subr.bf16.mxu0 %v3766
    %4299 = vmatpush1.bf16.msra.mxu0 %v3765
    %4300 = vmatprep.subr.bf16.mxu0 %v3764
    %4301 = vmatpush1.bf16.msra.mxu0 %v3763
    %4302 = vmatprep.subr.bf16.mxu0 %v3762
    %4303 = vmatpush1.bf16.msra.mxu0 %v3761
    %4304 = vmatprep.subr.bf16.mxu0 %v3760
    %4305 = vmatpush1.bf16.msra.mxu0 %v3759
    %4306 = vmatprep.subr.bf16.mxu0 %v3758
    %4307 = vmatpush1.bf16.msra.mxu0 %v3757
    %4308 = vmatprep.subr.bf16.mxu0 %v3756
    %4309 = vmatpush1.bf16.msra.mxu0 %v3755
    %4310 = vmatprep.subr.bf16.mxu0 %v3786
    %4311 = vmatpush2.bf16.msra.mxu0 %v3785
    %4312 = vmatprep.subr.bf16.mxu0 %v3784
    %4313 = vmatpush2.bf16.msra.mxu0 %v3783
    %4314 = vmatprep.subr.bf16.mxu0 %v3782
    %4315 = vmatpush2.bf16.msra.mxu0 %v3781
    %4316 = vmatprep.subr.bf16.mxu0 %v3780
    %4317 = vmatpush2.bf16.msra.mxu0 %v3779
    %4318 = vmatprep.subr.bf16.mxu0 %v3778
    %4319 = vmatpush2.bf16.msra.mxu0 %v3777
    %4320 = vmatprep.subr.bf16.mxu0 %v3776
    %4321 = vmatpush2.bf16.msra.mxu0 %v3775
    %4322 = vmatprep.subr.bf16.mxu0 %v3774
    %4323 = vmatpush2.bf16.msra.mxu0 %v3773
    %4324 = vmatprep.subr.bf16.mxu0 %v3772
    %4325 = vmatpush2.bf16.msra.mxu0 %v3771
    %4326 = vmatprep.mubr.bf16.mxu0 %v2610
    %4327 = vmatmul.mubr.bf16.gmra.mxu0 %v2609
    %v4328 = vpop.f32.mrf.mxu0
    %v4329 = vadd.f32 %v4288, %v4328
    %v4330 = vpop.f32.mrf.mxu0
    %v4331 = vadd.f32 %v4290, %v4330
    %v4332 = vpop.f32.mrf.mxu0
    %v4333 = vpop.f32.mrf.mxu0
    %4334 = vdwg.mxu0
    %4335 = vmatprep.subr.bf16.mxu0 %v3802
    %4336 = vmatpush1.bf16.msra.mxu0 %v3801
    %4337 = vmatprep.subr.bf16.mxu0 %v3800
    %4338 = vmatpush1.bf16.msra.mxu0 %v3799
    %4339 = vmatprep.subr.bf16.mxu0 %v3798
    %4340 = vmatpush1.bf16.msra.mxu0 %v3797
    %4341 = vmatprep.subr.bf16.mxu0 %v3796
    %4342 = vmatpush1.bf16.msra.mxu0 %v3795
    %4343 = vmatprep.subr.bf16.mxu0 %v3794
    %4344 = vmatpush1.bf16.msra.mxu0 %v3793
    %4345 = vmatprep.subr.bf16.mxu0 %v3792
    %4346 = vmatpush1.bf16.msra.mxu0 %v3791
    %4347 = vmatprep.subr.bf16.mxu0 %v3790
    %4348 = vmatpush1.bf16.msra.mxu0 %v3789
    %4349 = vmatprep.subr.bf16.mxu0 %v3788
    %4350 = vmatpush1.bf16.msra.mxu0 %v3787
    %4351 = vmatprep.subr.bf16.mxu0 %v3818
    %4352 = vmatpush2.bf16.msra.mxu0 %v3817
    %4353 = vmatprep.subr.bf16.mxu0 %v3816
    %4354 = vmatpush2.bf16.msra.mxu0 %v3815
    %4355 = vmatprep.subr.bf16.mxu0 %v3814
    %4356 = vmatpush2.bf16.msra.mxu0 %v3813
    %4357 = vmatprep.subr.bf16.mxu0 %v3812
    %4358 = vmatpush2.bf16.msra.mxu0 %v3811
    %4359 = vmatprep.subr.bf16.mxu0 %v3810
    %4360 = vmatpush2.bf16.msra.mxu0 %v3809
    %4361 = vmatprep.subr.bf16.mxu0 %v3808
    %4362 = vmatpush2.bf16.msra.mxu0 %v3807
    %4363 = vmatprep.subr.bf16.mxu0 %v3806
    %4364 = vmatpush2.bf16.msra.mxu0 %v3805
    %4365 = vmatprep.subr.bf16.mxu0 %v3804
    %4366 = vmatpush2.bf16.msra.mxu0 %v3803
    %4367 = vmatprep.mubr.bf16.mxu0 %v2612
    %4368 = vmatmul.mubr.bf16.gmra.mxu0 %v2611
    %v4369 = vpop.f32.mrf.mxu0
    %v4370 = vadd.f32 %v4329, %v4369
    %v4371 = vpop.f32.mrf.mxu0
    %v4372 = vadd.f32 %v4331, %v4371
    %v4373 = vpop.f32.mrf.mxu0
    %v4374 = vpop.f32.mrf.mxu0
    %4375 = vdwg.mxu0
    %4376 = vmatprep.subr.bf16.mxu0 %v3834
    %4377 = vmatpush1.bf16.msra.mxu0 %v3833
    %4378 = vmatprep.subr.bf16.mxu0 %v3832
    %4379 = vmatpush1.bf16.msra.mxu0 %v3831
    %4380 = vmatprep.subr.bf16.mxu0 %v3830
    %4381 = vmatpush1.bf16.msra.mxu0 %v3829
    %4382 = vmatprep.subr.bf16.mxu0 %v3828
    %4383 = vmatpush1.bf16.msra.mxu0 %v3827
    %4384 = vmatprep.subr.bf16.mxu0 %v3826
    %4385 = vmatpush1.bf16.msra.mxu0 %v3825
    %4386 = vmatprep.subr.bf16.mxu0 %v3824
    %4387 = vmatpush1.bf16.msra.mxu0 %v3823
    %4388 = vmatprep.subr.bf16.mxu0 %v3822
    %4389 = vmatpush1.bf16.msra.mxu0 %v3821
    %4390 = vmatprep.subr.bf16.mxu0 %v3820
    %4391 = vmatpush1.bf16.msra.mxu0 %v3819
    %4392 = vmatprep.subr.bf16.mxu0 %v3850
    %4393 = vmatpush2.bf16.msra.mxu0 %v3849
    %4394 = vmatprep.subr.bf16.mxu0 %v3848
    %4395 = vmatpush2.bf16.msra.mxu0 %v3847
    %4396 = vmatprep.subr.bf16.mxu0 %v3846
    %4397 = vmatpush2.bf16.msra.mxu0 %v3845
    %4398 = vmatprep.subr.bf16.mxu0 %v3844
    %4399 = vmatpush2.bf16.msra.mxu0 %v3843
    %4400 = vmatprep.subr.bf16.mxu0 %v3842
    %4401 = vmatpush2.bf16.msra.mxu0 %v3841
    %4402 = vmatprep.subr.bf16.mxu0 %v3840
    %4403 = vmatpush2.bf16.msra.mxu0 %v3839
    %4404 = vmatprep.subr.bf16.mxu0 %v3838
    %4405 = vmatpush2.bf16.msra.mxu0 %v3837
    %4406 = vmatprep.subr.bf16.mxu0 %v3836
    %4407 = vmatpush2.bf16.msra.mxu0 %v3835
    %4408 = vmatprep.mubr.bf16.mxu0 %v2614
    %4409 = vmatmul.mubr.bf16.gmra.mxu0 %v2613
    %v4410 = vpop.f32.mrf.mxu0
    %v4411 = vadd.f32 %v4370, %v4410
    %v4412 = vpop.f32.mrf.mxu0
    %v4413 = vadd.f32 %v4372, %v4412
    %v4414 = vpop.f32.mrf.mxu0
    %v4415 = vpop.f32.mrf.mxu0
    %4416 = vdwg.mxu0
    %4417 = vmatprep.subr.bf16.mxu0 %v3866
    %4418 = vmatpush1.bf16.msra.mxu0 %v3865
    %4419 = vmatprep.subr.bf16.mxu0 %v3864
    %4420 = vmatpush1.bf16.msra.mxu0 %v3863
    %4421 = vmatprep.subr.bf16.mxu0 %v3862
    %4422 = vmatpush1.bf16.msra.mxu0 %v3861
    %4423 = vmatprep.subr.bf16.mxu0 %v3860
    %4424 = vmatpush1.bf16.msra.mxu0 %v3859
    %4425 = vmatprep.subr.bf16.mxu0 %v3858
    %4426 = vmatpush1.bf16.msra.mxu0 %v3857
    %4427 = vmatprep.subr.bf16.mxu0 %v3856
    %4428 = vmatpush1.bf16.msra.mxu0 %v3855
    %4429 = vmatprep.subr.bf16.mxu0 %v3854
    %4430 = vmatpush1.bf16.msra.mxu0 %v3853
    %4431 = vmatprep.subr.bf16.mxu0 %v3852
    %4432 = vmatpush1.bf16.msra.mxu0 %v3851
    %4433 = vmatprep.subr.bf16.mxu0 %v3882
    %4434 = vmatpush2.bf16.msra.mxu0 %v3881
    %4435 = vmatprep.subr.bf16.mxu0 %v3880
    %4436 = vmatpush2.bf16.msra.mxu0 %v3879
    %4437 = vmatprep.subr.bf16.mxu0 %v3878
    %4438 = vmatpush2.bf16.msra.mxu0 %v3877
    %4439 = vmatprep.subr.bf16.mxu0 %v3876
    %4440 = vmatpush2.bf16.msra.mxu0 %v3875
    %4441 = vmatprep.subr.bf16.mxu0 %v3874
    %4442 = vmatpush2.bf16.msra.mxu0 %v3873
    %4443 = vmatprep.subr.bf16.mxu0 %v3872
    %4444 = vmatpush2.bf16.msra.mxu0 %v3871
    %4445 = vmatprep.subr.bf16.mxu0 %v3870
    %4446 = vmatpush2.bf16.msra.mxu0 %v3869
    %4447 = vmatprep.subr.bf16.mxu0 %v3868
    %4448 = vmatpush2.bf16.msra.mxu0 %v3867
    %4449 = vmatprep.mubr.bf16.mxu0 %v2616
    %4450 = vmatmul.mubr.bf16.gmra.mxu0 %v2615
    %v4451 = vpop.f32.mrf.mxu0
    %v4452 = vadd.f32 %v4411, %v4451
    %v4453 = vpop.f32.mrf.mxu0
    %v4454 = vadd.f32 %v4413, %v4453
    %v4455 = vpop.f32.mrf.mxu0
    %v4456 = vpop.f32.mrf.mxu0
    %4457 = vdwg.mxu0
    %4458 = vmatprep.subr.bf16.mxu0 %v3898
    %4459 = vmatpush1.bf16.msra.mxu0 %v3897
    %4460 = vmatprep.subr.bf16.mxu0 %v3896
    %4461 = vmatpush1.bf16.msra.mxu0 %v3895
    %4462 = vmatprep.subr.bf16.mxu0 %v3894
    %4463 = vmatpush1.bf16.msra.mxu0 %v3893
    %4464 = vmatprep.subr.bf16.mxu0 %v3892
    %4465 = vmatpush1.bf16.msra.mxu0 %v3891
    %4466 = vmatprep.subr.bf16.mxu0 %v3890
    %4467 = vmatpush1.bf16.msra.mxu0 %v3889
    %4468 = vmatprep.subr.bf16.mxu0 %v3888
    %4469 = vmatpush1.bf16.msra.mxu0 %v3887
    %4470 = vmatprep.subr.bf16.mxu0 %v3886
    %4471 = vmatpush1.bf16.msra.mxu0 %v3885
    %4472 = vmatprep.subr.bf16.mxu0 %v3884
    %4473 = vmatpush1.bf16.msra.mxu0 %v3883
    %4474 = vmatprep.subr.bf16.mxu0 %v3914
    %4475 = vmatpush2.bf16.msra.mxu0 %v3913
    %4476 = vmatprep.subr.bf16.mxu0 %v3912
    %4477 = vmatpush2.bf16.msra.mxu0 %v3911
    %4478 = vmatprep.subr.bf16.mxu0 %v3910
    %4479 = vmatpush2.bf16.msra.mxu0 %v3909
    %4480 = vmatprep.subr.bf16.mxu0 %v3908
    %4481 = vmatpush2.bf16.msra.mxu0 %v3907
    %4482 = vmatprep.subr.bf16.mxu0 %v3906
    %4483 = vmatpush2.bf16.msra.mxu0 %v3905
    %4484 = vmatprep.subr.bf16.mxu0 %v3904
    %4485 = vmatpush2.bf16.msra.mxu0 %v3903
    %4486 = vmatprep.subr.bf16.mxu0 %v3902
    %4487 = vmatpush2.bf16.msra.mxu0 %v3901
    %4488 = vmatprep.subr.bf16.mxu0 %v3900
    %4489 = vmatpush2.bf16.msra.mxu0 %v3899
    %4490 = vmatprep.mubr.bf16.mxu0 %v2618
    %4491 = vmatmul.mubr.bf16.gmra.mxu0 %v2617
    %v4492 = vpop.f32.mrf.mxu0
    %v4493 = vadd.f32 %v4452, %v4492
    %v4494 = vpop.f32.mrf.mxu0
    %v4495 = vadd.f32 %v4454, %v4494
    %v4496 = vpop.f32.mrf.mxu0
    %v4497 = vpop.f32.mrf.mxu0
    %4498 = vdwg.mxu0
    %v4499 = vmax.f32 %v4493, 0.0
    %v4500 = vmax.f32 %v4495, 0.0
    %v4501 = vpack.c.bf16 %v4499, %v4499
    %v4502 = vpack.c.bf16 %v4500, %v4500
    %v4503 = vld [vmem:[%s7] sm:$0xf]
    %v4504 = vld [vmem:[%s7 + $0x4] sm:$0xf]
    %v4505 = vld [vmem:[%s7 + $0x8] sm:$0xf]
    %v4506 = vld [vmem:[%s7 + $0xc] sm:$0xf]
    %v4507 = vld [vmem:[%s7 + $0x10] sm:$0xf]
    %v4508 = vld [vmem:[%s7 + $0x14] sm:$0xf]
    %v4509 = vld [vmem:[%s7 + $0x18] sm:$0xf]
    %v4510 = vld [vmem:[%s7 + $0x1c] sm:$0xf]
    %v4511 = vld [vmem:[%s7 + $0x20] sm:$0xf]
    %v4512 = vld [vmem:[%s7 + $0x24] sm:$0xf]
    %v4513 = vld [vmem:[%s7 + $0x28] sm:$0xf]
    %v4514 = vld [vmem:[%s7 + $0x2c] sm:$0xf]
    %v4515 = vld [vmem:[%s7 + $0x30] sm:$0xf]
    %v4516 = vld [vmem:[%s7 + $0x34] sm:$0xf]
    %v4517 = vld [vmem:[%s7 + $0x38] sm:$0xf]
    %v4518 = vld [vmem:[%s7 + $0x3c] sm:$0xf]
    %v4519 = vld [vmem:[%s7 + $0x40] sm:$0xf]
    %v4520 = vld [vmem:[%s7 + $0x44] sm:$0xf]
    %v4521 = vld [vmem:[%s7 + $0x48] sm:$0xf]
    %v4522 = vld [vmem:[%s7 + $0x4c] sm:$0xf]
    %v4523 = vld [vmem:[%s7 + $0x50] sm:$0xf]
    %v4524 = vld [vmem:[%s7 + $0x54] sm:$0xf]
    %v4525 = vld [vmem:[%s7 + $0x58] sm:$0xf]
    %v4526 = vld [vmem:[%s7 + $0x5c] sm:$0xf]
    %v4527 = vld [vmem:[%s7 + $0x60] sm:$0xf]
    %v4528 = vld [vmem:[%s7 + $0x64] sm:$0xf]
    %v4529 = vld [vmem:[%s7 + $0x68] sm:$0xf]
    %v4530 = vld [vmem:[%s7 + $0x6c] sm:$0xf]
    %v4531 = vld [vmem:[%s7 + $0x70] sm:$0xf]
    %v4532 = vld [vmem:[%s7 + $0x74] sm:$0xf]
    %v4533 = vld [vmem:[%s7 + $0x78] sm:$0xf]
    %v4534 = vld [vmem:[%s7 + $0x7c] sm:$0xf]
    %v4535 = vld [vmem:[%s8] sm:$0x1]
    %v4537 = vlaneseq
    %v4538 = vshrl.u32 %v4537, 7
    %v4539 = vsub.s32 0, %v4538
    %v4540 = vrot.slane %v4535, %v4539
    %v4574 = vunpack.c.l.b16 %v4503
    %v4575 = vunpack.c.l.b16 %v4504
    %v4576 = vunpack.c.l.b16 %v4505
    %v4577 = vunpack.c.l.b16 %v4506
    %v4578 = vunpack.c.l.b16 %v4507
    %v4579 = vunpack.c.l.b16 %v4508
    %v4580 = vunpack.c.l.b16 %v4509
    %v4581 = vunpack.c.l.b16 %v4510
    %v4582 = vunpack.c.l.b16 %v4511
    %v4583 = vunpack.c.l.b16 %v4512
    %v4584 = vunpack.c.l.b16 %v4513
    %v4585 = vunpack.c.l.b16 %v4514
    %v4586 = vunpack.c.l.b16 %v4515
    %v4587 = vunpack.c.l.b16 %v4516
    %v4588 = vunpack.c.l.b16 %v4517
    %v4589 = vunpack.c.l.b16 %v4518
    %v4590 = vunpack.c.l.b16 %v4519
    %v4591 = vunpack.c.l.b16 %v4520
    %v4592 = vunpack.c.l.b16 %v4521
    %v4593 = vunpack.c.l.b16 %v4522
    %v4594 = vunpack.c.l.b16 %v4523
    %v4595 = vunpack.c.l.b16 %v4524
    %v4596 = vunpack.c.l.b16 %v4525
    %v4597 = vunpack.c.l.b16 %v4526
    %v4598 = vunpack.c.l.b16 %v4527
    %v4599 = vunpack.c.l.b16 %v4528
    %v4600 = vunpack.c.l.b16 %v4529
    %v4601 = vunpack.c.l.b16 %v4530
    %v4602 = vunpack.c.l.b16 %v4531
    %v4603 = vunpack.c.l.b16 %v4532
    %v4604 = vunpack.c.l.b16 %v4533
    %v4605 = vunpack.c.l.b16 %v4534
    %v4606 = vpack.c.b16 %v4575, %v4574
    %v4607 = vpack.c.b16 %v4577, %v4576
    %v4608 = vpack.c.b16 %v4579, %v4578
    %v4609 = vpack.c.b16 %v4581, %v4580
    %v4610 = vpack.c.b16 %v4583, %v4582
    %v4611 = vpack.c.b16 %v4585, %v4584
    %v4612 = vpack.c.b16 %v4587, %v4586
    %v4613 = vpack.c.b16 %v4589, %v4588
    %v4614 = vpack.c.b16 %v4591, %v4590
    %v4615 = vpack.c.b16 %v4593, %v4592
    %v4616 = vpack.c.b16 %v4595, %v4594
    %v4617 = vpack.c.b16 %v4597, %v4596
    %v4618 = vpack.c.b16 %v4599, %v4598
    %v4619 = vpack.c.b16 %v4601, %v4600
    %v4620 = vpack.c.b16 %v4603, %v4602
    %v4621 = vpack.c.b16 %v4605, %v4604
    %4638 = vmatprep.subr.bf16.mxu0 0
    %4639 = vmatpush1.bf16.msra.mxu0 %v4613
    %4640 = vmatprep.subr.bf16.mxu0 0
    %4641 = vmatpush1.bf16.msra.mxu0 %v4612
    %4642 = vmatprep.subr.bf16.mxu0 0
    %4643 = vmatpush1.bf16.msra.mxu0 %v4611
    %4644 = vmatprep.subr.bf16.mxu0 0
    %4645 = vmatpush1.bf16.msra.mxu0 %v4610
    %4646 = vmatprep.subr.bf16.mxu0 0
    %4647 = vmatpush1.bf16.msra.mxu0 %v4609
    %4648 = vmatprep.subr.bf16.mxu0 0
    %4649 = vmatpush1.bf16.msra.mxu0 %v4608
    %4650 = vmatprep.subr.bf16.mxu0 0
    %4651 = vmatpush1.bf16.msra.mxu0 %v4607
    %4652 = vmatprep.subr.bf16.mxu0 0
    %4653 = vmatpush1.bf16.msra.mxu0 %v4606
    %4654 = vmatprep.subr.bf16.mxu0 0
    %4655 = vmatpush2.bf16.msra.mxu0 %v4621
    %4656 = vmatprep.subr.bf16.mxu0 0
    %4657 = vmatpush2.bf16.msra.mxu0 %v4620
    %4658 = vmatprep.subr.bf16.mxu0 0
    %4659 = vmatpush2.bf16.msra.mxu0 %v4619
    %4660 = vmatprep.subr.bf16.mxu0 0
    %4661 = vmatpush2.bf16.msra.mxu0 %v4618
    %4662 = vmatprep.subr.bf16.mxu0 0
    %4663 = vmatpush2.bf16.msra.mxu0 %v4617
    %4664 = vmatprep.subr.bf16.mxu0 0
    %4665 = vmatpush2.bf16.msra.mxu0 %v4616
    %4666 = vmatprep.subr.bf16.mxu0 0
    %4667 = vmatpush2.bf16.msra.mxu0 %v4615
    %4668 = vmatprep.subr.bf16.mxu0 0
    %4669 = vmatpush2.bf16.msra.mxu0 %v4614
    %4670 = vmatprep.mubr.bf16.mxu0 %v4502
    %4671 = vmatmul.mubr.bf16.gmra.mxu0 %v4501
    %v4672 = vpop.f32.mrf.mxu0
    %v4673 = vadd.f32 %v4540, %v4672
    %v4674 = vpop.f32.mrf.mxu0
    %v4675 = vpop.f32.mrf.mxu0
    %v4676 = vpop.f32.mrf.mxu0
    %4677 = vdwg.mxu0
    %4678 = vst [vmem:[#allocation8] sm:$0x3] %v4673
    // Predicated region
    $region42: #{conv2_small_bn_forward.1} parent=1 // pred_check
      _
    $region43: #{conv2_small_bn_forward.1} parent=1 // pred_check_branch
      %4680 = sbr.rel (0) target = $region45
    $region44: #{conv2_small_bn_forward.1} parent=1 // pred_region
      %s4682 = ssub.s32 32, 32
      %4683 = vsyncadd [#allocation7], %s4682
      %s4685 = sshll.u32 [#allocation8], 4
      %s4686 = int_to_ptr.vmem [resolvable:$true] %s4685
      %4688 = dma.vmem_to_hbm [thread:$0]  %s4686, 32, %s9, [#allocation7]
    $region45: #{conv2_small_bn_forward.1} parent=1 // pred_fallthru
      _
    // Predicated region
    $region46: #{conv2_small_bn_forward.1} parent=1 // pred_check
      _
    $region47: #{conv2_small_bn_forward.1} parent=1 // pred_check_branch
      %4690 = sbr.rel (0) target = $region49
    $region48: #{conv2_small_bn_forward.1} parent=1 // pred_region
      %4691 = dma.done [#allocation7], 32
    $region49: #{conv2_small_bn_forward.1} parent=1 // pred_fallthru
      _
    %4692 = vsyncpa [#allocation6], 1
    %4693 = vsyncpa [#allocation7], 1
  %4694 = vsyncmov [#allocation4]
  %s4695 = vpop.sfrf %4694
  %p4696 = scmp.eq.s32.totalorder %s4695, 0
  %p4697 = pneg %p4696
  %4699 = shalt.err (%p4697)

</llo_original>
